<compile_context>
chip_gen: v6e
topology: v6e:2x2x1
jax: 0.10.0
libtpu: 0.0.40
codegen_flags: <defaults>
</compile_context>

<pallas_src>
from functools import partial

import jax
import jax.numpy as jnp
from jax.experimental import pallas as pl
from jax.experimental.pallas import tpu as pltpu


# --------------------------------------------------------------------------- #
# Kernel
# --------------------------------------------------------------------------- #
def _gabor_kernel(xs_ref, w_ref, b_ref, o_ref, *, omega0, sigma0_sq, half):
    # xs_ref: (tm, row_in)     folded packed input  [xr0|xi0|xr1|xi1|...]
    # w_ref : (row_in, row_out) folded packed weight (block-structured)
    # b_ref : (1, row_out)
    # o_ref : (tm, row_out)    folded packed output [reals(half) | imags(half)]
    lin = jnp.dot(xs_ref[...], w_ref[...],
                  preferred_element_type=jnp.float32) + b_ref[...]
    lin_r = lin[:, :half]
    lin_i = lin[:, half:]

    # exp(1j*omega0*lin - sigma0^2*|lin|^2)
    #   = exp(-omega0*Im - sigma0^2*(Re^2+Im^2)) * (cos(omega0*Re) + 1j*sin(omega0*Re))
    abs_sq = lin_r * lin_r + lin_i * lin_i
    mag = jnp.exp(-omega0 * lin_i - sigma0_sq * abs_sq)
    phase = omega0 * lin_r

    # Two static-sliced stores; HBM writeback of the whole block is lane-dense.
    o_ref[:, :half] = mag * jnp.cos(phase)
    o_ref[:, half:] = mag * jnp.sin(phase)


# --------------------------------------------------------------------------- #
# Wrapper helpers
# --------------------------------------------------------------------------- #
def _pick_fold(out_f):
    """Fold factor r so the packed output width r*2*out_f reaches 128 lanes."""
    two_of = 2 * out_f
    if two_of < 128 and 128 % two_of == 0:
        return 128 // two_of
    return 1


def _fold_params(wr, wi, br, bi, r):
    """Build the block-structured packed weight/bias for fold factor r.

    Folded input row  (width r*2*in_f):  [xr_0 | xi_0 | xr_1 | xi_1 | ...]
    Folded output row (width r*2*out_f): [re_0 | re_1 | ... | im_0 | im_1 | ...]
    """
    out_f, in_f = wr.shape
    wrt, wit = wr.T, wi.T                               # (in_f, out_f)
    z = jnp.zeros((in_f, out_f), jnp.float32)
    rows = []
    for k in range(r):
        # rows for xr_k : real_k gets WrT, imag_k gets WiT
        rows.append([wrt if j == k else (wit if j == r + k else z)
                     for j in range(2 * r)])
        # rows for xi_k : real_k gets -WiT, imag_k gets WrT
        rows.append([(-wit) if j == k else (wrt if j == r + k else z)
                     for j in range(2 * r)])
    w_fold = jnp.block(rows)                            # (r*2*in_f, r*2*out_f)
    b_fold = jnp.concatenate([br] * r + [bi] * r).reshape(1, -1)
    return w_fold.astype(jnp.float32), b_fold.astype(jnp.float32)


def _gabor_pallas(xs_fold, w_fold, b_fold, omega0, sigma0):
    M, row_in = xs_fold.shape
    row_out = w_fold.shape[1]
    half = row_out // 2

    # ---- generation-aware VMEM budget (v7x: 64 MiB; v5e/v6e: 128 MiB) -------
    try:
        vmem_cap = int(pltpu.get_tpu_info().vmem_capacity_bytes)
    except Exception:
        vmem_cap = 64 << 20                              # conservative fallback
    vmem_budget = max(16 << 20, min(vmem_cap // 2, 64 << 20))

    # Double-buffered W/b + double-buffered I/O blocks + ~6 full-tile f32
    # temporaries the body keeps live (lin, abs_sq, mag, phase, cos, sin).
    w_bytes = 2 * 4 * (row_in * row_out + row_out)
    per_row_bytes = 4 * (2 * row_in + 2 * row_out + 6 * row_out)
    tm_cap = int((0.75 * vmem_budget - w_bytes) // per_row_bytes)
    tm = max(8, min(8192, tm_cap, ((M + 7) // 8) * 8))
    tm = (tm // 8) * 8

    n_tiles = pl.cdiv(M, tm)

    # v7x has two TensorCores: give each core work (>= 2, even # of steps).
    kind = jax.devices()[0].device_kind.lower()
    if ("v7" in kind or "7x" in kind) and M >= 16:
        want = max(2, n_tiles)
        if want % 2:
            want += 1
        if want != n_tiles:
            tm = max(8, ((pl.cdiv(M, want) + 7) // 8) * 8)
            n_tiles = pl.cdiv(M, tm)

    cost = pl.CostEstimate(
        flops=int(2 * M * row_in * row_out),
        transcendentals=int(3 * M * half),
        bytes_accessed=int(4 * (M * (row_in + row_out) + row_in * row_out + row_out)),
    )

    kernel = partial(_gabor_kernel,
                     omega0=float(omega0),
                     sigma0_sq=float(sigma0) * float(sigma0),
                     half=half)

    return pl.pallas_call(
        kernel,
        out_shape=jax.ShapeDtypeStruct((M, row_out), jnp.float32),
        grid_spec=pltpu.PrefetchScalarGridSpec(
            num_scalar_prefetch=0,
            grid=(n_tiles,),
            in_specs=[
                pl.BlockSpec((tm, row_in), lambda i: (i, 0)),       # folded x
                pl.BlockSpec((row_in, row_out), lambda i: (0, 0)),  # folded W
                pl.BlockSpec((1, row_out), lambda i: (0, 0)),       # folded b
            ],
            out_specs=pl.BlockSpec((tm, row_out), lambda i: (i, 0)),
        ),
        compiler_params=pltpu.CompilerParams(
            dimension_semantics=("parallel",),
            vmem_limit_bytes=int(vmem_budget)),
        cost_estimate=cost,
    )(xs_fold, w_fold, b_fold)


def _pack_fold_run(xs, out_f, wr, wi, br, bi, omega0, sigma0):
    """xs: float32 (N, 2*in_f) = [real|imag].  Returns (real, imag) float32 (N, out_f)."""
    N = xs.shape[0]
    r = _pick_fold(out_f)
    w_fold, b_fold = _fold_params(wr, wi, br, bi, r)

    n_pad = (-N) % r
    if n_pad:                                   # tiny pad; fuses with packing under jit
        xs = jnp.pad(xs, ((0, n_pad), (0, 0)))
    xs_fold = xs.reshape((N + n_pad) // r, r * xs.shape[1])

    out_fold = _gabor_pallas(xs_fold, w_fold, b_fold, omega0, sigma0)
    half = r * out_f
    real = out_fold[:, :half].reshape(-1, out_f)[:N]
    imag = out_fold[:, half:].reshape(-1, out_f)[:N]
    return real, imag


# --------------------------------------------------------------------------- #
# Public entry points
# --------------------------------------------------------------------------- #
@partial(jax.jit, static_argnums=(5, 6))
def complex_gabor_packed(xs, wr, wi, br, bi, omega0, sigma0):
    """Packed-format entry for chaining layers: xs float32 (N, 2*in_f) = [real|imag],
    returns float32 (N, 2*out_f) = [real|imag] (no complex<->planar HBM passes)."""
    real, imag = _pack_fold_run(xs, wr.shape[0], wr, wi, br, bi, omega0, sigma0)
    return jnp.concatenate([real, imag], axis=1)


@partial(jax.jit, static_argnums=(3, 4))
def complex_gabor_layer(x, weight, bias, omega0, sigma0):
    """x: complex64 [N, in_features]; weight: complex64 [out_features, in_features];
    bias: complex64 [out_features]. Returns complex64 [N, out_features]."""
    out_f = weight.shape[0]
    wr = jnp.real(weight).astype(jnp.float32)
    wi = jnp.imag(weight).astype(jnp.float32)
    br = jnp.real(bias).astype(jnp.float32)
    bi = jnp.imag(bias).astype(jnp.float32)

    xs = jnp.concatenate([jnp.real(x), jnp.imag(x)], axis=1).astype(jnp.float32)
    real, imag = _pack_fold_run(xs, out_f, wr, wi, br, bi, omega0, sigma0)
    return jax.lax.complex(real, imag).astype(jnp.complex64)


# --------------------------------------------------------------------------- #
# Reference & test
# --------------------------------------------------------------------------- #
def _reference(x, weight, bias, omega0, sigma0):
    lin = x @ weight.T + bias
    omega = omega0 * lin
    scale = sigma0 * lin
    return jnp.exp(1j * omega - jnp.abs(scale) ** 2)


if __name__ == "__main__":
    # Module hyperparameters (is_first=False -> complex weights/inputs).
    in_features, out_features = 32, 32
    omega0, sigma0 = 10.0, 40.0
    N = 300  # not a multiple of the tile: exercises the ragged last block

    key = jax.random.PRNGKey(0)
    k1, k2, k3, k4, k5, k6 = jax.random.split(key, 6)

    bound = 1.0 / (in_features ** 0.5)
    w = (jax.random.uniform(k1, (out_features, in_features), jnp.float32, -bound, bound)
         + 1j * jax.random.uniform(k2, (out_features, in_features), jnp.float32, -bound, bound)
         ).astype(jnp.complex64)
    b = (jax.random.uniform(k3, (out_features,), jnp.float32, -bound, bound)
         + 1j * jax.random.uniform(k4, (out_features,), jnp.float32, -bound, bound)
         ).astype(jnp.complex64)

    x = (0.05 * jax.random.normal(k5, (N, in_features), jnp.float32)
         + 1j * 0.05 * jax.random.normal(k6, (N, in_features), jnp.float32)
         ).astype(jnp.complex64)

    out = complex_gabor_layer(x, w, b, omega0, sigma0)
    out = jax.block_until_ready(out)

    ref = _reference(x, w, b, omega0, sigma0)
    assert out.shape == (N, out_features) and out.dtype == jnp.complex64
    assert jnp.allclose(out, ref, atol=1e-4, rtol=1e-4), "mismatch vs reference"

    print("KERNEL_OK")
</pallas_src>

<mosaic_0001>
module attributes {stable_mosaic.version = 11 : i64} {
  func.func @_gabor_kernel(%arg0: i32, %arg1: memref<152x128xf32, #tpu.memory_space<vmem>>, %arg2: memref<128x128xf32, #tpu.memory_space<vmem>>, %arg3: memref<1x128xf32, #tpu.memory_space<vmem>>, %arg4: memref<152x128xf32, #tpu.memory_space<vmem>>) attributes {dimension_semantics = [#tpu.dimension_semantics<parallel>], iteration_bounds = array<i64: 1>, scalar_prefetch = 0 : i64, scratch_operands = 0 : i64, tpu.core_type = #tpu.core_type<tc>, window_params = [{transform_indices = @transform_0, window_bounds = array<i64: 152, 128>}, {pipeline_mode = #tpu.pipeline_mode<synchronous>, transform_indices = @transform_1, window_bounds = array<i64: 128, 128>}, {pipeline_mode = #tpu.pipeline_mode<synchronous>, transform_indices = @transform_2, window_bounds = array<i64: 1, 128>}, {transform_indices = @transform_3, window_bounds = array<i64: 152, 128>}]} {
    %c0 = arith.constant 0 : index
    %c0_0 = arith.constant 0 : index
    %0 = vector.load %arg1[%c0, %c0_0] : memref<152x128xf32, #tpu.memory_space<vmem>>, vector<152x128xf32>
    %c0_1 = arith.constant 0 : index
    %c0_2 = arith.constant 0 : index
    %1 = vector.load %arg2[%c0_1, %c0_2] : memref<128x128xf32, #tpu.memory_space<vmem>>, vector<128x128xf32>
    %cst = arith.constant dense<0.000000e+00> : vector<152x128xf32>
    %2 = tpu.matmul %0, %1, %cst {dimension_numbers = #tpu.dot_dimension_numbers<[1], [0], [0], [1], [0, 0, 1, 1], [], []>} : vector<152x128xf32>, vector<128x128xf32>, vector<152x128xf32> -> vector<152x128xf32>
    %c0_3 = arith.constant 0 : index
    %c0_4 = arith.constant 0 : index
    %3 = vector.load %arg3[%c0_3, %c0_4] : memref<1x128xf32, #tpu.memory_space<vmem>>, vector<1x128xf32>
    %4 = vector.broadcast %3 : vector<1x128xf32> to vector<152x128xf32>
    %5 = arith.addf %2, %4 : vector<152x128xf32>
    %6 = vector.extract_strided_slice %5 {offsets = [0, 0], sizes = [152, 64], strides = [1, 1]} : vector<152x128xf32> to vector<152x64xf32>
    %7 = vector.extract_strided_slice %5 {offsets = [0, 64], sizes = [152, 64], strides = [1, 1]} : vector<152x128xf32> to vector<152x64xf32>
    %8 = arith.mulf %6, %6 : vector<152x64xf32>
    %9 = arith.mulf %7, %7 : vector<152x64xf32>
    %10 = arith.addf %8, %9 : vector<152x64xf32>
    %cst_5 = arith.constant -1.000000e+01 : f32
    %11 = vector.broadcast %cst_5 : f32 to vector<152x64xf32>
    %12 = arith.mulf %11, %7 : vector<152x64xf32>
    %cst_6 = arith.constant 1.600000e+03 : f32
    %13 = vector.broadcast %cst_6 : f32 to vector<152x64xf32>
    %14 = arith.mulf %13, %10 : vector<152x64xf32>
    %15 = arith.subf %12, %14 : vector<152x64xf32>
    %16 = math.exp %15 : vector<152x64xf32>
    %cst_7 = arith.constant 1.000000e+01 : f32
    %17 = vector.broadcast %cst_7 : f32 to vector<152x64xf32>
    %18 = arith.mulf %17, %6 : vector<152x64xf32>
    %19 = math.cos %18 : vector<152x64xf32>
    %20 = arith.mulf %16, %19 : vector<152x64xf32>
    %c0_8 = arith.constant 0 : index
    %c0_9 = arith.constant 0 : index
    %21 = vector.load %arg4[%c0_8, %c0_9] : memref<152x128xf32, #tpu.memory_space<vmem>>, vector<152x64xf32>
    tpu.vector_store %arg4[%c0_8, %c0_9], %20 {strides = array<i32>} : memref<152x128xf32, #tpu.memory_space<vmem>>, vector<152x64xf32>,
    %22 = math.sin %18 : vector<152x64xf32>
    %23 = arith.mulf %16, %22 : vector<152x64xf32>
    %c0_10 = arith.constant 0 : index
    %c64 = arith.constant 64 : index
    %24 = vector.load %arg4[%c0_10, %c64] : memref<152x128xf32, #tpu.memory_space<vmem>>, vector<152x64xf32>
    tpu.vector_store %arg4[%c0_10, %c64], %23 {strides = array<i32>} : memref<152x128xf32, #tpu.memory_space<vmem>>, vector<152x64xf32>,
    return
  }
  func.func @transform_0(%arg0: i32) -> (i32, i32) {
    %c0_i32 = arith.constant 0 : i32
    %c0_i32_0 = arith.constant 0 : i32
    return %arg0, %c0_i32 : i32, i32
  }
  func.func @transform_1(%arg0: i32) -> (i32, i32) {
    %c0_i32 = arith.constant 0 : i32
    %c0_i32_0 = arith.constant 0 : i32
    %c0_i32_1 = arith.constant 0 : i32
    return %c0_i32, %c0_i32_0 : i32, i32
  }
  func.func @transform_2(%arg0: i32) -> (i32, i32) {
    %c0_i32 = arith.constant 0 : i32
    %c0_i32_0 = arith.constant 0 : i32
    %c0_i32_1 = arith.constant 0 : i32
    return %c0_i32, %c0_i32_0 : i32, i32
  }
  func.func @transform_3(%arg0: i32) -> (i32, i32) {
    %c0_i32 = arith.constant 0 : i32
    %c0_i32_0 = arith.constant 0 : i32
    return %arg0, %c0_i32 : i32, i32
  }
}

</mosaic_0001>

<llo_original>
// kernel: custom-call.4
$region0: #{custom-call.4}
  %s0 = inlined_call_operand.hbm [shape: c64[32], index: 0, kind: input, shape index: {}]
  %s1 = inlined_call_operand.vmem [shape: f32[32], index: 1, kind: output, shape index: {}]
  $region1: #{custom-call.4} parent=0
    #allocation0 [shape = 's32[1]{0}', space=sflag, size = 0x4, scoped, tag = 'scoped memory for custom-call.4']
    %2 = vsyncpa [#allocation0], 0
    %s3 = sshll.u32 %s1, 4
    %s4 = int_to_ptr.vmem [resolvable:$true] %s3
    %6 = dma.hbm_to_vmem [thread:$0]  %s0, 16, %s4, [#allocation0]
    %7 = dma.done [#allocation0], 16
    %8 = vsyncpa [#allocation0], 1

// kernel: custom-call.5
$region0: #{custom-call.5}
  %s0 = inlined_call_operand.hbm [shape: c64[32], index: 0, kind: input, shape index: {}]
  %s1 = inlined_call_operand.vmem [shape: f32[32], index: 1, kind: output, shape index: {}]
  %s2 = scalar_lea.hbm %s0, 16
  $region1: #{custom-call.5} parent=0
    #allocation0 [shape = 's32[1]{0}', space=sflag, size = 0x4, scoped, tag = 'scoped memory for custom-call.5']
    %3 = vsyncpa [#allocation0], 0
    %s4 = sshll.u32 %s1, 4
    %s5 = int_to_ptr.vmem [resolvable:$true] %s4
    %7 = dma.hbm_to_vmem [thread:$0]  %s2, 16, %s5, [#allocation0]
    %8 = dma.done [#allocation0], 16
    %9 = vsyncpa [#allocation0], 1

// kernel: custom-call.2
$region0: #{custom-call.2}
  %s0 = inlined_call_operand.vmem [shape: c64[32,32], index: 0, kind: input, shape index: {}]
  %s1 = inlined_call_operand.vmem [shape: f32[32,32], index: 1, kind: output, shape index: {}]
  %v2 = vld [vmem:[%s0] sm:$0xff]
  %3 = vst [vmem:[%s1] sm:$0xff] %v2
  %s4 = scalar_lea.vmem %s1, 8
  %s5 = scalar_lea.vmem %s0, 8
  %v6 = vld [vmem:[%s5] sm:$0xff]
  %7 = vst [vmem:[%s4] sm:$0xff] %v6
  %s8 = scalar_lea.vmem %s1, 16
  %s9 = scalar_lea.vmem %s0, 16
  %v10 = vld [vmem:[%s9] sm:$0xff]
  %11 = vst [vmem:[%s8] sm:$0xff] %v10
  %s12 = scalar_lea.vmem %s1, 24
  %s13 = scalar_lea.vmem %s0, 24
  %v14 = vld [vmem:[%s13] sm:$0xff]
  %15 = vst [vmem:[%s12] sm:$0xff] %v14

// kernel: custom-call.3
$region0: #{custom-call.3}
  %s0 = inlined_call_operand.vmem [shape: c64[32,32], index: 0, kind: input, shape index: {}]
  %s1 = inlined_call_operand.vmem [shape: f32[32,32], index: 1, kind: output, shape index: {}]
  %s2 = scalar_lea.vmem %s0, 32
  %v3 = vld [vmem:[%s2] sm:$0xff]
  %4 = vst [vmem:[%s1] sm:$0xff] %v3
  %s5 = scalar_lea.vmem %s1, 8
  %s6 = scalar_lea.vmem %s2, 8
  %v7 = vld [vmem:[%s6] sm:$0xff]
  %8 = vst [vmem:[%s5] sm:$0xff] %v7
  %s9 = scalar_lea.vmem %s1, 16
  %s10 = scalar_lea.vmem %s2, 16
  %v11 = vld [vmem:[%s10] sm:$0xff]
  %12 = vst [vmem:[%s9] sm:$0xff] %v11
  %s13 = scalar_lea.vmem %s1, 24
  %s14 = scalar_lea.vmem %s2, 24
  %v15 = vld [vmem:[%s14] sm:$0xff]
  %16 = vst [vmem:[%s13] sm:$0xff] %v15

// kernel: custom-call.1
$region0: #{custom-call.1}
  %s0 = inlined_call_operand.hbm [shape: c64[300,32], index: 0, kind: input, shape index: {}]
  %s1 = inlined_call_operand.vmem [shape: f32[300,32], index: 1, kind: output, shape index: {}]
  %s2 = scalar_lea.hbm %s0, 1536
  $region1: #{custom-call.1} parent=0
    #allocation0 [shape = 's32[1]{0}', space=sflag, size = 0x4, scoped, tag = 'scoped memory for custom-call.1']
    %3 = vsyncpa [#allocation0], 0
    %s4 = sshll.u32 %s1, 4
    %s5 = int_to_ptr.vmem [resolvable:$true] %s4
    %7 = dma.hbm_to_vmem [thread:$0]  %s2, 1536, %s5, [#allocation0]
    %8 = dma.done [#allocation0], 1536
    %9 = vsyncpa [#allocation0], 1

// kernel: custom-call
$region0: #{custom-call}
  %s0 = inlined_call_operand.hbm [shape: c64[300,32], index: 0, kind: input, shape index: {}]
  %s1 = inlined_call_operand.vmem [shape: f32[300,32], index: 1, kind: output, shape index: {}]
  $region1: #{custom-call} parent=0
    #allocation0 [shape = 's32[1]{0}', space=sflag, size = 0x4, scoped, tag = 'scoped memory for custom-call']
    %2 = vsyncpa [#allocation0], 0
    %s3 = sshll.u32 %s1, 4
    %s4 = int_to_ptr.vmem [resolvable:$true] %s3
    %6 = dma.hbm_to_vmem [thread:$0]  %s0, 1536, %s4, [#allocation0]
    %7 = dma.done [#allocation0], 1536
    %8 = vsyncpa [#allocation0], 1

// kernel: custom-call.6
$region0: #{custom-call.6}
  %s0 = inlined_call_operand.vmem [shape: f32[300,32], index: 0, kind: input, shape index: {}]
  %s1 = inlined_call_operand.vmem [shape: f32[300,32], index: 1, kind: input, shape index: {}]
  %s2 = inlined_call_operand.vmem [shape: c64[300,32], index: 2, kind: output, shape index: {}]
  %s4 = scalar_lea.vmem %s2, 304
  %v5 = vld [vmem:[%s0] sm:$0xff]
  %6 = vst [vmem:[%s2] sm:$0xff] %v5
  %s7 = scalar_lea.vmem %s2, 8
  %s8 = scalar_lea.vmem %s0, 8
  %v9 = vld [vmem:[%s8] sm:$0xff]
  %10 = vst [vmem:[%s7] sm:$0xff] %v9
  %s11 = scalar_lea.vmem %s2, 16
  %s12 = scalar_lea.vmem %s0, 16
  %v13 = vld [vmem:[%s12] sm:$0xff]
  %14 = vst [vmem:[%s11] sm:$0xff] %v13
  %s15 = scalar_lea.vmem %s2, 24
  %s16 = scalar_lea.vmem %s0, 24
  %v17 = vld [vmem:[%s16] sm:$0xff]
  %18 = vst [vmem:[%s15] sm:$0xff] %v17
  %s19 = scalar_lea.vmem %s2, 32
  %s20 = scalar_lea.vmem %s0, 32
  %v21 = vld [vmem:[%s20] sm:$0xff]
  %22 = vst [vmem:[%s19] sm:$0xff] %v21
  %s23 = scalar_lea.vmem %s2, 40
  %s24 = scalar_lea.vmem %s0, 40
  %v25 = vld [vmem:[%s24] sm:$0xff]
  %26 = vst [vmem:[%s23] sm:$0xff] %v25
  %s27 = scalar_lea.vmem %s2, 48
  %s28 = scalar_lea.vmem %s0, 48
  %v29 = vld [vmem:[%s28] sm:$0xff]
  %30 = vst [vmem:[%s27] sm:$0xff] %v29
  %s31 = scalar_lea.vmem %s2, 56
  %s32 = scalar_lea.vmem %s0, 56
  %v33 = vld [vmem:[%s32] sm:$0xff]
  %34 = vst [vmem:[%s31] sm:$0xff] %v33
  %s35 = scalar_lea.vmem %s2, 64
  %s36 = scalar_lea.vmem %s0, 64
  %v37 = vld [vmem:[%s36] sm:$0xff]
  %38 = vst [vmem:[%s35] sm:$0xff] %v37
  %s39 = scalar_lea.vmem %s2, 72
  %s40 = scalar_lea.vmem %s0, 72
  %v41 = vld [vmem:[%s40] sm:$0xff]
  %42 = vst [vmem:[%s39] sm:$0xff] %v41
  %s43 = scalar_lea.vmem %s2, 80
  %s44 = scalar_lea.vmem %s0, 80
  %v45 = vld [vmem:[%s44] sm:$0xff]
  %46 = vst [vmem:[%s43] sm:$0xff] %v45
  %s47 = scalar_lea.vmem %s2, 88
  %s48 = scalar_lea.vmem %s0, 88
  %v49 = vld [vmem:[%s48] sm:$0xff]
  %50 = vst [vmem:[%s47] sm:$0xff] %v49
  %s51 = scalar_lea.vmem %s2, 96
  %s52 = scalar_lea.vmem %s0, 96
  %v53 = vld [vmem:[%s52] sm:$0xff]
  %54 = vst [vmem:[%s51] sm:$0xff] %v53
  %s55 = scalar_lea.vmem %s2, 104
  %s56 = scalar_lea.vmem %s0, 104
  %v57 = vld [vmem:[%s56] sm:$0xff]
  %58 = vst [vmem:[%s55] sm:$0xff] %v57
  %s59 = scalar_lea.vmem %s2, 112
  %s60 = scalar_lea.vmem %s0, 112
  %v61 = vld [vmem:[%s60] sm:$0xff]
  %62 = vst [vmem:[%s59] sm:$0xff] %v61
  %s63 = scalar_lea.vmem %s2, 120
  %s64 = scalar_lea.vmem %s0, 120
  %v65 = vld [vmem:[%s64] sm:$0xff]
  %66 = vst [vmem:[%s63] sm:$0xff] %v65
  %s67 = scalar_lea.vmem %s2, 128
  %s68 = scalar_lea.vmem %s0, 128
  %v69 = vld [vmem:[%s68] sm:$0xff]
  %70 = vst [vmem:[%s67] sm:$0xff] %v69
  %s71 = scalar_lea.vmem %s2, 136
  %s72 = scalar_lea.vmem %s0, 136
  %v73 = vld [vmem:[%s72] sm:$0xff]
  %74 = vst [vmem:[%s71] sm:$0xff] %v73
  %s75 = scalar_lea.vmem %s2, 144
  %s76 = scalar_lea.vmem %s0, 144
  %v77 = vld [vmem:[%s76] sm:$0xff]
  %78 = vst [vmem:[%s75] sm:$0xff] %v77
  %s79 = scalar_lea.vmem %s2, 152
  %s80 = scalar_lea.vmem %s0, 152
  %v81 = vld [vmem:[%s80] sm:$0xff]
  %82 = vst [vmem:[%s79] sm:$0xff] %v81
  %s83 = scalar_lea.vmem %s2, 160
  %s84 = scalar_lea.vmem %s0, 160
  %v85 = vld [vmem:[%s84] sm:$0xff]
  %86 = vst [vmem:[%s83] sm:$0xff] %v85
  %s87 = scalar_lea.vmem %s2, 168
  %s88 = scalar_lea.vmem %s0, 168
  %v89 = vld [vmem:[%s88] sm:$0xff]
  %90 = vst [vmem:[%s87] sm:$0xff] %v89
  %s91 = scalar_lea.vmem %s2, 176
  %s92 = scalar_lea.vmem %s0, 176
  %v93 = vld [vmem:[%s92] sm:$0xff]
  %94 = vst [vmem:[%s91] sm:$0xff] %v93
  %s95 = scalar_lea.vmem %s2, 184
  %s96 = scalar_lea.vmem %s0, 184
  %v97 = vld [vmem:[%s96] sm:$0xff]
  %98 = vst [vmem:[%s95] sm:$0xff] %v97
  %s99 = scalar_lea.vmem %s2, 192
  %s100 = scalar_lea.vmem %s0, 192
  %v101 = vld [vmem:[%s100] sm:$0xff]
  %102 = vst [vmem:[%s99] sm:$0xff] %v101
  %s103 = scalar_lea.vmem %s2, 200
  %s104 = scalar_lea.vmem %s0, 200
  %v105 = vld [vmem:[%s104] sm:$0xff]
  %106 = vst [vmem:[%s103] sm:$0xff] %v105
  %s107 = scalar_lea.vmem %s2, 208
  %s108 = scalar_lea.vmem %s0, 208
  %v109 = vld [vmem:[%s108] sm:$0xff]
  %110 = vst [vmem:[%s107] sm:$0xff] %v109
  %s111 = scalar_lea.vmem %s2, 216
  %s112 = scalar_lea.vmem %s0, 216
  %v113 = vld [vmem:[%s112] sm:$0xff]
  %114 = vst [vmem:[%s111] sm:$0xff] %v113
  %s115 = scalar_lea.vmem %s2, 224
  %s116 = scalar_lea.vmem %s0, 224
  %v117 = vld [vmem:[%s116] sm:$0xff]
  %118 = vst [vmem:[%s115] sm:$0xff] %v117
  %s119 = scalar_lea.vmem %s2, 232
  %s120 = scalar_lea.vmem %s0, 232
  %v121 = vld [vmem:[%s120] sm:$0xff]
  %122 = vst [vmem:[%s119] sm:$0xff] %v121
  %s123 = scalar_lea.vmem %s2, 240
  %s124 = scalar_lea.vmem %s0, 240
  %v125 = vld [vmem:[%s124] sm:$0xff]
  %126 = vst [vmem:[%s123] sm:$0xff] %v125
  %s127 = scalar_lea.vmem %s2, 248
  %s128 = scalar_lea.vmem %s0, 248
  %v129 = vld [vmem:[%s128] sm:$0xff]
  %130 = vst [vmem:[%s127] sm:$0xff] %v129
  %s131 = scalar_lea.vmem %s2, 256
  %s132 = scalar_lea.vmem %s0, 256
  %v133 = vld [vmem:[%s132] sm:$0xff]
  %134 = vst [vmem:[%s131] sm:$0xff] %v133
  %s135 = scalar_lea.vmem %s2, 264
  %s136 = scalar_lea.vmem %s0, 264
  %v137 = vld [vmem:[%s136] sm:$0xff]
  %138 = vst [vmem:[%s135] sm:$0xff] %v137
  %s139 = scalar_lea.vmem %s2, 272
  %s140 = scalar_lea.vmem %s0, 272
  %v141 = vld [vmem:[%s140] sm:$0xff]
  %142 = vst [vmem:[%s139] sm:$0xff] %v141
  %s143 = scalar_lea.vmem %s2, 280
  %s144 = scalar_lea.vmem %s0, 280
  %v145 = vld [vmem:[%s144] sm:$0xff]
  %146 = vst [vmem:[%s143] sm:$0xff] %v145
  %s147 = scalar_lea.vmem %s2, 288
  %s148 = scalar_lea.vmem %s0, 288
  %v149 = vld [vmem:[%s148] sm:$0xff]
  %150 = vst [vmem:[%s147] sm:$0xff] %v149
  %s151 = scalar_lea.vmem %s2, 296
  %s152 = scalar_lea.vmem %s0, 296
  %v153 = vld [vmem:[%s152] sm:$0xff]
  %154 = vst [vmem:[%s151] sm:$0xff] %v153
  %v155 = vld [vmem:[%s1] sm:$0xff]
  %156 = vst [vmem:[%s4] sm:$0xff] %v155
  %s157 = scalar_lea.vmem %s4, 8
  %s158 = scalar_lea.vmem %s1, 8
  %v159 = vld [vmem:[%s158] sm:$0xff]
  %160 = vst [vmem:[%s157] sm:$0xff] %v159
  %s161 = scalar_lea.vmem %s4, 16
  %s162 = scalar_lea.vmem %s1, 16
  %v163 = vld [vmem:[%s162] sm:$0xff]
  %164 = vst [vmem:[%s161] sm:$0xff] %v163
  %s165 = scalar_lea.vmem %s4, 24
  %s166 = scalar_lea.vmem %s1, 24
  %v167 = vld [vmem:[%s166] sm:$0xff]
  %168 = vst [vmem:[%s165] sm:$0xff] %v167
  %s169 = scalar_lea.vmem %s4, 32
  %s170 = scalar_lea.vmem %s1, 32
  %v171 = vld [vmem:[%s170] sm:$0xff]
  %172 = vst [vmem:[%s169] sm:$0xff] %v171
  %s173 = scalar_lea.vmem %s4, 40
  %s174 = scalar_lea.vmem %s1, 40
  %v175 = vld [vmem:[%s174] sm:$0xff]
  %176 = vst [vmem:[%s173] sm:$0xff] %v175
  %s177 = scalar_lea.vmem %s4, 48
  %s178 = scalar_lea.vmem %s1, 48
  %v179 = vld [vmem:[%s178] sm:$0xff]
  %180 = vst [vmem:[%s177] sm:$0xff] %v179
  %s181 = scalar_lea.vmem %s4, 56
  %s182 = scalar_lea.vmem %s1, 56
  %v183 = vld [vmem:[%s182] sm:$0xff]
  %184 = vst [vmem:[%s181] sm:$0xff] %v183
  %s185 = scalar_lea.vmem %s4, 64
  %s186 = scalar_lea.vmem %s1, 64
  %v187 = vld [vmem:[%s186] sm:$0xff]
  %188 = vst [vmem:[%s185] sm:$0xff] %v187
  %s189 = scalar_lea.vmem %s4, 72
  %s190 = scalar_lea.vmem %s1, 72
  %v191 = vld [vmem:[%s190] sm:$0xff]
  %192 = vst [vmem:[%s189] sm:$0xff] %v191
  %s193 = scalar_lea.vmem %s4, 80
  %s194 = scalar_lea.vmem %s1, 80
  %v195 = vld [vmem:[%s194] sm:$0xff]
  %196 = vst [vmem:[%s193] sm:$0xff] %v195
  %s197 = scalar_lea.vmem %s4, 88
  %s198 = scalar_lea.vmem %s1, 88
  %v199 = vld [vmem:[%s198] sm:$0xff]
  %200 = vst [vmem:[%s197] sm:$0xff] %v199
  %s201 = scalar_lea.vmem %s4, 96
  %s202 = scalar_lea.vmem %s1, 96
  %v203 = vld [vmem:[%s202] sm:$0xff]
  %204 = vst [vmem:[%s201] sm:$0xff] %v203
  %s205 = scalar_lea.vmem %s4, 104
  %s206 = scalar_lea.vmem %s1, 104
  %v207 = vld [vmem:[%s206] sm:$0xff]
  %208 = vst [vmem:[%s205] sm:$0xff] %v207
  %s209 = scalar_lea.vmem %s4, 112
  %s210 = scalar_lea.vmem %s1, 112
  %v211 = vld [vmem:[%s210] sm:$0xff]
  %212 = vst [vmem:[%s209] sm:$0xff] %v211
  %s213 = scalar_lea.vmem %s4, 120
  %s214 = scalar_lea.vmem %s1, 120
  %v215 = vld [vmem:[%s214] sm:$0xff]
  %216 = vst [vmem:[%s213] sm:$0xff] %v215
  %s217 = scalar_lea.vmem %s4, 128
  %s218 = scalar_lea.vmem %s1, 128
  %v219 = vld [vmem:[%s218] sm:$0xff]
  %220 = vst [vmem:[%s217] sm:$0xff] %v219
  %s221 = scalar_lea.vmem %s4, 136
  %s222 = scalar_lea.vmem %s1, 136
  %v223 = vld [vmem:[%s222] sm:$0xff]
  %224 = vst [vmem:[%s221] sm:$0xff] %v223
  %s225 = scalar_lea.vmem %s4, 144
  %s226 = scalar_lea.vmem %s1, 144
  %v227 = vld [vmem:[%s226] sm:$0xff]
  %228 = vst [vmem:[%s225] sm:$0xff] %v227
  %s229 = scalar_lea.vmem %s4, 152
  %s230 = scalar_lea.vmem %s1, 152
  %v231 = vld [vmem:[%s230] sm:$0xff]
  %232 = vst [vmem:[%s229] sm:$0xff] %v231
  %s233 = scalar_lea.vmem %s4, 160
  %s234 = scalar_lea.vmem %s1, 160
  %v235 = vld [vmem:[%s234] sm:$0xff]
  %236 = vst [vmem:[%s233] sm:$0xff] %v235
  %s237 = scalar_lea.vmem %s4, 168
  %s238 = scalar_lea.vmem %s1, 168
  %v239 = vld [vmem:[%s238] sm:$0xff]
  %240 = vst [vmem:[%s237] sm:$0xff] %v239
  %s241 = scalar_lea.vmem %s4, 176
  %s242 = scalar_lea.vmem %s1, 176
  %v243 = vld [vmem:[%s242] sm:$0xff]
  %244 = vst [vmem:[%s241] sm:$0xff] %v243
  %s245 = scalar_lea.vmem %s4, 184
  %s246 = scalar_lea.vmem %s1, 184
  %v247 = vld [vmem:[%s246] sm:$0xff]
  %248 = vst [vmem:[%s245] sm:$0xff] %v247
  %s249 = scalar_lea.vmem %s4, 192
  %s250 = scalar_lea.vmem %s1, 192
  %v251 = vld [vmem:[%s250] sm:$0xff]
  %252 = vst [vmem:[%s249] sm:$0xff] %v251
  %s253 = scalar_lea.vmem %s4, 200
  %s254 = scalar_lea.vmem %s1, 200
  %v255 = vld [vmem:[%s254] sm:$0xff]
  %256 = vst [vmem:[%s253] sm:$0xff] %v255
  %s257 = scalar_lea.vmem %s4, 208
  %s258 = scalar_lea.vmem %s1, 208
  %v259 = vld [vmem:[%s258] sm:$0xff]
  %260 = vst [vmem:[%s257] sm:$0xff] %v259
  %s261 = scalar_lea.vmem %s4, 216
  %s262 = scalar_lea.vmem %s1, 216
  %v263 = vld [vmem:[%s262] sm:$0xff]
  %264 = vst [vmem:[%s261] sm:$0xff] %v263
  %s265 = scalar_lea.vmem %s4, 224
  %s266 = scalar_lea.vmem %s1, 224
  %v267 = vld [vmem:[%s266] sm:$0xff]
  %268 = vst [vmem:[%s265] sm:$0xff] %v267
  %s269 = scalar_lea.vmem %s4, 232
  %s270 = scalar_lea.vmem %s1, 232
  %v271 = vld [vmem:[%s270] sm:$0xff]
  %272 = vst [vmem:[%s269] sm:$0xff] %v271
  %s273 = scalar_lea.vmem %s4, 240
  %s274 = scalar_lea.vmem %s1, 240
  %v275 = vld [vmem:[%s274] sm:$0xff]
  %276 = vst [vmem:[%s273] sm:$0xff] %v275
  %s277 = scalar_lea.vmem %s4, 248
  %s278 = scalar_lea.vmem %s1, 248
  %v279 = vld [vmem:[%s278] sm:$0xff]
  %280 = vst [vmem:[%s277] sm:$0xff] %v279
  %s281 = scalar_lea.vmem %s4, 256
  %s282 = scalar_lea.vmem %s1, 256
  %v283 = vld [vmem:[%s282] sm:$0xff]
  %284 = vst [vmem:[%s281] sm:$0xff] %v283
  %s285 = scalar_lea.vmem %s4, 264
  %s286 = scalar_lea.vmem %s1, 264
  %v287 = vld [vmem:[%s286] sm:$0xff]
  %288 = vst [vmem:[%s285] sm:$0xff] %v287
  %s289 = scalar_lea.vmem %s4, 272
  %s290 = scalar_lea.vmem %s1, 272
  %v291 = vld [vmem:[%s290] sm:$0xff]
  %292 = vst [vmem:[%s289] sm:$0xff] %v291
  %s293 = scalar_lea.vmem %s4, 280
  %s294 = scalar_lea.vmem %s1, 280
  %v295 = vld [vmem:[%s294] sm:$0xff]
  %296 = vst [vmem:[%s293] sm:$0xff] %v295
  %s297 = scalar_lea.vmem %s4, 288
  %s298 = scalar_lea.vmem %s1, 288
  %v299 = vld [vmem:[%s298] sm:$0xff]
  %300 = vst [vmem:[%s297] sm:$0xff] %v299
  %s301 = scalar_lea.vmem %s4, 296
  %s302 = scalar_lea.vmem %s1, 296
  %v303 = vld [vmem:[%s302] sm:$0xff]
  %304 = vst [vmem:[%s301] sm:$0xff] %v303

// kernel: complex_gabor_layer.1
$region0: #{complex_gabor_layer.1}
  #allocation0 [shape = 'u32[]', space=smem, size = 0x4, offset = 0x4, fixed_abs, tag = 'smem constant byte address 0x4 - core index']
  #allocation1 [shape = 'u32[144,128]{1,0:T(1,128)}', space=vmem, size = 0x12000, scoped, tag = 'internal scratch']
  %s0 = inlined_call_operand.vmem [shape: f32[150,128], index: 0, kind: input, shape index: {}]
  %s1 = inlined_call_operand.vmem [shape: f32[128,128], index: 1, kind: input, shape index: {}]
  %s2 = inlined_call_operand.vmem [shape: f32[1,128], index: 2, kind: input, shape index: {}]
  %s3 = inlined_call_operand.vmem [shape: f32[150,128], index: 3, kind: output, shape index: {}]
  %s4 = sld [smem:[#allocation0]]
  $region22: #{complex_gabor_layer.1} parent=0
    _
  %s6 = ssub.s32 1, %s4
  %s7 = scalar_select 0, %s6, %s4
  // Predicated region
  $region2: #{complex_gabor_layer.1} parent=0 // pred_check
    _
  $region3: #{complex_gabor_layer.1} parent=0 // pred_check_branch
    %9 = sbr.rel (0) target = $region5
  $region4: #{complex_gabor_layer.1} parent=0 // pred_region
    _
  $region5: #{complex_gabor_layer.1} parent=0 // pred_fallthru
    _
  // Predicated region
  $region6: #{complex_gabor_layer.1} parent=0 // pred_check
    _
  $region7: #{complex_gabor_layer.1} parent=0 // pred_check_branch
    %11 = sbr.rel (0) target = $region9
  $region8: #{complex_gabor_layer.1} parent=0 // pred_region
    _
  $region9: #{complex_gabor_layer.1} parent=0 // pred_fallthru
    _
  // Predicated region
  $region10: #{complex_gabor_layer.1} parent=0 // pred_check
    _
  $region11: #{complex_gabor_layer.1} parent=0 // pred_check_branch
    %13 = sbr.rel (0) target = $region13
  $region12: #{complex_gabor_layer.1} parent=0 // pred_region
    _
  $region13: #{complex_gabor_layer.1} parent=0 // pred_fallthru
    _
  %v14 = vld [vmem:[%s0] sm:$0xff]
  %v15 = vld [vmem:[%s0 + $0x8] sm:$0xff]
  %v16 = vld [vmem:[%s0 + $0x10] sm:$0xff]
  %v17 = vld [vmem:[%s0 + $0x18] sm:$0xff]
  %v18 = vld [vmem:[%s0 + $0x20] sm:$0xff]
  %v19 = vld [vmem:[%s0 + $0x28] sm:$0xff]
  %v20 = vld [vmem:[%s0 + $0x30] sm:$0xff]
  %v21 = vld [vmem:[%s0 + $0x38] sm:$0xff]
  %v22 = vld [vmem:[%s0 + $0x40] sm:$0xff]
  %v23 = vld [vmem:[%s0 + $0x48] sm:$0xff]
  %v24 = vld [vmem:[%s0 + $0x50] sm:$0xff]
  %v25 = vld [vmem:[%s0 + $0x58] sm:$0xff]
  %v26 = vld [vmem:[%s0 + $0x60] sm:$0xff]
  %v27 = vld [vmem:[%s0 + $0x68] sm:$0xff]
  %v28 = vld [vmem:[%s0 + $0x70] sm:$0xff]
  %v29 = vld [vmem:[%s0 + $0x78] sm:$0xff]
  %v30 = vld [vmem:[%s0 + $0x80] sm:$0xff]
  %v31 = vld [vmem:[%s0 + $0x88] sm:$0xff]
  %v32 = vld [vmem:[%s0 + $0x90] sm:$0xff]
  %v33 = vld [vmem:[%s1] sm:$0xff]
  %v34 = vld [vmem:[%s1 + $0x8] sm:$0xff]
  %v35 = vld [vmem:[%s1 + $0x10] sm:$0xff]
  %v36 = vld [vmem:[%s1 + $0x18] sm:$0xff]
  %v37 = vld [vmem:[%s1 + $0x20] sm:$0xff]
  %v38 = vld [vmem:[%s1 + $0x28] sm:$0xff]
  %v39 = vld [vmem:[%s1 + $0x30] sm:$0xff]
  %v40 = vld [vmem:[%s1 + $0x38] sm:$0xff]
  %v41 = vld [vmem:[%s1 + $0x40] sm:$0xff]
  %v42 = vld [vmem:[%s1 + $0x48] sm:$0xff]
  %v43 = vld [vmem:[%s1 + $0x50] sm:$0xff]
  %v44 = vld [vmem:[%s1 + $0x58] sm:$0xff]
  %v45 = vld [vmem:[%s1 + $0x60] sm:$0xff]
  %v46 = vld [vmem:[%s1 + $0x68] sm:$0xff]
  %v47 = vld [vmem:[%s1 + $0x70] sm:$0xff]
  %v48 = vld [vmem:[%s1 + $0x78] sm:$0xff]
  %v49 = vld [vmem:[%s2] sm:$0x1]
  %v51 = vlaneseq
  %v52 = vshrl.u32 %v51, 7
  %v53 = vsub.s32 0, %v52
  %v54 = vrot.slane %v49, %v53
  %56 = vmatprep.subr.mxu0 0.0
  %57 = vmatpush1.msra.mxu0 %v48
  %58 = vmatprep.subr.mxu0 0.0
  %59 = vmatpush1.msra.mxu0 %v47
  %60 = vmatprep.subr.mxu0 0.0
  %61 = vmatpush1.msra.mxu0 %v46
  %62 = vmatprep.subr.mxu0 0.0
  %63 = vmatpush1.msra.mxu0 %v45
  %64 = vmatprep.subr.mxu0 0.0
  %65 = vmatpush1.msra.mxu0 %v44
  %66 = vmatprep.subr.mxu0 0.0
  %67 = vmatpush1.msra.mxu0 %v43
  %68 = vmatprep.subr.mxu0 0.0
  %69 = vmatpush1.msra.mxu0 %v42
  %70 = vmatprep.subr.mxu0 0.0
  %71 = vmatpush1.msra.mxu0 %v41
  %72 = vmatprep.subr.mxu0 0.0
  %73 = vmatpush1.msra.mxu0 %v40
  %74 = vmatprep.subr.mxu0 0.0
  %75 = vmatpush1.msra.mxu0 %v39
  %76 = vmatprep.subr.mxu0 0.0
  %77 = vmatpush1.msra.mxu0 %v38
  %78 = vmatprep.subr.mxu0 0.0
  %79 = vmatpush1.msra.mxu0 %v37
  %80 = vmatprep.subr.mxu0 0.0
  %81 = vmatpush1.msra.mxu0 %v36
  %82 = vmatprep.subr.mxu0 0.0
  %83 = vmatpush1.msra.mxu0 %v35
  %84 = vmatprep.subr.mxu0 0.0
  %85 = vmatpush1.msra.mxu0 %v34
  %86 = vmatprep.subr.mxu0 0.0
  %87 = vmatpush1.msra.mxu0 %v33
  %88 = vmatprep.subr.mxu0 0.0
  %89 = vmatpush2.msra.mxu0 0.0
  %90 = vmatprep.subr.mxu0 0.0
  %91 = vmatpush2.msra.mxu0 0.0
  %92 = vmatprep.subr.mxu0 0.0
  %93 = vmatpush2.msra.mxu0 0.0
  %94 = vmatprep.subr.mxu0 0.0
  %95 = vmatpush2.msra.mxu0 0.0
  %96 = vmatprep.subr.mxu0 0.0
  %97 = vmatpush2.msra.mxu0 0.0
  %98 = vmatprep.subr.mxu0 0.0
  %99 = vmatpush2.msra.mxu0 0.0
  %100 = vmatprep.subr.mxu0 0.0
  %101 = vmatpush2.msra.mxu0 0.0
  %102 = vmatprep.subr.mxu0 0.0
  %103 = vmatpush2.msra.mxu0 0.0
  %104 = vmatprep.subr.mxu0 0.0
  %105 = vmatpush2.msra.mxu0 0.0
  %106 = vmatprep.subr.mxu0 0.0
  %107 = vmatpush2.msra.mxu0 0.0
  %108 = vmatprep.subr.mxu0 0.0
  %109 = vmatpush2.msra.mxu0 0.0
  %110 = vmatprep.subr.mxu0 0.0
  %111 = vmatpush2.msra.mxu0 0.0
  %112 = vmatprep.subr.mxu0 0.0
  %113 = vmatpush2.msra.mxu0 0.0
  %114 = vmatprep.subr.mxu0 0.0
  %115 = vmatpush2.msra.mxu0 0.0
  %116 = vmatprep.subr.mxu0 0.0
  %117 = vmatpush2.msra.mxu0 0.0
  %118 = vmatprep.subr.mxu0 0.0
  %119 = vmatpush2.msra.mxu0 0.0
  %120 = vmatprep.mubr.f32.mxu0 0.0
  %121 = vmatmul.mubr.f32.gmra.mxu0 %v14
  %v122 = vpop.f32.mrf.mxu0
  %v123 = vadd.f32 %v54, %v122
  %v124 = vpop.f32.mrf.mxu0
  %125 = vmatprep.mubr.f32.mxu0 0.0
  %126 = vmatmul.mubr.f32.gmra.mxu0 %v15
  %v127 = vpop.f32.mrf.mxu0
  %v128 = vadd.f32 %v54, %v127
  %v129 = vpop.f32.mrf.mxu0
  %130 = vmatprep.mubr.f32.mxu0 0.0
  %131 = vmatmul.mubr.f32.gmra.mxu0 %v16
  %v132 = vpop.f32.mrf.mxu0
  %v133 = vadd.f32 %v54, %v132
  %v134 = vpop.f32.mrf.mxu0
  %135 = vmatprep.mubr.f32.mxu0 0.0
  %136 = vmatmul.mubr.f32.gmra.mxu0 %v17
  %v137 = vpop.f32.mrf.mxu0
  %v138 = vadd.f32 %v54, %v137
  %v139 = vpop.f32.mrf.mxu0
  %140 = vmatprep.mubr.f32.mxu0 0.0
  %141 = vmatmul.mubr.f32.gmra.mxu0 %v18
  %v142 = vpop.f32.mrf.mxu0
  %v143 = vadd.f32 %v54, %v142
  %v144 = vpop.f32.mrf.mxu0
  %145 = vmatprep.mubr.f32.mxu0 0.0
  %146 = vmatmul.mubr.f32.gmra.mxu0 %v19
  %v147 = vpop.f32.mrf.mxu0
  %v148 = vadd.f32 %v54, %v147
  %v149 = vpop.f32.mrf.mxu0
  %150 = vmatprep.mubr.f32.mxu0 0.0
  %151 = vmatmul.mubr.f32.gmra.mxu0 %v20
  %v152 = vpop.f32.mrf.mxu0
  %v153 = vadd.f32 %v54, %v152
  %v154 = vpop.f32.mrf.mxu0
  %155 = vmatprep.mubr.f32.mxu0 0.0
  %156 = vmatmul.mubr.f32.gmra.mxu0 %v21
  %v157 = vpop.f32.mrf.mxu0
  %v158 = vadd.f32 %v54, %v157
  %v159 = vpop.f32.mrf.mxu0
  %160 = vmatprep.mubr.f32.mxu0 0.0
  %161 = vmatmul.mubr.f32.gmra.mxu0 %v22
  %v162 = vpop.f32.mrf.mxu0
  %v163 = vadd.f32 %v54, %v162
  %v164 = vpop.f32.mrf.mxu0
  %165 = vmatprep.mubr.f32.mxu0 0.0
  %166 = vmatmul.mubr.f32.gmra.mxu0 %v23
  %v167 = vpop.f32.mrf.mxu0
  %v168 = vadd.f32 %v54, %v167
  %v169 = vpop.f32.mrf.mxu0
  %170 = vmatprep.mubr.f32.mxu0 0.0
  %171 = vmatmul.mubr.f32.gmra.mxu0 %v24
  %v172 = vpop.f32.mrf.mxu0
  %v173 = vadd.f32 %v54, %v172
  %v174 = vpop.f32.mrf.mxu0
  %175 = vmatprep.mubr.f32.mxu0 0.0
  %176 = vmatmul.mubr.f32.gmra.mxu0 %v25
  %v177 = vpop.f32.mrf.mxu0
  %v178 = vadd.f32 %v54, %v177
  %v179 = vpop.f32.mrf.mxu0
  %180 = vmatprep.mubr.f32.mxu0 0.0
  %181 = vmatmul.mubr.f32.gmra.mxu0 %v26
  %v182 = vpop.f32.mrf.mxu0
  %v183 = vadd.f32 %v54, %v182
  %v184 = vpop.f32.mrf.mxu0
  %185 = vmatprep.mubr.f32.mxu0 0.0
  %186 = vmatmul.mubr.f32.gmra.mxu0 %v27
  %v187 = vpop.f32.mrf.mxu0
  %v188 = vadd.f32 %v54, %v187
  %v189 = vpop.f32.mrf.mxu0
  %190 = vmatprep.mubr.f32.mxu0 0.0
  %191 = vmatmul.mubr.f32.gmra.mxu0 %v28
  %v192 = vpop.f32.mrf.mxu0
  %v193 = vadd.f32 %v54, %v192
  %v194 = vpop.f32.mrf.mxu0
  %195 = vmatprep.mubr.f32.mxu0 0.0
  %196 = vmatmul.mubr.f32.gmra.mxu0 %v29
  %v197 = vpop.f32.mrf.mxu0
  %v198 = vadd.f32 %v54, %v197
  %v199 = vpop.f32.mrf.mxu0
  %200 = vmatprep.mubr.f32.mxu0 0.0
  %201 = vmatmul.mubr.f32.gmra.mxu0 %v30
  %v202 = vpop.f32.mrf.mxu0
  %v203 = vadd.f32 %v54, %v202
  %v204 = vpop.f32.mrf.mxu0
  %205 = vmatprep.mubr.f32.mxu0 0.0
  %206 = vmatmul.mubr.f32.gmra.mxu0 %v31
  %v207 = vpop.f32.mrf.mxu0
  %v208 = vadd.f32 %v54, %v207
  %v209 = vpop.f32.mrf.mxu0
  %210 = vmatprep.mubr.f32.mxu0 0.0
  %211 = vmatmul.mubr.f32.gmra.mxu0 %v32
  %v212 = vpop.f32.mrf.mxu0
  %v213 = vadd.f32 %v54, %v212
  %v214 = vpop.f32.mrf.mxu0
  %215 = vdwg.mxu0
  %v216 = vmul.f32 %v123, %v123
  %v217 = vmul.f32 %v128, %v128
  %v218 = vmul.f32 %v133, %v133
  %v219 = vmul.f32 %v138, %v138
  %v220 = vmul.f32 %v143, %v143
  %v221 = vmul.f32 %v148, %v148
  %v222 = vmul.f32 %v153, %v153
  %v223 = vmul.f32 %v158, %v158
  %v224 = vmul.f32 %v163, %v163
  %v225 = vmul.f32 %v168, %v168
  %v226 = vmul.f32 %v173, %v173
  %v227 = vmul.f32 %v178, %v178
  %v228 = vmul.f32 %v183, %v183
  %v229 = vmul.f32 %v188, %v188
  %v230 = vmul.f32 %v193, %v193
  %v231 = vmul.f32 %v198, %v198
  %v232 = vmul.f32 %v203, %v203
  %v233 = vmul.f32 %v208, %v208
  %v234 = vmul.f32 %v213, %v213
  %254 = vrot.lane.b32.xlu0 %v216, 64
  %v255 = vpop.permute.xlu0 %254
  %256 = vrot.lane.b32.xlu0 %v217, 64
  %v257 = vpop.permute.xlu0 %256
  %258 = vrot.lane.b32.xlu0 %v218, 64
  %v259 = vpop.permute.xlu0 %258
  %260 = vrot.lane.b32.xlu0 %v219, 64
  %v261 = vpop.permute.xlu0 %260
  %262 = vrot.lane.b32.xlu0 %v220, 64
  %v263 = vpop.permute.xlu0 %262
  %264 = vrot.lane.b32.xlu0 %v221, 64
  %v265 = vpop.permute.xlu0 %264
  %266 = vrot.lane.b32.xlu0 %v222, 64
  %v267 = vpop.permute.xlu0 %266
  %268 = vrot.lane.b32.xlu0 %v223, 64
  %v269 = vpop.permute.xlu0 %268
  %270 = vrot.lane.b32.xlu0 %v224, 64
  %v271 = vpop.permute.xlu0 %270
  %272 = vrot.lane.b32.xlu0 %v225, 64
  %v273 = vpop.permute.xlu0 %272
  %274 = vrot.lane.b32.xlu0 %v226, 64
  %v275 = vpop.permute.xlu0 %274
  %276 = vrot.lane.b32.xlu0 %v227, 64
  %v277 = vpop.permute.xlu0 %276
  %278 = vrot.lane.b32.xlu0 %v228, 64
  %v279 = vpop.permute.xlu0 %278
  %280 = vrot.lane.b32.xlu0 %v229, 64
  %v281 = vpop.permute.xlu0 %280
  %282 = vrot.lane.b32.xlu0 %v230, 64
  %v283 = vpop.permute.xlu0 %282
  %284 = vrot.lane.b32.xlu0 %v231, 64
  %v285 = vpop.permute.xlu0 %284
  %286 = vrot.lane.b32.xlu0 %v232, 64
  %v287 = vpop.permute.xlu0 %286
  %288 = vrot.lane.b32.xlu0 %v233, 64
  %v289 = vpop.permute.xlu0 %288
  %290 = vrot.lane.b32.xlu0 %v234, 64
  %v291 = vpop.permute.xlu0 %290
  %v311 = vadd.f32 %v216, %v255
  %v312 = vadd.f32 %v217, %v257
  %v313 = vadd.f32 %v218, %v259
  %v314 = vadd.f32 %v219, %v261
  %v315 = vadd.f32 %v220, %v263
  %v316 = vadd.f32 %v221, %v265
  %v317 = vadd.f32 %v222, %v267
  %v318 = vadd.f32 %v223, %v269
  %v319 = vadd.f32 %v224, %v271
  %v320 = vadd.f32 %v225, %v273
  %v321 = vadd.f32 %v226, %v275
  %v322 = vadd.f32 %v227, %v277
  %v323 = vadd.f32 %v228, %v279
  %v324 = vadd.f32 %v229, %v281
  %v325 = vadd.f32 %v230, %v283
  %v326 = vadd.f32 %v231, %v285
  %v327 = vadd.f32 %v232, %v287
  %v328 = vadd.f32 %v233, %v289
  %v329 = vadd.f32 %v234, %v291
  %v330 = vmul.f32 %v123, -10.0
  %v331 = vmul.f32 %v128, -10.0
  %v332 = vmul.f32 %v133, -10.0
  %v333 = vmul.f32 %v138, -10.0
  %v334 = vmul.f32 %v143, -10.0
  %v335 = vmul.f32 %v148, -10.0
  %v336 = vmul.f32 %v153, -10.0
  %v337 = vmul.f32 %v158, -10.0
  %v338 = vmul.f32 %v163, -10.0
  %v339 = vmul.f32 %v168, -10.0
  %v340 = vmul.f32 %v173, -10.0
  %v341 = vmul.f32 %v178, -10.0
  %v342 = vmul.f32 %v183, -10.0
  %v343 = vmul.f32 %v188, -10.0
  %v344 = vmul.f32 %v193, -10.0
  %v345 = vmul.f32 %v198, -10.0
  %v346 = vmul.f32 %v203, -10.0
  %v347 = vmul.f32 %v208, -10.0
  %v348 = vmul.f32 %v213, -10.0
  %v349 = vmul.f32 %v311, 1600.0
  %v350 = vmul.f32 %v312, 1600.0
  %v351 = vmul.f32 %v313, 1600.0
  %v352 = vmul.f32 %v314, 1600.0
  %v353 = vmul.f32 %v315, 1600.0
  %v354 = vmul.f32 %v316, 1600.0
  %v355 = vmul.f32 %v317, 1600.0
  %v356 = vmul.f32 %v318, 1600.0
  %v357 = vmul.f32 %v319, 1600.0
  %v358 = vmul.f32 %v320, 1600.0
  %v359 = vmul.f32 %v321, 1600.0
  %v360 = vmul.f32 %v322, 1600.0
  %v361 = vmul.f32 %v323, 1600.0
  %v362 = vmul.f32 %v324, 1600.0
  %v363 = vmul.f32 %v325, 1600.0
  %v364 = vmul.f32 %v326, 1600.0
  %v365 = vmul.f32 %v327, 1600.0
  %v366 = vmul.f32 %v328, 1600.0
  %v367 = vmul.f32 %v329, 1600.0
  %387 = vrot.lane.b32.xlu0 %v349, 64
  %v388 = vpop.permute.xlu0 %387
  %389 = vrot.lane.b32.xlu0 %v350, 64
  %v390 = vpop.permute.xlu0 %389
  %391 = vrot.lane.b32.xlu0 %v351, 64
  %v392 = vpop.permute.xlu0 %391
  %393 = vrot.lane.b32.xlu0 %v352, 64
  %v394 = vpop.permute.xlu0 %393
  %395 = vrot.lane.b32.xlu0 %v353, 64
  %v396 = vpop.permute.xlu0 %395
  %397 = vrot.lane.b32.xlu0 %v354, 64
  %v398 = vpop.permute.xlu0 %397
  %399 = vrot.lane.b32.xlu0 %v355, 64
  %v400 = vpop.permute.xlu0 %399
  %401 = vrot.lane.b32.xlu0 %v356, 64
  %v402 = vpop.permute.xlu0 %401
  %403 = vrot.lane.b32.xlu0 %v357, 64
  %v404 = vpop.permute.xlu0 %403
  %405 = vrot.lane.b32.xlu0 %v358, 64
  %v406 = vpop.permute.xlu0 %405
  %407 = vrot.lane.b32.xlu0 %v359, 64
  %v408 = vpop.permute.xlu0 %407
  %409 = vrot.lane.b32.xlu0 %v360, 64
  %v410 = vpop.permute.xlu0 %409
  %411 = vrot.lane.b32.xlu0 %v361, 64
  %v412 = vpop.permute.xlu0 %411
  %413 = vrot.lane.b32.xlu0 %v362, 64
  %v414 = vpop.permute.xlu0 %413
  %415 = vrot.lane.b32.xlu0 %v363, 64
  %v416 = vpop.permute.xlu0 %415
  %417 = vrot.lane.b32.xlu0 %v364, 64
  %v418 = vpop.permute.xlu0 %417
  %419 = vrot.lane.b32.xlu0 %v365, 64
  %v420 = vpop.permute.xlu0 %419
  %421 = vrot.lane.b32.xlu0 %v366, 64
  %v422 = vpop.permute.xlu0 %421
  %423 = vrot.lane.b32.xlu0 %v367, 64
  %v424 = vpop.permute.xlu0 %423
  %v444 = vsub.f32 %v330, %v388
  %v445 = vsub.f32 %v331, %v390
  %v446 = vsub.f32 %v332, %v392
  %v447 = vsub.f32 %v333, %v394
  %v448 = vsub.f32 %v334, %v396
  %v449 = vsub.f32 %v335, %v398
  %v450 = vsub.f32 %v336, %v400
  %v451 = vsub.f32 %v337, %v402
  %v452 = vsub.f32 %v338, %v404
  %v453 = vsub.f32 %v339, %v406
  %v454 = vsub.f32 %v340, %v408
  %v455 = vsub.f32 %v341, %v410
  %v456 = vsub.f32 %v342, %v412
  %v457 = vsub.f32 %v343, %v414
  %v458 = vsub.f32 %v344, %v416
  %v459 = vsub.f32 %v345, %v418
  %v460 = vsub.f32 %v346, %v420
  %v461 = vsub.f32 %v347, %v422
  %v462 = vsub.f32 %v348, %v424
  %v463 = vmul.f32 %v444, 1.442695
  %v464 = vpow.pop %v463
  %v465 = vmul.f32 %v445, 1.442695
  %v466 = vpow.pop %v465
  %v467 = vmul.f32 %v446, 1.442695
  %v468 = vpow.pop %v467
  %v469 = vmul.f32 %v447, 1.442695
  %v470 = vpow.pop %v469
  %v471 = vmul.f32 %v448, 1.442695
  %v472 = vpow.pop %v471
  %v473 = vmul.f32 %v449, 1.442695
  %v474 = vpow.pop %v473
  %v475 = vmul.f32 %v450, 1.442695
  %v476 = vpow.pop %v475
  %v477 = vmul.f32 %v451, 1.442695
  %v478 = vpow.pop %v477
  %v479 = vmul.f32 %v452, 1.442695
  %v480 = vpow.pop %v479
  %v481 = vmul.f32 %v453, 1.442695
  %v482 = vpow.pop %v481
  %v483 = vmul.f32 %v454, 1.442695
  %v484 = vpow.pop %v483
  %v485 = vmul.f32 %v455, 1.442695
  %v486 = vpow.pop %v485
  %v487 = vmul.f32 %v456, 1.442695
  %v488 = vpow.pop %v487
  %v489 = vmul.f32 %v457, 1.442695
  %v490 = vpow.pop %v489
  %v491 = vmul.f32 %v458, 1.442695
  %v492 = vpow.pop %v491
  %v493 = vmul.f32 %v459, 1.442695
  %v494 = vpow.pop %v493
  %v495 = vmul.f32 %v460, 1.442695
  %v496 = vpow.pop %v495
  %v497 = vmul.f32 %v461, 1.442695
  %v498 = vpow.pop %v497
  %v499 = vmul.f32 %v462, 1.442695
  %v500 = vpow.pop %v499
  %v501 = vmul.f32 %v123, 10.0
  %v502 = vmul.f32 %v128, 10.0
  %v503 = vmul.f32 %v133, 10.0
  %v504 = vmul.f32 %v138, 10.0
  %v505 = vmul.f32 %v143, 10.0
  %v506 = vmul.f32 %v148, 10.0
  %v507 = vmul.f32 %v153, 10.0
  %v508 = vmul.f32 %v158, 10.0
  %v509 = vmul.f32 %v163, 10.0
  %v510 = vmul.f32 %v168, 10.0
  %v511 = vmul.f32 %v173, 10.0
  %v512 = vmul.f32 %v178, 10.0
  %v513 = vmul.f32 %v183, 10.0
  %v514 = vmul.f32 %v188, 10.0
  %v515 = vmul.f32 %v193, 10.0
  %v516 = vmul.f32 %v198, 10.0
  %v517 = vmul.f32 %v203, 10.0
  %v518 = vmul.f32 %v208, 10.0
  %v519 = vmul.f32 %v213, 10.0
  %v520 = vand.u32 2147483647, %v501
  %vm521 = vcmp.le.f32.partialorder %v520, 0.7853982
  %vm522 = vcmp.lt.s32.totalorder %v501, 0
  %v523 = vand.u32 %v501, 2139095040
  %v524 = vshrl.u32 %v523, 23
  %v525 = vsub.s32 %v524, 127
  %v526 = vand.u32 2147483647, %v501
  %v527 = vand.u32 %v526, 8388607
  %v528 = vor.u32 %v527, 8388608
  %v529 = vsub.s32 0, %v528
  %v530 = vadd.s32 %v525, 1
  %vm531 = vcmp.gt.s32.totalorder %v530, 0
  %v532 = vsel %vm531, %v530, 0
  %v533 = vshrl.u32 %v532, 5
  %v534 = vand.u32 %v532, 31
  %v535 = vsub.s32 32, %v534
  %v536 = vshrl.u32 683565275, %v535
  %v537 = vshll.u32 683565275, %v534
  %v538 = vshrl.u32 2475754826, %v535
  %v539 = vor.u32 %v537, %v538
  %v540 = vshll.u32 2475754826, %v534
  %v541 = vshrl.u32 2131351028, %v535
  %v542 = vor.u32 %v540, %v541
  %v543 = vshll.u32 2131351028, %v534
  %v544 = vshrl.u32 2102212464, %v535
  %v545 = vor.u32 %v543, %v544
  %v546 = vshll.u32 2102212464, %v534
  %v547 = vshrl.u32 920167782, %v535
  %v548 = vor.u32 %v546, %v547
  %v549 = vshll.u32 920167782, %v534
  %v550 = vshrl.u32 1326507024, %v535
  %v551 = vor.u32 %v549, %v550
  %vm552 = vcmp.lt.s32.totalorder %v533, 1
  %vm553 = vcmp.lt.s32.totalorder %v533, 2
  %vm554 = vcmp.lt.s32.totalorder %v533, 3
  %vm555 = vcmp.lt.s32.totalorder %v533, 4
  %v556 = vsel %vm552, %v536, %v539
  %v557 = vsel %vm555, %v545, 2102212464
  %v558 = vsel %vm554, %v542, %v557
  %v559 = vsel %vm553, %v556, %v558
  %v560 = vsel %vm552, %v539, %v542
  %v561 = vsel %vm555, %v548, 920167782
  %v562 = vsel %vm554, %v545, %v561
  %v563 = vsel %vm553, %v560, %v562
  %v564 = vsel %vm552, %v542, %v545
  %v565 = vsel %vm555, %v551, 1326507024
  %v566 = vsel %vm554, %v548, %v565
  %v567 = vsel %vm553, %v564, %v566
  %v568 = vshll.u32 %v528, 8
  %v569 = vmul.u32.u64.compose %v568, %v567
  %v570 = vextract.low.u32 %v569
  %v571 = vextract.high.u32 %v569
  %v572 = vmul.u32.u64.compose %v568, %v563
  %v573 = vextract.low.u32 %v572
  %v574 = vextract.high.u32 %v572
  %v575 = vmul.u32 %v568, %v559
  %v576 = vadd.s32 %v571, %v573
  %vm577 = vc.u32 %v571, %v573
  %v578 = vadd.s32 %v574, 1
  %v579 = vsel %vm577, %v578, %v574
  %v580 = vadd.s32 %v575, %v579
  %v581 = vadd.s32 %v580, 536870912
  %v582 = vshrl.u32 %v581, 30
  %v583 = vshll.u32 %v582, 30
  %v584 = vsub.s32 %v580, %v583
  %vm585 = vcmp.lt.s32.totalorder %v584, 0
  %v586 = vsub.s32 0, %v584
  %v587 = vsel %vm585, %v586, %v584
  %v588 = vclz %v587
  %v589 = vsub.s32 %v588, 2
  %vm590 = vcmp.gt.s32.totalorder 0, %v589
  %v591 = vsel %vm590, 0, %v589
  %v592 = vsub.s32 32, %v591
  %v593 = vshll.u32 %v584, %v591
  %v594 = vshrl.u32 %v576, %v592
  %v595 = vor.u32 %v593, %v594
  %v596 = vsub.s32 4294967266, %v591
  %v597 = vadd.s32 %v596, 127
  %v598 = vshll.u32 %v597, 23
  %v599 = vor.u32 4788187, %v598
  %v600 = vand.u32 2147483647, %v599
  %v602 = vcvt.s32.f32 %v595
  %v603 = vmul.f32 %v602, %v600
  %v604 = vxor.u32 %v603, 2147483648
  %v605 = vsel %vm522, %v604, %v603
  %v606 = vsub.s32 4, %v582
  %v607 = vsel %vm522, %v606, %v582
  %v608 = vsel %vm521, %v501, %v605
  %v609 = vsel %vm521, 0, %v607
  %v610 = vcosq.f32.pop %v608
  %v611 = vsinq.f32.pop %v608
  %vm612 = vweird.f32 %v501
  %v613 = vand.u32 %v609, 3
  %vm614 = vcmp.lt.s32.totalorder %v613, 2
  %vm615 = vcmp.eq.s32.totalorder %v613, 0
  %v616 = vxor.u32 %v611, 2147483648
  %v617 = vsel %vm615, %v610, %v616
  %vm618 = vcmp.eq.s32.totalorder %v613, 2
  %v619 = vxor.u32 %v610, 2147483648
  %v620 = vsel %vm618, %v619, %v611
  %v621 = vsel %vm614, %v617, %v620
  %v622 = vsel %vm612, nan, %v621
  %v623 = vand.u32 2147483647, %v502
  %vm624 = vcmp.le.f32.partialorder %v623, 0.7853982
  %vm625 = vcmp.lt.s32.totalorder %v502, 0
  %v626 = vand.u32 %v502, 2139095040
  %v627 = vshrl.u32 %v626, 23
  %v628 = vsub.s32 %v627, 127
  %v629 = vand.u32 2147483647, %v502
  %v630 = vand.u32 %v629, 8388607
  %v631 = vor.u32 %v630, 8388608
  %v632 = vsub.s32 0, %v631
  %v633 = vadd.s32 %v628, 1
  %vm634 = vcmp.gt.s32.totalorder %v633, 0
  %v635 = vsel %vm634, %v633, 0
  %v636 = vshrl.u32 %v635, 5
  %v637 = vand.u32 %v635, 31
  %v638 = vsub.s32 32, %v637
  %v639 = vshrl.u32 683565275, %v638
  %v640 = vshll.u32 683565275, %v637
  %v641 = vshrl.u32 2475754826, %v638
  %v642 = vor.u32 %v640, %v641
  %v643 = vshll.u32 2475754826, %v637
  %v644 = vshrl.u32 2131351028, %v638
  %v645 = vor.u32 %v643, %v644
  %v646 = vshll.u32 2131351028, %v637
  %v647 = vshrl.u32 2102212464, %v638
  %v648 = vor.u32 %v646, %v647
  %v649 = vshll.u32 2102212464, %v637
  %v650 = vshrl.u32 920167782, %v638
  %v651 = vor.u32 %v649, %v650
  %v652 = vshll.u32 920167782, %v637
  %v653 = vshrl.u32 1326507024, %v638
  %v654 = vor.u32 %v652, %v653
  %vm655 = vcmp.lt.s32.totalorder %v636, 1
  %vm656 = vcmp.lt.s32.totalorder %v636, 2
  %vm657 = vcmp.lt.s32.totalorder %v636, 3
  %vm658 = vcmp.lt.s32.totalorder %v636, 4
  %v659 = vsel %vm655, %v639, %v642
  %v660 = vsel %vm658, %v648, 2102212464
  %v661 = vsel %vm657, %v645, %v660
  %v662 = vsel %vm656, %v659, %v661
  %v663 = vsel %vm655, %v642, %v645
  %v664 = vsel %vm658, %v651, 920167782
  %v665 = vsel %vm657, %v648, %v664
  %v666 = vsel %vm656, %v663, %v665
  %v667 = vsel %vm655, %v645, %v648
  %v668 = vsel %vm658, %v654, 1326507024
  %v669 = vsel %vm657, %v651, %v668
  %v670 = vsel %vm656, %v667, %v669
  %v671 = vshll.u32 %v631, 8
  %v672 = vmul.u32.u64.compose %v671, %v670
  %v673 = vextract.low.u32 %v672
  %v674 = vextract.high.u32 %v672
  %v675 = vmul.u32.u64.compose %v671, %v666
  %v676 = vextract.low.u32 %v675
  %v677 = vextract.high.u32 %v675
  %v678 = vmul.u32 %v671, %v662
  %v679 = vadd.s32 %v674, %v676
  %vm680 = vc.u32 %v674, %v676
  %v681 = vadd.s32 %v677, 1
  %v682 = vsel %vm680, %v681, %v677
  %v683 = vadd.s32 %v678, %v682
  %v684 = vadd.s32 %v683, 536870912
  %v685 = vshrl.u32 %v684, 30
  %v686 = vshll.u32 %v685, 30
  %v687 = vsub.s32 %v683, %v686
  %vm688 = vcmp.lt.s32.totalorder %v687, 0
  %v689 = vsub.s32 0, %v687
  %v690 = vsel %vm688, %v689, %v687
  %v691 = vclz %v690
  %v692 = vsub.s32 %v691, 2
  %vm693 = vcmp.gt.s32.totalorder 0, %v692
  %v694 = vsel %vm693, 0, %v692
  %v695 = vsub.s32 32, %v694
  %v696 = vshll.u32 %v687, %v694
  %v697 = vshrl.u32 %v679, %v695
  %v698 = vor.u32 %v696, %v697
  %v699 = vsub.s32 4294967266, %v694
  %v700 = vadd.s32 %v699, 127
  %v701 = vshll.u32 %v700, 23
  %v702 = vor.u32 4788187, %v701
  %v703 = vand.u32 2147483647, %v702
  %v705 = vcvt.s32.f32 %v698
  %v706 = vmul.f32 %v705, %v703
  %v707 = vxor.u32 %v706, 2147483648
  %v708 = vsel %vm625, %v707, %v706
  %v709 = vsub.s32 4, %v685
  %v710 = vsel %vm625, %v709, %v685
  %v711 = vsel %vm624, %v502, %v708
  %v712 = vsel %vm624, 0, %v710
  %v713 = vcosq.f32.pop %v711
  %v714 = vsinq.f32.pop %v711
  %vm715 = vweird.f32 %v502
  %v716 = vand.u32 %v712, 3
  %vm717 = vcmp.lt.s32.totalorder %v716, 2
  %vm718 = vcmp.eq.s32.totalorder %v716, 0
  %v719 = vxor.u32 %v714, 2147483648
  %v720 = vsel %vm718, %v713, %v719
  %vm721 = vcmp.eq.s32.totalorder %v716, 2
  %v722 = vxor.u32 %v713, 2147483648
  %v723 = vsel %vm721, %v722, %v714
  %v724 = vsel %vm717, %v720, %v723
  %v725 = vsel %vm715, nan, %v724
  %v726 = vand.u32 2147483647, %v503
  %vm727 = vcmp.le.f32.partialorder %v726, 0.7853982
  %vm728 = vcmp.lt.s32.totalorder %v503, 0
  %v729 = vand.u32 %v503, 2139095040
  %v730 = vshrl.u32 %v729, 23
  %v731 = vsub.s32 %v730, 127
  %v732 = vand.u32 2147483647, %v503
  %v733 = vand.u32 %v732, 8388607
  %v734 = vor.u32 %v733, 8388608
  %v735 = vsub.s32 0, %v734
  %v736 = vadd.s32 %v731, 1
  %vm737 = vcmp.gt.s32.totalorder %v736, 0
  %v738 = vsel %vm737, %v736, 0
  %v739 = vshrl.u32 %v738, 5
  %v740 = vand.u32 %v738, 31
  %v741 = vsub.s32 32, %v740
  %v742 = vshrl.u32 683565275, %v741
  %v743 = vshll.u32 683565275, %v740
  %v744 = vshrl.u32 2475754826, %v741
  %v745 = vor.u32 %v743, %v744
  %v746 = vshll.u32 2475754826, %v740
  %v747 = vshrl.u32 2131351028, %v741
  %v748 = vor.u32 %v746, %v747
  %v749 = vshll.u32 2131351028, %v740
  %v750 = vshrl.u32 2102212464, %v741
  %v751 = vor.u32 %v749, %v750
  %v752 = vshll.u32 2102212464, %v740
  %v753 = vshrl.u32 920167782, %v741
  %v754 = vor.u32 %v752, %v753
  %v755 = vshll.u32 920167782, %v740
  %v756 = vshrl.u32 1326507024, %v741
  %v757 = vor.u32 %v755, %v756
  %vm758 = vcmp.lt.s32.totalorder %v739, 1
  %vm759 = vcmp.lt.s32.totalorder %v739, 2
  %vm760 = vcmp.lt.s32.totalorder %v739, 3
  %vm761 = vcmp.lt.s32.totalorder %v739, 4
  %v762 = vsel %vm758, %v742, %v745
  %v763 = vsel %vm761, %v751, 2102212464
  %v764 = vsel %vm760, %v748, %v763
  %v765 = vsel %vm759, %v762, %v764
  %v766 = vsel %vm758, %v745, %v748
  %v767 = vsel %vm761, %v754, 920167782
  %v768 = vsel %vm760, %v751, %v767
  %v769 = vsel %vm759, %v766, %v768
  %v770 = vsel %vm758, %v748, %v751
  %v771 = vsel %vm761, %v757, 1326507024
  %v772 = vsel %vm760, %v754, %v771
  %v773 = vsel %vm759, %v770, %v772
  %v774 = vshll.u32 %v734, 8
  %v775 = vmul.u32.u64.compose %v774, %v773
  %v776 = vextract.low.u32 %v775
  %v777 = vextract.high.u32 %v775
  %v778 = vmul.u32.u64.compose %v774, %v769
  %v779 = vextract.low.u32 %v778
  %v780 = vextract.high.u32 %v778
  %v781 = vmul.u32 %v774, %v765
  %v782 = vadd.s32 %v777, %v779
  %vm783 = vc.u32 %v777, %v779
  %v784 = vadd.s32 %v780, 1
  %v785 = vsel %vm783, %v784, %v780
  %v786 = vadd.s32 %v781, %v785
  %v787 = vadd.s32 %v786, 536870912
  %v788 = vshrl.u32 %v787, 30
  %v789 = vshll.u32 %v788, 30
  %v790 = vsub.s32 %v786, %v789
  %vm791 = vcmp.lt.s32.totalorder %v790, 0
  %v792 = vsub.s32 0, %v790
  %v793 = vsel %vm791, %v792, %v790
  %v794 = vclz %v793
  %v795 = vsub.s32 %v794, 2
  %vm796 = vcmp.gt.s32.totalorder 0, %v795
  %v797 = vsel %vm796, 0, %v795
  %v798 = vsub.s32 32, %v797
  %v799 = vshll.u32 %v790, %v797
  %v800 = vshrl.u32 %v782, %v798
  %v801 = vor.u32 %v799, %v800
  %v802 = vsub.s32 4294967266, %v797
  %v803 = vadd.s32 %v802, 127
  %v804 = vshll.u32 %v803, 23
  %v805 = vor.u32 4788187, %v804
  %v806 = vand.u32 2147483647, %v805
  %v808 = vcvt.s32.f32 %v801
  %v809 = vmul.f32 %v808, %v806
  %v810 = vxor.u32 %v809, 2147483648
  %v811 = vsel %vm728, %v810, %v809
  %v812 = vsub.s32 4, %v788
  %v813 = vsel %vm728, %v812, %v788
  %v814 = vsel %vm727, %v503, %v811
  %v815 = vsel %vm727, 0, %v813
  %v816 = vcosq.f32.pop %v814
  %v817 = vsinq.f32.pop %v814
  %vm818 = vweird.f32 %v503
  %v819 = vand.u32 %v815, 3
  %vm820 = vcmp.lt.s32.totalorder %v819, 2
  %vm821 = vcmp.eq.s32.totalorder %v819, 0
  %v822 = vxor.u32 %v817, 2147483648
  %v823 = vsel %vm821, %v816, %v822
  %vm824 = vcmp.eq.s32.totalorder %v819, 2
  %v825 = vxor.u32 %v816, 2147483648
  %v826 = vsel %vm824, %v825, %v817
  %v827 = vsel %vm820, %v823, %v826
  %v828 = vsel %vm818, nan, %v827
  %v829 = vand.u32 2147483647, %v504
  %vm830 = vcmp.le.f32.partialorder %v829, 0.7853982
  %vm831 = vcmp.lt.s32.totalorder %v504, 0
  %v832 = vand.u32 %v504, 2139095040
  %v833 = vshrl.u32 %v832, 23
  %v834 = vsub.s32 %v833, 127
  %v835 = vand.u32 2147483647, %v504
  %v836 = vand.u32 %v835, 8388607
  %v837 = vor.u32 %v836, 8388608
  %v838 = vsub.s32 0, %v837
  %v839 = vadd.s32 %v834, 1
  %vm840 = vcmp.gt.s32.totalorder %v839, 0
  %v841 = vsel %vm840, %v839, 0
  %v842 = vshrl.u32 %v841, 5
  %v843 = vand.u32 %v841, 31
  %v844 = vsub.s32 32, %v843
  %v845 = vshrl.u32 683565275, %v844
  %v846 = vshll.u32 683565275, %v843
  %v847 = vshrl.u32 2475754826, %v844
  %v848 = vor.u32 %v846, %v847
  %v849 = vshll.u32 2475754826, %v843
  %v850 = vshrl.u32 2131351028, %v844
  %v851 = vor.u32 %v849, %v850
  %v852 = vshll.u32 2131351028, %v843
  %v853 = vshrl.u32 2102212464, %v844
  %v854 = vor.u32 %v852, %v853
  %v855 = vshll.u32 2102212464, %v843
  %v856 = vshrl.u32 920167782, %v844
  %v857 = vor.u32 %v855, %v856
  %v858 = vshll.u32 920167782, %v843
  %v859 = vshrl.u32 1326507024, %v844
  %v860 = vor.u32 %v858, %v859
  %vm861 = vcmp.lt.s32.totalorder %v842, 1
  %vm862 = vcmp.lt.s32.totalorder %v842, 2
  %vm863 = vcmp.lt.s32.totalorder %v842, 3
  %vm864 = vcmp.lt.s32.totalorder %v842, 4
  %v865 = vsel %vm861, %v845, %v848
  %v866 = vsel %vm864, %v854, 2102212464
  %v867 = vsel %vm863, %v851, %v866
  %v868 = vsel %vm862, %v865, %v867
  %v869 = vsel %vm861, %v848, %v851
  %v870 = vsel %vm864, %v857, 920167782
  %v871 = vsel %vm863, %v854, %v870
  %v872 = vsel %vm862, %v869, %v871
  %v873 = vsel %vm861, %v851, %v854
  %v874 = vsel %vm864, %v860, 1326507024
  %v875 = vsel %vm863, %v857, %v874
  %v876 = vsel %vm862, %v873, %v875
  %v877 = vshll.u32 %v837, 8
  %v878 = vmul.u32.u64.compose %v877, %v876
  %v879 = vextract.low.u32 %v878
  %v880 = vextract.high.u32 %v878
  %v881 = vmul.u32.u64.compose %v877, %v872
  %v882 = vextract.low.u32 %v881
  %v883 = vextract.high.u32 %v881
  %v884 = vmul.u32 %v877, %v868
  %v885 = vadd.s32 %v880, %v882
  %vm886 = vc.u32 %v880, %v882
  %v887 = vadd.s32 %v883, 1
  %v888 = vsel %vm886, %v887, %v883
  %v889 = vadd.s32 %v884, %v888
  %v890 = vadd.s32 %v889, 536870912
  %v891 = vshrl.u32 %v890, 30
  %v892 = vshll.u32 %v891, 30
  %v893 = vsub.s32 %v889, %v892
  %vm894 = vcmp.lt.s32.totalorder %v893, 0
  %v895 = vsub.s32 0, %v893
  %v896 = vsel %vm894, %v895, %v893
  %v897 = vclz %v896
  %v898 = vsub.s32 %v897, 2
  %vm899 = vcmp.gt.s32.totalorder 0, %v898
  %v900 = vsel %vm899, 0, %v898
  %v901 = vsub.s32 32, %v900
  %v902 = vshll.u32 %v893, %v900
  %v903 = vshrl.u32 %v885, %v901
  %v904 = vor.u32 %v902, %v903
  %v905 = vsub.s32 4294967266, %v900
  %v906 = vadd.s32 %v905, 127
  %v907 = vshll.u32 %v906, 23
  %v908 = vor.u32 4788187, %v907
  %v909 = vand.u32 2147483647, %v908
  %v911 = vcvt.s32.f32 %v904
  %v912 = vmul.f32 %v911, %v909
  %v913 = vxor.u32 %v912, 2147483648
  %v914 = vsel %vm831, %v913, %v912
  %v915 = vsub.s32 4, %v891
  %v916 = vsel %vm831, %v915, %v891
  %v917 = vsel %vm830, %v504, %v914
  %v918 = vsel %vm830, 0, %v916
  %v919 = vcosq.f32.pop %v917
  %v920 = vsinq.f32.pop %v917
  %vm921 = vweird.f32 %v504
  %v922 = vand.u32 %v918, 3
  %vm923 = vcmp.lt.s32.totalorder %v922, 2
  %vm924 = vcmp.eq.s32.totalorder %v922, 0
  %v925 = vxor.u32 %v920, 2147483648
  %v926 = vsel %vm924, %v919, %v925
  %vm927 = vcmp.eq.s32.totalorder %v922, 2
  %v928 = vxor.u32 %v919, 2147483648
  %v929 = vsel %vm927, %v928, %v920
  %v930 = vsel %vm923, %v926, %v929
  %v931 = vsel %vm921, nan, %v930
  %v932 = vand.u32 2147483647, %v505
  %vm933 = vcmp.le.f32.partialorder %v932, 0.7853982
  %vm934 = vcmp.lt.s32.totalorder %v505, 0
  %v935 = vand.u32 %v505, 2139095040
  %v936 = vshrl.u32 %v935, 23
  %v937 = vsub.s32 %v936, 127
  %v938 = vand.u32 2147483647, %v505
  %v939 = vand.u32 %v938, 8388607
  %v940 = vor.u32 %v939, 8388608
  %v941 = vsub.s32 0, %v940
  %v942 = vadd.s32 %v937, 1
  %vm943 = vcmp.gt.s32.totalorder %v942, 0
  %v944 = vsel %vm943, %v942, 0
  %v945 = vshrl.u32 %v944, 5
  %v946 = vand.u32 %v944, 31
  %v947 = vsub.s32 32, %v946
  %v948 = vshrl.u32 683565275, %v947
  %v949 = vshll.u32 683565275, %v946
  %v950 = vshrl.u32 2475754826, %v947
  %v951 = vor.u32 %v949, %v950
  %v952 = vshll.u32 2475754826, %v946
  %v953 = vshrl.u32 2131351028, %v947
  %v954 = vor.u32 %v952, %v953
  %v955 = vshll.u32 2131351028, %v946
  %v956 = vshrl.u32 2102212464, %v947
  %v957 = vor.u32 %v955, %v956
  %v958 = vshll.u32 2102212464, %v946
  %v959 = vshrl.u32 920167782, %v947
  %v960 = vor.u32 %v958, %v959
  %v961 = vshll.u32 920167782, %v946
  %v962 = vshrl.u32 1326507024, %v947
  %v963 = vor.u32 %v961, %v962
  %vm964 = vcmp.lt.s32.totalorder %v945, 1
  %vm965 = vcmp.lt.s32.totalorder %v945, 2
  %vm966 = vcmp.lt.s32.totalorder %v945, 3
  %vm967 = vcmp.lt.s32.totalorder %v945, 4
  %v968 = vsel %vm964, %v948, %v951
  %v969 = vsel %vm967, %v957, 2102212464
  %v970 = vsel %vm966, %v954, %v969
  %v971 = vsel %vm965, %v968, %v970
  %v972 = vsel %vm964, %v951, %v954
  %v973 = vsel %vm967, %v960, 920167782
  %v974 = vsel %vm966, %v957, %v973
  %v975 = vsel %vm965, %v972, %v974
  %v976 = vsel %vm964, %v954, %v957
  %v977 = vsel %vm967, %v963, 1326507024
  %v978 = vsel %vm966, %v960, %v977
  %v979 = vsel %vm965, %v976, %v978
  %v980 = vshll.u32 %v940, 8
  %v981 = vmul.u32.u64.compose %v980, %v979
  %v982 = vextract.low.u32 %v981
  %v983 = vextract.high.u32 %v981
  %v984 = vmul.u32.u64.compose %v980, %v975
  %v985 = vextract.low.u32 %v984
  %v986 = vextract.high.u32 %v984
  %v987 = vmul.u32 %v980, %v971
  %v988 = vadd.s32 %v983, %v985
  %vm989 = vc.u32 %v983, %v985
  %v990 = vadd.s32 %v986, 1
  %v991 = vsel %vm989, %v990, %v986
  %v992 = vadd.s32 %v987, %v991
  %v993 = vadd.s32 %v992, 536870912
  %v994 = vshrl.u32 %v993, 30
  %v995 = vshll.u32 %v994, 30
  %v996 = vsub.s32 %v992, %v995
  %vm997 = vcmp.lt.s32.totalorder %v996, 0
  %v998 = vsub.s32 0, %v996
  %v999 = vsel %vm997, %v998, %v996
  %v1000 = vclz %v999
  %v1001 = vsub.s32 %v1000, 2
  %vm1002 = vcmp.gt.s32.totalorder 0, %v1001
  %v1003 = vsel %vm1002, 0, %v1001
  %v1004 = vsub.s32 32, %v1003
  %v1005 = vshll.u32 %v996, %v1003
  %v1006 = vshrl.u32 %v988, %v1004
  %v1007 = vor.u32 %v1005, %v1006
  %v1008 = vsub.s32 4294967266, %v1003
  %v1009 = vadd.s32 %v1008, 127
  %v1010 = vshll.u32 %v1009, 23
  %v1011 = vor.u32 4788187, %v1010
  %v1012 = vand.u32 2147483647, %v1011
  %v1014 = vcvt.s32.f32 %v1007
  %v1015 = vmul.f32 %v1014, %v1012
  %v1016 = vxor.u32 %v1015, 2147483648
  %v1017 = vsel %vm934, %v1016, %v1015
  %v1018 = vsub.s32 4, %v994
  %v1019 = vsel %vm934, %v1018, %v994
  %v1020 = vsel %vm933, %v505, %v1017
  %v1021 = vsel %vm933, 0, %v1019
  %v1022 = vcosq.f32.pop %v1020
  %v1023 = vsinq.f32.pop %v1020
  %vm1024 = vweird.f32 %v505
  %v1025 = vand.u32 %v1021, 3
  %vm1026 = vcmp.lt.s32.totalorder %v1025, 2
  %vm1027 = vcmp.eq.s32.totalorder %v1025, 0
  %v1028 = vxor.u32 %v1023, 2147483648
  %v1029 = vsel %vm1027, %v1022, %v1028
  %vm1030 = vcmp.eq.s32.totalorder %v1025, 2
  %v1031 = vxor.u32 %v1022, 2147483648
  %v1032 = vsel %vm1030, %v1031, %v1023
  %v1033 = vsel %vm1026, %v1029, %v1032
  %v1034 = vsel %vm1024, nan, %v1033
  %v1035 = vand.u32 2147483647, %v506
  %vm1036 = vcmp.le.f32.partialorder %v1035, 0.7853982
  %vm1037 = vcmp.lt.s32.totalorder %v506, 0
  %v1038 = vand.u32 %v506, 2139095040
  %v1039 = vshrl.u32 %v1038, 23
  %v1040 = vsub.s32 %v1039, 127
  %v1041 = vand.u32 2147483647, %v506
  %v1042 = vand.u32 %v1041, 8388607
  %v1043 = vor.u32 %v1042, 8388608
  %v1044 = vsub.s32 0, %v1043
  %v1045 = vadd.s32 %v1040, 1
  %vm1046 = vcmp.gt.s32.totalorder %v1045, 0
  %v1047 = vsel %vm1046, %v1045, 0
  %v1048 = vshrl.u32 %v1047, 5
  %v1049 = vand.u32 %v1047, 31
  %v1050 = vsub.s32 32, %v1049
  %v1051 = vshrl.u32 683565275, %v1050
  %v1052 = vshll.u32 683565275, %v1049
  %v1053 = vshrl.u32 2475754826, %v1050
  %v1054 = vor.u32 %v1052, %v1053
  %v1055 = vshll.u32 2475754826, %v1049
  %v1056 = vshrl.u32 2131351028, %v1050
  %v1057 = vor.u32 %v1055, %v1056
  %v1058 = vshll.u32 2131351028, %v1049
  %v1059 = vshrl.u32 2102212464, %v1050
  %v1060 = vor.u32 %v1058, %v1059
  %v1061 = vshll.u32 2102212464, %v1049
  %v1062 = vshrl.u32 920167782, %v1050
  %v1063 = vor.u32 %v1061, %v1062
  %v1064 = vshll.u32 920167782, %v1049
  %v1065 = vshrl.u32 1326507024, %v1050
  %v1066 = vor.u32 %v1064, %v1065
  %vm1067 = vcmp.lt.s32.totalorder %v1048, 1
  %vm1068 = vcmp.lt.s32.totalorder %v1048, 2
  %vm1069 = vcmp.lt.s32.totalorder %v1048, 3
  %vm1070 = vcmp.lt.s32.totalorder %v1048, 4
  %v1071 = vsel %vm1067, %v1051, %v1054
  %v1072 = vsel %vm1070, %v1060, 2102212464
  %v1073 = vsel %vm1069, %v1057, %v1072
  %v1074 = vsel %vm1068, %v1071, %v1073
  %v1075 = vsel %vm1067, %v1054, %v1057
  %v1076 = vsel %vm1070, %v1063, 920167782
  %v1077 = vsel %vm1069, %v1060, %v1076
  %v1078 = vsel %vm1068, %v1075, %v1077
  %v1079 = vsel %vm1067, %v1057, %v1060
  %v1080 = vsel %vm1070, %v1066, 1326507024
  %v1081 = vsel %vm1069, %v1063, %v1080
  %v1082 = vsel %vm1068, %v1079, %v1081
  %v1083 = vshll.u32 %v1043, 8
  %v1084 = vmul.u32.u64.compose %v1083, %v1082
  %v1085 = vextract.low.u32 %v1084
  %v1086 = vextract.high.u32 %v1084
  %v1087 = vmul.u32.u64.compose %v1083, %v1078
  %v1088 = vextract.low.u32 %v1087
  %v1089 = vextract.high.u32 %v1087
  %v1090 = vmul.u32 %v1083, %v1074
  %v1091 = vadd.s32 %v1086, %v1088
  %vm1092 = vc.u32 %v1086, %v1088
  %v1093 = vadd.s32 %v1089, 1
  %v1094 = vsel %vm1092, %v1093, %v1089
  %v1095 = vadd.s32 %v1090, %v1094
  %v1096 = vadd.s32 %v1095, 536870912
  %v1097 = vshrl.u32 %v1096, 30
  %v1098 = vshll.u32 %v1097, 30
  %v1099 = vsub.s32 %v1095, %v1098
  %vm1100 = vcmp.lt.s32.totalorder %v1099, 0
  %v1101 = vsub.s32 0, %v1099
  %v1102 = vsel %vm1100, %v1101, %v1099
  %v1103 = vclz %v1102
  %v1104 = vsub.s32 %v1103, 2
  %vm1105 = vcmp.gt.s32.totalorder 0, %v1104
  %v1106 = vsel %vm1105, 0, %v1104
  %v1107 = vsub.s32 32, %v1106
  %v1108 = vshll.u32 %v1099, %v1106
  %v1109 = vshrl.u32 %v1091, %v1107
  %v1110 = vor.u32 %v1108, %v1109
  %v1111 = vsub.s32 4294967266, %v1106
  %v1112 = vadd.s32 %v1111, 127
  %v1113 = vshll.u32 %v1112, 23
  %v1114 = vor.u32 4788187, %v1113
  %v1115 = vand.u32 2147483647, %v1114
  %v1117 = vcvt.s32.f32 %v1110
  %v1118 = vmul.f32 %v1117, %v1115
  %v1119 = vxor.u32 %v1118, 2147483648
  %v1120 = vsel %vm1037, %v1119, %v1118
  %v1121 = vsub.s32 4, %v1097
  %v1122 = vsel %vm1037, %v1121, %v1097
  %v1123 = vsel %vm1036, %v506, %v1120
  %v1124 = vsel %vm1036, 0, %v1122
  %v1125 = vcosq.f32.pop %v1123
  %v1126 = vsinq.f32.pop %v1123
  %vm1127 = vweird.f32 %v506
  %v1128 = vand.u32 %v1124, 3
  %vm1129 = vcmp.lt.s32.totalorder %v1128, 2
  %vm1130 = vcmp.eq.s32.totalorder %v1128, 0
  %v1131 = vxor.u32 %v1126, 2147483648
  %v1132 = vsel %vm1130, %v1125, %v1131
  %vm1133 = vcmp.eq.s32.totalorder %v1128, 2
  %v1134 = vxor.u32 %v1125, 2147483648
  %v1135 = vsel %vm1133, %v1134, %v1126
  %v1136 = vsel %vm1129, %v1132, %v1135
  %v1137 = vsel %vm1127, nan, %v1136
  %v1138 = vand.u32 2147483647, %v507
  %vm1139 = vcmp.le.f32.partialorder %v1138, 0.7853982
  %vm1140 = vcmp.lt.s32.totalorder %v507, 0
  %v1141 = vand.u32 %v507, 2139095040
  %v1142 = vshrl.u32 %v1141, 23
  %v1143 = vsub.s32 %v1142, 127
  %v1144 = vand.u32 2147483647, %v507
  %v1145 = vand.u32 %v1144, 8388607
  %v1146 = vor.u32 %v1145, 8388608
  %v1147 = vsub.s32 0, %v1146
  %v1148 = vadd.s32 %v1143, 1
  %vm1149 = vcmp.gt.s32.totalorder %v1148, 0
  %v1150 = vsel %vm1149, %v1148, 0
  %v1151 = vshrl.u32 %v1150, 5
  %v1152 = vand.u32 %v1150, 31
  %v1153 = vsub.s32 32, %v1152
  %v1154 = vshrl.u32 683565275, %v1153
  %v1155 = vshll.u32 683565275, %v1152
  %v1156 = vshrl.u32 2475754826, %v1153
  %v1157 = vor.u32 %v1155, %v1156
  %v1158 = vshll.u32 2475754826, %v1152
  %v1159 = vshrl.u32 2131351028, %v1153
  %v1160 = vor.u32 %v1158, %v1159
  %v1161 = vshll.u32 2131351028, %v1152
  %v1162 = vshrl.u32 2102212464, %v1153
  %v1163 = vor.u32 %v1161, %v1162
  %v1164 = vshll.u32 2102212464, %v1152
  %v1165 = vshrl.u32 920167782, %v1153
  %v1166 = vor.u32 %v1164, %v1165
  %v1167 = vshll.u32 920167782, %v1152
  %v1168 = vshrl.u32 1326507024, %v1153
  %v1169 = vor.u32 %v1167, %v1168
  %vm1170 = vcmp.lt.s32.totalorder %v1151, 1
  %vm1171 = vcmp.lt.s32.totalorder %v1151, 2
  %vm1172 = vcmp.lt.s32.totalorder %v1151, 3
  %vm1173 = vcmp.lt.s32.totalorder %v1151, 4
  %v1174 = vsel %vm1170, %v1154, %v1157
  %v1175 = vsel %vm1173, %v1163, 2102212464
  %v1176 = vsel %vm1172, %v1160, %v1175
  %v1177 = vsel %vm1171, %v1174, %v1176
  %v1178 = vsel %vm1170, %v1157, %v1160
  %v1179 = vsel %vm1173, %v1166, 920167782
  %v1180 = vsel %vm1172, %v1163, %v1179
  %v1181 = vsel %vm1171, %v1178, %v1180
  %v1182 = vsel %vm1170, %v1160, %v1163
  %v1183 = vsel %vm1173, %v1169, 1326507024
  %v1184 = vsel %vm1172, %v1166, %v1183
  %v1185 = vsel %vm1171, %v1182, %v1184
  %v1186 = vshll.u32 %v1146, 8
  %v1187 = vmul.u32.u64.compose %v1186, %v1185
  %v1188 = vextract.low.u32 %v1187
  %v1189 = vextract.high.u32 %v1187
  %v1190 = vmul.u32.u64.compose %v1186, %v1181
  %v1191 = vextract.low.u32 %v1190
  %v1192 = vextract.high.u32 %v1190
  %v1193 = vmul.u32 %v1186, %v1177
  %v1194 = vadd.s32 %v1189, %v1191
  %vm1195 = vc.u32 %v1189, %v1191
  %v1196 = vadd.s32 %v1192, 1
  %v1197 = vsel %vm1195, %v1196, %v1192
  %v1198 = vadd.s32 %v1193, %v1197
  %v1199 = vadd.s32 %v1198, 536870912
  %v1200 = vshrl.u32 %v1199, 30
  %v1201 = vshll.u32 %v1200, 30
  %v1202 = vsub.s32 %v1198, %v1201
  %vm1203 = vcmp.lt.s32.totalorder %v1202, 0
  %v1204 = vsub.s32 0, %v1202
  %v1205 = vsel %vm1203, %v1204, %v1202
  %v1206 = vclz %v1205
  %v1207 = vsub.s32 %v1206, 2
  %vm1208 = vcmp.gt.s32.totalorder 0, %v1207
  %v1209 = vsel %vm1208, 0, %v1207
  %v1210 = vsub.s32 32, %v1209
  %v1211 = vshll.u32 %v1202, %v1209
  %v1212 = vshrl.u32 %v1194, %v1210
  %v1213 = vor.u32 %v1211, %v1212
  %v1214 = vsub.s32 4294967266, %v1209
  %v1215 = vadd.s32 %v1214, 127
  %v1216 = vshll.u32 %v1215, 23
  %v1217 = vor.u32 4788187, %v1216
  %v1218 = vand.u32 2147483647, %v1217
  %v1220 = vcvt.s32.f32 %v1213
  %v1221 = vmul.f32 %v1220, %v1218
  %v1222 = vxor.u32 %v1221, 2147483648
  %v1223 = vsel %vm1140, %v1222, %v1221
  %v1224 = vsub.s32 4, %v1200
  %v1225 = vsel %vm1140, %v1224, %v1200
  %v1226 = vsel %vm1139, %v507, %v1223
  %v1227 = vsel %vm1139, 0, %v1225
  %v1228 = vcosq.f32.pop %v1226
  %v1229 = vsinq.f32.pop %v1226
  %vm1230 = vweird.f32 %v507
  %v1231 = vand.u32 %v1227, 3
  %vm1232 = vcmp.lt.s32.totalorder %v1231, 2
  %vm1233 = vcmp.eq.s32.totalorder %v1231, 0
  %v1234 = vxor.u32 %v1229, 2147483648
  %v1235 = vsel %vm1233, %v1228, %v1234
  %vm1236 = vcmp.eq.s32.totalorder %v1231, 2
  %v1237 = vxor.u32 %v1228, 2147483648
  %v1238 = vsel %vm1236, %v1237, %v1229
  %v1239 = vsel %vm1232, %v1235, %v1238
  %v1240 = vsel %vm1230, nan, %v1239
  %v1241 = vand.u32 2147483647, %v508
  %vm1242 = vcmp.le.f32.partialorder %v1241, 0.7853982
  %vm1243 = vcmp.lt.s32.totalorder %v508, 0
  %v1244 = vand.u32 %v508, 2139095040
  %v1245 = vshrl.u32 %v1244, 23
  %v1246 = vsub.s32 %v1245, 127
  %v1247 = vand.u32 2147483647, %v508
  %v1248 = vand.u32 %v1247, 8388607
  %v1249 = vor.u32 %v1248, 8388608
  %v1250 = vsub.s32 0, %v1249
  %v1251 = vadd.s32 %v1246, 1
  %vm1252 = vcmp.gt.s32.totalorder %v1251, 0
  %v1253 = vsel %vm1252, %v1251, 0
  %v1254 = vshrl.u32 %v1253, 5
  %v1255 = vand.u32 %v1253, 31
  %v1256 = vsub.s32 32, %v1255
  %v1257 = vshrl.u32 683565275, %v1256
  %v1258 = vshll.u32 683565275, %v1255
  %v1259 = vshrl.u32 2475754826, %v1256
  %v1260 = vor.u32 %v1258, %v1259
  %v1261 = vshll.u32 2475754826, %v1255
  %v1262 = vshrl.u32 2131351028, %v1256
  %v1263 = vor.u32 %v1261, %v1262
  %v1264 = vshll.u32 2131351028, %v1255
  %v1265 = vshrl.u32 2102212464, %v1256
  %v1266 = vor.u32 %v1264, %v1265
  %v1267 = vshll.u32 2102212464, %v1255
  %v1268 = vshrl.u32 920167782, %v1256
  %v1269 = vor.u32 %v1267, %v1268
  %v1270 = vshll.u32 920167782, %v1255
  %v1271 = vshrl.u32 1326507024, %v1256
  %v1272 = vor.u32 %v1270, %v1271
  %vm1273 = vcmp.lt.s32.totalorder %v1254, 1
  %vm1274 = vcmp.lt.s32.totalorder %v1254, 2
  %vm1275 = vcmp.lt.s32.totalorder %v1254, 3
  %vm1276 = vcmp.lt.s32.totalorder %v1254, 4
  %v1277 = vsel %vm1273, %v1257, %v1260
  %v1278 = vsel %vm1276, %v1266, 2102212464
  %v1279 = vsel %vm1275, %v1263, %v1278
  %v1280 = vsel %vm1274, %v1277, %v1279
  %v1281 = vsel %vm1273, %v1260, %v1263
  %v1282 = vsel %vm1276, %v1269, 920167782
  %v1283 = vsel %vm1275, %v1266, %v1282
  %v1284 = vsel %vm1274, %v1281, %v1283
  %v1285 = vsel %vm1273, %v1263, %v1266
  %v1286 = vsel %vm1276, %v1272, 1326507024
  %v1287 = vsel %vm1275, %v1269, %v1286
  %v1288 = vsel %vm1274, %v1285, %v1287
  %v1289 = vshll.u32 %v1249, 8
  %v1290 = vmul.u32.u64.compose %v1289, %v1288
  %v1291 = vextract.low.u32 %v1290
  %v1292 = vextract.high.u32 %v1290
  %v1293 = vmul.u32.u64.compose %v1289, %v1284
  %v1294 = vextract.low.u32 %v1293
  %v1295 = vextract.high.u32 %v1293
  %v1296 = vmul.u32 %v1289, %v1280
  %v1297 = vadd.s32 %v1292, %v1294
  %vm1298 = vc.u32 %v1292, %v1294
  %v1299 = vadd.s32 %v1295, 1
  %v1300 = vsel %vm1298, %v1299, %v1295
  %v1301 = vadd.s32 %v1296, %v1300
  %v1302 = vadd.s32 %v1301, 536870912
  %v1303 = vshrl.u32 %v1302, 30
  %v1304 = vshll.u32 %v1303, 30
  %v1305 = vsub.s32 %v1301, %v1304
  %vm1306 = vcmp.lt.s32.totalorder %v1305, 0
  %v1307 = vsub.s32 0, %v1305
  %v1308 = vsel %vm1306, %v1307, %v1305
  %v1309 = vclz %v1308
  %v1310 = vsub.s32 %v1309, 2
  %vm1311 = vcmp.gt.s32.totalorder 0, %v1310
  %v1312 = vsel %vm1311, 0, %v1310
  %v1313 = vsub.s32 32, %v1312
  %v1314 = vshll.u32 %v1305, %v1312
  %v1315 = vshrl.u32 %v1297, %v1313
  %v1316 = vor.u32 %v1314, %v1315
  %v1317 = vsub.s32 4294967266, %v1312
  %v1318 = vadd.s32 %v1317, 127
  %v1319 = vshll.u32 %v1318, 23
  %v1320 = vor.u32 4788187, %v1319
  %v1321 = vand.u32 2147483647, %v1320
  %v1323 = vcvt.s32.f32 %v1316
  %v1324 = vmul.f32 %v1323, %v1321
  %v1325 = vxor.u32 %v1324, 2147483648
  %v1326 = vsel %vm1243, %v1325, %v1324
  %v1327 = vsub.s32 4, %v1303
  %v1328 = vsel %vm1243, %v1327, %v1303
  %v1329 = vsel %vm1242, %v508, %v1326
  %v1330 = vsel %vm1242, 0, %v1328
  %v1331 = vcosq.f32.pop %v1329
  %v1332 = vsinq.f32.pop %v1329
  %vm1333 = vweird.f32 %v508
  %v1334 = vand.u32 %v1330, 3
  %vm1335 = vcmp.lt.s32.totalorder %v1334, 2
  %vm1336 = vcmp.eq.s32.totalorder %v1334, 0
  %v1337 = vxor.u32 %v1332, 2147483648
  %v1338 = vsel %vm1336, %v1331, %v1337
  %vm1339 = vcmp.eq.s32.totalorder %v1334, 2
  %v1340 = vxor.u32 %v1331, 2147483648
  %v1341 = vsel %vm1339, %v1340, %v1332
  %v1342 = vsel %vm1335, %v1338, %v1341
  %v1343 = vsel %vm1333, nan, %v1342
  %v1344 = vand.u32 2147483647, %v509
  %vm1345 = vcmp.le.f32.partialorder %v1344, 0.7853982
  %vm1346 = vcmp.lt.s32.totalorder %v509, 0
  %v1347 = vand.u32 %v509, 2139095040
  %v1348 = vshrl.u32 %v1347, 23
  %v1349 = vsub.s32 %v1348, 127
  %v1350 = vand.u32 2147483647, %v509
  %v1351 = vand.u32 %v1350, 8388607
  %v1352 = vor.u32 %v1351, 8388608
  %v1353 = vsub.s32 0, %v1352
  %v1354 = vadd.s32 %v1349, 1
  %vm1355 = vcmp.gt.s32.totalorder %v1354, 0
  %v1356 = vsel %vm1355, %v1354, 0
  %v1357 = vshrl.u32 %v1356, 5
  %v1358 = vand.u32 %v1356, 31
  %v1359 = vsub.s32 32, %v1358
  %v1360 = vshrl.u32 683565275, %v1359
  %v1361 = vshll.u32 683565275, %v1358
  %v1362 = vshrl.u32 2475754826, %v1359
  %v1363 = vor.u32 %v1361, %v1362
  %v1364 = vshll.u32 2475754826, %v1358
  %v1365 = vshrl.u32 2131351028, %v1359
  %v1366 = vor.u32 %v1364, %v1365
  %v1367 = vshll.u32 2131351028, %v1358
  %v1368 = vshrl.u32 2102212464, %v1359
  %v1369 = vor.u32 %v1367, %v1368
  %v1370 = vshll.u32 2102212464, %v1358
  %v1371 = vshrl.u32 920167782, %v1359
  %v1372 = vor.u32 %v1370, %v1371
  %v1373 = vshll.u32 920167782, %v1358
  %v1374 = vshrl.u32 1326507024, %v1359
  %v1375 = vor.u32 %v1373, %v1374
  %vm1376 = vcmp.lt.s32.totalorder %v1357, 1
  %vm1377 = vcmp.lt.s32.totalorder %v1357, 2
  %vm1378 = vcmp.lt.s32.totalorder %v1357, 3
  %vm1379 = vcmp.lt.s32.totalorder %v1357, 4
  %v1380 = vsel %vm1376, %v1360, %v1363
  %v1381 = vsel %vm1379, %v1369, 2102212464
  %v1382 = vsel %vm1378, %v1366, %v1381
  %v1383 = vsel %vm1377, %v1380, %v1382
  %v1384 = vsel %vm1376, %v1363, %v1366
  %v1385 = vsel %vm1379, %v1372, 920167782
  %v1386 = vsel %vm1378, %v1369, %v1385
  %v1387 = vsel %vm1377, %v1384, %v1386
  %v1388 = vsel %vm1376, %v1366, %v1369
  %v1389 = vsel %vm1379, %v1375, 1326507024
  %v1390 = vsel %vm1378, %v1372, %v1389
  %v1391 = vsel %vm1377, %v1388, %v1390
  %v1392 = vshll.u32 %v1352, 8
  %v1393 = vmul.u32.u64.compose %v1392, %v1391
  %v1394 = vextract.low.u32 %v1393
  %v1395 = vextract.high.u32 %v1393
  %v1396 = vmul.u32.u64.compose %v1392, %v1387
  %v1397 = vextract.low.u32 %v1396
  %v1398 = vextract.high.u32 %v1396
  %v1399 = vmul.u32 %v1392, %v1383
  %v1400 = vadd.s32 %v1395, %v1397
  %vm1401 = vc.u32 %v1395, %v1397
  %v1402 = vadd.s32 %v1398, 1
  %v1403 = vsel %vm1401, %v1402, %v1398
  %v1404 = vadd.s32 %v1399, %v1403
  %v1405 = vadd.s32 %v1404, 536870912
  %v1406 = vshrl.u32 %v1405, 30
  %v1407 = vshll.u32 %v1406, 30
  %v1408 = vsub.s32 %v1404, %v1407
  %vm1409 = vcmp.lt.s32.totalorder %v1408, 0
  %v1410 = vsub.s32 0, %v1408
  %v1411 = vsel %vm1409, %v1410, %v1408
  %v1412 = vclz %v1411
  %v1413 = vsub.s32 %v1412, 2
  %vm1414 = vcmp.gt.s32.totalorder 0, %v1413
  %v1415 = vsel %vm1414, 0, %v1413
  %v1416 = vsub.s32 32, %v1415
  %v1417 = vshll.u32 %v1408, %v1415
  %v1418 = vshrl.u32 %v1400, %v1416
  %v1419 = vor.u32 %v1417, %v1418
  %v1420 = vsub.s32 4294967266, %v1415
  %v1421 = vadd.s32 %v1420, 127
  %v1422 = vshll.u32 %v1421, 23
  %v1423 = vor.u32 4788187, %v1422
  %v1424 = vand.u32 2147483647, %v1423
  %v1426 = vcvt.s32.f32 %v1419
  %v1427 = vmul.f32 %v1426, %v1424
  %v1428 = vxor.u32 %v1427, 2147483648
  %v1429 = vsel %vm1346, %v1428, %v1427
  %v1430 = vsub.s32 4, %v1406
  %v1431 = vsel %vm1346, %v1430, %v1406
  %v1432 = vsel %vm1345, %v509, %v1429
  %v1433 = vsel %vm1345, 0, %v1431
  %v1434 = vcosq.f32.pop %v1432
  %v1435 = vsinq.f32.pop %v1432
  %vm1436 = vweird.f32 %v509
  %v1437 = vand.u32 %v1433, 3
  %vm1438 = vcmp.lt.s32.totalorder %v1437, 2
  %vm1439 = vcmp.eq.s32.totalorder %v1437, 0
  %v1440 = vxor.u32 %v1435, 2147483648
  %v1441 = vsel %vm1439, %v1434, %v1440
  %vm1442 = vcmp.eq.s32.totalorder %v1437, 2
  %v1443 = vxor.u32 %v1434, 2147483648
  %v1444 = vsel %vm1442, %v1443, %v1435
  %v1445 = vsel %vm1438, %v1441, %v1444
  %v1446 = vsel %vm1436, nan, %v1445
  %v1447 = vand.u32 2147483647, %v510
  %vm1448 = vcmp.le.f32.partialorder %v1447, 0.7853982
  %vm1449 = vcmp.lt.s32.totalorder %v510, 0
  %v1450 = vand.u32 %v510, 2139095040
  %v1451 = vshrl.u32 %v1450, 23
  %v1452 = vsub.s32 %v1451, 127
  %v1453 = vand.u32 2147483647, %v510
  %v1454 = vand.u32 %v1453, 8388607
  %v1455 = vor.u32 %v1454, 8388608
  %v1456 = vsub.s32 0, %v1455
  %v1457 = vadd.s32 %v1452, 1
  %vm1458 = vcmp.gt.s32.totalorder %v1457, 0
  %v1459 = vsel %vm1458, %v1457, 0
  %v1460 = vshrl.u32 %v1459, 5
  %v1461 = vand.u32 %v1459, 31
  %v1462 = vsub.s32 32, %v1461
  %v1463 = vshrl.u32 683565275, %v1462
  %v1464 = vshll.u32 683565275, %v1461
  %v1465 = vshrl.u32 2475754826, %v1462
  %v1466 = vor.u32 %v1464, %v1465
  %v1467 = vshll.u32 2475754826, %v1461
  %v1468 = vshrl.u32 2131351028, %v1462
  %v1469 = vor.u32 %v1467, %v1468
  %v1470 = vshll.u32 2131351028, %v1461
  %v1471 = vshrl.u32 2102212464, %v1462
  %v1472 = vor.u32 %v1470, %v1471
  %v1473 = vshll.u32 2102212464, %v1461
  %v1474 = vshrl.u32 920167782, %v1462
  %v1475 = vor.u32 %v1473, %v1474
  %v1476 = vshll.u32 920167782, %v1461
  %v1477 = vshrl.u32 1326507024, %v1462
  %v1478 = vor.u32 %v1476, %v1477
  %vm1479 = vcmp.lt.s32.totalorder %v1460, 1
  %vm1480 = vcmp.lt.s32.totalorder %v1460, 2
  %vm1481 = vcmp.lt.s32.totalorder %v1460, 3
  %vm1482 = vcmp.lt.s32.totalorder %v1460, 4
  %v1483 = vsel %vm1479, %v1463, %v1466
  %v1484 = vsel %vm1482, %v1472, 2102212464
  %v1485 = vsel %vm1481, %v1469, %v1484
  %v1486 = vsel %vm1480, %v1483, %v1485
  %v1487 = vsel %vm1479, %v1466, %v1469
  %v1488 = vsel %vm1482, %v1475, 920167782
  %v1489 = vsel %vm1481, %v1472, %v1488
  %v1490 = vsel %vm1480, %v1487, %v1489
  %v1491 = vsel %vm1479, %v1469, %v1472
  %v1492 = vsel %vm1482, %v1478, 1326507024
  %v1493 = vsel %vm1481, %v1475, %v1492
  %v1494 = vsel %vm1480, %v1491, %v1493
  %v1495 = vshll.u32 %v1455, 8
  %v1496 = vmul.u32.u64.compose %v1495, %v1494
  %v1497 = vextract.low.u32 %v1496
  %v1498 = vextract.high.u32 %v1496
  %v1499 = vmul.u32.u64.compose %v1495, %v1490
  %v1500 = vextract.low.u32 %v1499
  %v1501 = vextract.high.u32 %v1499
  %v1502 = vmul.u32 %v1495, %v1486
  %v1503 = vadd.s32 %v1498, %v1500
  %vm1504 = vc.u32 %v1498, %v1500
  %v1505 = vadd.s32 %v1501, 1
  %v1506 = vsel %vm1504, %v1505, %v1501
  %v1507 = vadd.s32 %v1502, %v1506
  %v1508 = vadd.s32 %v1507, 536870912
  %v1509 = vshrl.u32 %v1508, 30
  %v1510 = vshll.u32 %v1509, 30
  %v1511 = vsub.s32 %v1507, %v1510
  %vm1512 = vcmp.lt.s32.totalorder %v1511, 0
  %v1513 = vsub.s32 0, %v1511
  %v1514 = vsel %vm1512, %v1513, %v1511
  %v1515 = vclz %v1514
  %v1516 = vsub.s32 %v1515, 2
  %vm1517 = vcmp.gt.s32.totalorder 0, %v1516
  %v1518 = vsel %vm1517, 0, %v1516
  %v1519 = vsub.s32 32, %v1518
  %v1520 = vshll.u32 %v1511, %v1518
  %v1521 = vshrl.u32 %v1503, %v1519
  %v1522 = vor.u32 %v1520, %v1521
  %v1523 = vsub.s32 4294967266, %v1518
  %v1524 = vadd.s32 %v1523, 127
  %v1525 = vshll.u32 %v1524, 23
  %v1526 = vor.u32 4788187, %v1525
  %v1527 = vand.u32 2147483647, %v1526
  %v1529 = vcvt.s32.f32 %v1522
  %v1530 = vmul.f32 %v1529, %v1527
  %v1531 = vxor.u32 %v1530, 2147483648
  %v1532 = vsel %vm1449, %v1531, %v1530
  %v1533 = vsub.s32 4, %v1509
  %v1534 = vsel %vm1449, %v1533, %v1509
  %v1535 = vsel %vm1448, %v510, %v1532
  %v1536 = vsel %vm1448, 0, %v1534
  %v1537 = vcosq.f32.pop %v1535
  %v1538 = vsinq.f32.pop %v1535
  %vm1539 = vweird.f32 %v510
  %v1540 = vand.u32 %v1536, 3
  %vm1541 = vcmp.lt.s32.totalorder %v1540, 2
  %vm1542 = vcmp.eq.s32.totalorder %v1540, 0
  %v1543 = vxor.u32 %v1538, 2147483648
  %v1544 = vsel %vm1542, %v1537, %v1543
  %vm1545 = vcmp.eq.s32.totalorder %v1540, 2
  %v1546 = vxor.u32 %v1537, 2147483648
  %v1547 = vsel %vm1545, %v1546, %v1538
  %v1548 = vsel %vm1541, %v1544, %v1547
  %v1549 = vsel %vm1539, nan, %v1548
  %v1550 = vand.u32 2147483647, %v511
  %vm1551 = vcmp.le.f32.partialorder %v1550, 0.7853982
  %vm1552 = vcmp.lt.s32.totalorder %v511, 0
  %v1553 = vand.u32 %v511, 2139095040
  %v1554 = vshrl.u32 %v1553, 23
  %v1555 = vsub.s32 %v1554, 127
  %v1556 = vand.u32 2147483647, %v511
  %v1557 = vand.u32 %v1556, 8388607
  %v1558 = vor.u32 %v1557, 8388608
  %v1559 = vsub.s32 0, %v1558
  %v1560 = vadd.s32 %v1555, 1
  %vm1561 = vcmp.gt.s32.totalorder %v1560, 0
  %v1562 = vsel %vm1561, %v1560, 0
  %v1563 = vshrl.u32 %v1562, 5
  %v1564 = vand.u32 %v1562, 31
  %v1565 = vsub.s32 32, %v1564
  %v1566 = vshrl.u32 683565275, %v1565
  %v1567 = vshll.u32 683565275, %v1564
  %v1568 = vshrl.u32 2475754826, %v1565
  %v1569 = vor.u32 %v1567, %v1568
  %v1570 = vshll.u32 2475754826, %v1564
  %v1571 = vshrl.u32 2131351028, %v1565
  %v1572 = vor.u32 %v1570, %v1571
  %v1573 = vshll.u32 2131351028, %v1564
  %v1574 = vshrl.u32 2102212464, %v1565
  %v1575 = vor.u32 %v1573, %v1574
  %v1576 = vshll.u32 2102212464, %v1564
  %v1577 = vshrl.u32 920167782, %v1565
  %v1578 = vor.u32 %v1576, %v1577
  %v1579 = vshll.u32 920167782, %v1564
  %v1580 = vshrl.u32 1326507024, %v1565
  %v1581 = vor.u32 %v1579, %v1580
  %vm1582 = vcmp.lt.s32.totalorder %v1563, 1
  %vm1583 = vcmp.lt.s32.totalorder %v1563, 2
  %vm1584 = vcmp.lt.s32.totalorder %v1563, 3
  %vm1585 = vcmp.lt.s32.totalorder %v1563, 4
  %v1586 = vsel %vm1582, %v1566, %v1569
  %v1587 = vsel %vm1585, %v1575, 2102212464
  %v1588 = vsel %vm1584, %v1572, %v1587
  %v1589 = vsel %vm1583, %v1586, %v1588
  %v1590 = vsel %vm1582, %v1569, %v1572
  %v1591 = vsel %vm1585, %v1578, 920167782
  %v1592 = vsel %vm1584, %v1575, %v1591
  %v1593 = vsel %vm1583, %v1590, %v1592
  %v1594 = vsel %vm1582, %v1572, %v1575
  %v1595 = vsel %vm1585, %v1581, 1326507024
  %v1596 = vsel %vm1584, %v1578, %v1595
  %v1597 = vsel %vm1583, %v1594, %v1596
  %v1598 = vshll.u32 %v1558, 8
  %v1599 = vmul.u32.u64.compose %v1598, %v1597
  %v1600 = vextract.low.u32 %v1599
  %v1601 = vextract.high.u32 %v1599
  %v1602 = vmul.u32.u64.compose %v1598, %v1593
  %v1603 = vextract.low.u32 %v1602
  %v1604 = vextract.high.u32 %v1602
  %v1605 = vmul.u32 %v1598, %v1589
  %v1606 = vadd.s32 %v1601, %v1603
  %vm1607 = vc.u32 %v1601, %v1603
  %v1608 = vadd.s32 %v1604, 1
  %v1609 = vsel %vm1607, %v1608, %v1604
  %v1610 = vadd.s32 %v1605, %v1609
  %v1611 = vadd.s32 %v1610, 536870912
  %v1612 = vshrl.u32 %v1611, 30
  %v1613 = vshll.u32 %v1612, 30
  %v1614 = vsub.s32 %v1610, %v1613
  %vm1615 = vcmp.lt.s32.totalorder %v1614, 0
  %v1616 = vsub.s32 0, %v1614
  %v1617 = vsel %vm1615, %v1616, %v1614
  %v1618 = vclz %v1617
  %v1619 = vsub.s32 %v1618, 2
  %vm1620 = vcmp.gt.s32.totalorder 0, %v1619
  %v1621 = vsel %vm1620, 0, %v1619
  %v1622 = vsub.s32 32, %v1621
  %v1623 = vshll.u32 %v1614, %v1621
  %v1624 = vshrl.u32 %v1606, %v1622
  %v1625 = vor.u32 %v1623, %v1624
  %v1626 = vsub.s32 4294967266, %v1621
  %v1627 = vadd.s32 %v1626, 127
  %v1628 = vshll.u32 %v1627, 23
  %v1629 = vor.u32 4788187, %v1628
  %v1630 = vand.u32 2147483647, %v1629
  %v1632 = vcvt.s32.f32 %v1625
  %v1633 = vmul.f32 %v1632, %v1630
  %v1634 = vxor.u32 %v1633, 2147483648
  %v1635 = vsel %vm1552, %v1634, %v1633
  %v1636 = vsub.s32 4, %v1612
  %v1637 = vsel %vm1552, %v1636, %v1612
  %v1638 = vsel %vm1551, %v511, %v1635
  %v1639 = vsel %vm1551, 0, %v1637
  %v1640 = vcosq.f32.pop %v1638
  %v1641 = vsinq.f32.pop %v1638
  %vm1642 = vweird.f32 %v511
  %v1643 = vand.u32 %v1639, 3
  %vm1644 = vcmp.lt.s32.totalorder %v1643, 2
  %vm1645 = vcmp.eq.s32.totalorder %v1643, 0
  %v1646 = vxor.u32 %v1641, 2147483648
  %v1647 = vsel %vm1645, %v1640, %v1646
  %vm1648 = vcmp.eq.s32.totalorder %v1643, 2
  %v1649 = vxor.u32 %v1640, 2147483648
  %v1650 = vsel %vm1648, %v1649, %v1641
  %v1651 = vsel %vm1644, %v1647, %v1650
  %v1652 = vsel %vm1642, nan, %v1651
  %v1653 = vand.u32 2147483647, %v512
  %vm1654 = vcmp.le.f32.partialorder %v1653, 0.7853982
  %vm1655 = vcmp.lt.s32.totalorder %v512, 0
  %v1656 = vand.u32 %v512, 2139095040
  %v1657 = vshrl.u32 %v1656, 23
  %v1658 = vsub.s32 %v1657, 127
  %v1659 = vand.u32 2147483647, %v512
  %v1660 = vand.u32 %v1659, 8388607
  %v1661 = vor.u32 %v1660, 8388608
  %v1662 = vsub.s32 0, %v1661
  %v1663 = vadd.s32 %v1658, 1
  %vm1664 = vcmp.gt.s32.totalorder %v1663, 0
  %v1665 = vsel %vm1664, %v1663, 0
  %v1666 = vshrl.u32 %v1665, 5
  %v1667 = vand.u32 %v1665, 31
  %v1668 = vsub.s32 32, %v1667
  %v1669 = vshrl.u32 683565275, %v1668
  %v1670 = vshll.u32 683565275, %v1667
  %v1671 = vshrl.u32 2475754826, %v1668
  %v1672 = vor.u32 %v1670, %v1671
  %v1673 = vshll.u32 2475754826, %v1667
  %v1674 = vshrl.u32 2131351028, %v1668
  %v1675 = vor.u32 %v1673, %v1674
  %v1676 = vshll.u32 2131351028, %v1667
  %v1677 = vshrl.u32 2102212464, %v1668
  %v1678 = vor.u32 %v1676, %v1677
  %v1679 = vshll.u32 2102212464, %v1667
  %v1680 = vshrl.u32 920167782, %v1668
  %v1681 = vor.u32 %v1679, %v1680
  %v1682 = vshll.u32 920167782, %v1667
  %v1683 = vshrl.u32 1326507024, %v1668
  %v1684 = vor.u32 %v1682, %v1683
  %vm1685 = vcmp.lt.s32.totalorder %v1666, 1
  %vm1686 = vcmp.lt.s32.totalorder %v1666, 2
  %vm1687 = vcmp.lt.s32.totalorder %v1666, 3
  %vm1688 = vcmp.lt.s32.totalorder %v1666, 4
  %v1689 = vsel %vm1685, %v1669, %v1672
  %v1690 = vsel %vm1688, %v1678, 2102212464
  %v1691 = vsel %vm1687, %v1675, %v1690
  %v1692 = vsel %vm1686, %v1689, %v1691
  %v1693 = vsel %vm1685, %v1672, %v1675
  %v1694 = vsel %vm1688, %v1681, 920167782
  %v1695 = vsel %vm1687, %v1678, %v1694
  %v1696 = vsel %vm1686, %v1693, %v1695
  %v1697 = vsel %vm1685, %v1675, %v1678
  %v1698 = vsel %vm1688, %v1684, 1326507024
  %v1699 = vsel %vm1687, %v1681, %v1698
  %v1700 = vsel %vm1686, %v1697, %v1699
  %v1701 = vshll.u32 %v1661, 8
  %v1702 = vmul.u32.u64.compose %v1701, %v1700
  %v1703 = vextract.low.u32 %v1702
  %v1704 = vextract.high.u32 %v1702
  %v1705 = vmul.u32.u64.compose %v1701, %v1696
  %v1706 = vextract.low.u32 %v1705
  %v1707 = vextract.high.u32 %v1705
  %v1708 = vmul.u32 %v1701, %v1692
  %v1709 = vadd.s32 %v1704, %v1706
  %vm1710 = vc.u32 %v1704, %v1706
  %v1711 = vadd.s32 %v1707, 1
  %v1712 = vsel %vm1710, %v1711, %v1707
  %v1713 = vadd.s32 %v1708, %v1712
  %v1714 = vadd.s32 %v1713, 536870912
  %v1715 = vshrl.u32 %v1714, 30
  %v1716 = vshll.u32 %v1715, 30
  %v1717 = vsub.s32 %v1713, %v1716
  %vm1718 = vcmp.lt.s32.totalorder %v1717, 0
  %v1719 = vsub.s32 0, %v1717
  %v1720 = vsel %vm1718, %v1719, %v1717
  %v1721 = vclz %v1720
  %v1722 = vsub.s32 %v1721, 2
  %vm1723 = vcmp.gt.s32.totalorder 0, %v1722
  %v1724 = vsel %vm1723, 0, %v1722
  %v1725 = vsub.s32 32, %v1724
  %v1726 = vshll.u32 %v1717, %v1724
  %v1727 = vshrl.u32 %v1709, %v1725
  %v1728 = vor.u32 %v1726, %v1727
  %v1729 = vsub.s32 4294967266, %v1724
  %v1730 = vadd.s32 %v1729, 127
  %v1731 = vshll.u32 %v1730, 23
  %v1732 = vor.u32 4788187, %v1731
  %v1733 = vand.u32 2147483647, %v1732
  %v1735 = vcvt.s32.f32 %v1728
  %v1736 = vmul.f32 %v1735, %v1733
  %v1737 = vxor.u32 %v1736, 2147483648
  %v1738 = vsel %vm1655, %v1737, %v1736
  %v1739 = vsub.s32 4, %v1715
  %v1740 = vsel %vm1655, %v1739, %v1715
  %v1741 = vsel %vm1654, %v512, %v1738
  %v1742 = vsel %vm1654, 0, %v1740
  %v1743 = vcosq.f32.pop %v1741
  %v1744 = vsinq.f32.pop %v1741
  %vm1745 = vweird.f32 %v512
  %v1746 = vand.u32 %v1742, 3
  %vm1747 = vcmp.lt.s32.totalorder %v1746, 2
  %vm1748 = vcmp.eq.s32.totalorder %v1746, 0
  %v1749 = vxor.u32 %v1744, 2147483648
  %v1750 = vsel %vm1748, %v1743, %v1749
  %vm1751 = vcmp.eq.s32.totalorder %v1746, 2
  %v1752 = vxor.u32 %v1743, 2147483648
  %v1753 = vsel %vm1751, %v1752, %v1744
  %v1754 = vsel %vm1747, %v1750, %v1753
  %v1755 = vsel %vm1745, nan, %v1754
  %v1756 = vand.u32 2147483647, %v513
  %vm1757 = vcmp.le.f32.partialorder %v1756, 0.7853982
  %vm1758 = vcmp.lt.s32.totalorder %v513, 0
  %v1759 = vand.u32 %v513, 2139095040
  %v1760 = vshrl.u32 %v1759, 23
  %v1761 = vsub.s32 %v1760, 127
  %v1762 = vand.u32 2147483647, %v513
  %v1763 = vand.u32 %v1762, 8388607
  %v1764 = vor.u32 %v1763, 8388608
  %v1765 = vsub.s32 0, %v1764
  %v1766 = vadd.s32 %v1761, 1
  %vm1767 = vcmp.gt.s32.totalorder %v1766, 0
  %v1768 = vsel %vm1767, %v1766, 0
  %v1769 = vshrl.u32 %v1768, 5
  %v1770 = vand.u32 %v1768, 31
  %v1771 = vsub.s32 32, %v1770
  %v1772 = vshrl.u32 683565275, %v1771
  %v1773 = vshll.u32 683565275, %v1770
  %v1774 = vshrl.u32 2475754826, %v1771
  %v1775 = vor.u32 %v1773, %v1774
  %v1776 = vshll.u32 2475754826, %v1770
  %v1777 = vshrl.u32 2131351028, %v1771
  %v1778 = vor.u32 %v1776, %v1777
  %v1779 = vshll.u32 2131351028, %v1770
  %v1780 = vshrl.u32 2102212464, %v1771
  %v1781 = vor.u32 %v1779, %v1780
  %v1782 = vshll.u32 2102212464, %v1770
  %v1783 = vshrl.u32 920167782, %v1771
  %v1784 = vor.u32 %v1782, %v1783
  %v1785 = vshll.u32 920167782, %v1770
  %v1786 = vshrl.u32 1326507024, %v1771
  %v1787 = vor.u32 %v1785, %v1786
  %vm1788 = vcmp.lt.s32.totalorder %v1769, 1
  %vm1789 = vcmp.lt.s32.totalorder %v1769, 2
  %vm1790 = vcmp.lt.s32.totalorder %v1769, 3
  %vm1791 = vcmp.lt.s32.totalorder %v1769, 4
  %v1792 = vsel %vm1788, %v1772, %v1775
  %v1793 = vsel %vm1791, %v1781, 2102212464
  %v1794 = vsel %vm1790, %v1778, %v1793
  %v1795 = vsel %vm1789, %v1792, %v1794
  %v1796 = vsel %vm1788, %v1775, %v1778
  %v1797 = vsel %vm1791, %v1784, 920167782
  %v1798 = vsel %vm1790, %v1781, %v1797
  %v1799 = vsel %vm1789, %v1796, %v1798
  %v1800 = vsel %vm1788, %v1778, %v1781
  %v1801 = vsel %vm1791, %v1787, 1326507024
  %v1802 = vsel %vm1790, %v1784, %v1801
  %v1803 = vsel %vm1789, %v1800, %v1802
  %v1804 = vshll.u32 %v1764, 8
  %v1805 = vmul.u32.u64.compose %v1804, %v1803
  %v1806 = vextract.low.u32 %v1805
  %v1807 = vextract.high.u32 %v1805
  %v1808 = vmul.u32.u64.compose %v1804, %v1799
  %v1809 = vextract.low.u32 %v1808
  %v1810 = vextract.high.u32 %v1808
  %v1811 = vmul.u32 %v1804, %v1795
  %v1812 = vadd.s32 %v1807, %v1809
  %vm1813 = vc.u32 %v1807, %v1809
  %v1814 = vadd.s32 %v1810, 1
  %v1815 = vsel %vm1813, %v1814, %v1810
  %v1816 = vadd.s32 %v1811, %v1815
  %v1817 = vadd.s32 %v1816, 536870912
  %v1818 = vshrl.u32 %v1817, 30
  %v1819 = vshll.u32 %v1818, 30
  %v1820 = vsub.s32 %v1816, %v1819
  %vm1821 = vcmp.lt.s32.totalorder %v1820, 0
  %v1822 = vsub.s32 0, %v1820
  %v1823 = vsel %vm1821, %v1822, %v1820
  %v1824 = vclz %v1823
  %v1825 = vsub.s32 %v1824, 2
  %vm1826 = vcmp.gt.s32.totalorder 0, %v1825
  %v1827 = vsel %vm1826, 0, %v1825
  %v1828 = vsub.s32 32, %v1827
  %v1829 = vshll.u32 %v1820, %v1827
  %v1830 = vshrl.u32 %v1812, %v1828
  %v1831 = vor.u32 %v1829, %v1830
  %v1832 = vsub.s32 4294967266, %v1827
  %v1833 = vadd.s32 %v1832, 127
  %v1834 = vshll.u32 %v1833, 23
  %v1835 = vor.u32 4788187, %v1834
  %v1836 = vand.u32 2147483647, %v1835
  %v1838 = vcvt.s32.f32 %v1831
  %v1839 = vmul.f32 %v1838, %v1836
  %v1840 = vxor.u32 %v1839, 2147483648
  %v1841 = vsel %vm1758, %v1840, %v1839
  %v1842 = vsub.s32 4, %v1818
  %v1843 = vsel %vm1758, %v1842, %v1818
  %v1844 = vsel %vm1757, %v513, %v1841
  %v1845 = vsel %vm1757, 0, %v1843
  %v1846 = vcosq.f32.pop %v1844
  %v1847 = vsinq.f32.pop %v1844
  %vm1848 = vweird.f32 %v513
  %v1849 = vand.u32 %v1845, 3
  %vm1850 = vcmp.lt.s32.totalorder %v1849, 2
  %vm1851 = vcmp.eq.s32.totalorder %v1849, 0
  %v1852 = vxor.u32 %v1847, 2147483648
  %v1853 = vsel %vm1851, %v1846, %v1852
  %vm1854 = vcmp.eq.s32.totalorder %v1849, 2
  %v1855 = vxor.u32 %v1846, 2147483648
  %v1856 = vsel %vm1854, %v1855, %v1847
  %v1857 = vsel %vm1850, %v1853, %v1856
  %v1858 = vsel %vm1848, nan, %v1857
  %v1859 = vand.u32 2147483647, %v514
  %vm1860 = vcmp.le.f32.partialorder %v1859, 0.7853982
  %vm1861 = vcmp.lt.s32.totalorder %v514, 0
  %v1862 = vand.u32 %v514, 2139095040
  %v1863 = vshrl.u32 %v1862, 23
  %v1864 = vsub.s32 %v1863, 127
  %v1865 = vand.u32 2147483647, %v514
  %v1866 = vand.u32 %v1865, 8388607
  %v1867 = vor.u32 %v1866, 8388608
  %v1868 = vsub.s32 0, %v1867
  %v1869 = vadd.s32 %v1864, 1
  %vm1870 = vcmp.gt.s32.totalorder %v1869, 0
  %v1871 = vsel %vm1870, %v1869, 0
  %v1872 = vshrl.u32 %v1871, 5
  %v1873 = vand.u32 %v1871, 31
  %v1874 = vsub.s32 32, %v1873
  %v1875 = vshrl.u32 683565275, %v1874
  %v1876 = vshll.u32 683565275, %v1873
  %v1877 = vshrl.u32 2475754826, %v1874
  %v1878 = vor.u32 %v1876, %v1877
  %v1879 = vshll.u32 2475754826, %v1873
  %v1880 = vshrl.u32 2131351028, %v1874
  %v1881 = vor.u32 %v1879, %v1880
  %v1882 = vshll.u32 2131351028, %v1873
  %v1883 = vshrl.u32 2102212464, %v1874
  %v1884 = vor.u32 %v1882, %v1883
  %v1885 = vshll.u32 2102212464, %v1873
  %v1886 = vshrl.u32 920167782, %v1874
  %v1887 = vor.u32 %v1885, %v1886
  %v1888 = vshll.u32 920167782, %v1873
  %v1889 = vshrl.u32 1326507024, %v1874
  %v1890 = vor.u32 %v1888, %v1889
  %vm1891 = vcmp.lt.s32.totalorder %v1872, 1
  %vm1892 = vcmp.lt.s32.totalorder %v1872, 2
  %vm1893 = vcmp.lt.s32.totalorder %v1872, 3
  %vm1894 = vcmp.lt.s32.totalorder %v1872, 4
  %v1895 = vsel %vm1891, %v1875, %v1878
  %v1896 = vsel %vm1894, %v1884, 2102212464
  %v1897 = vsel %vm1893, %v1881, %v1896
  %v1898 = vsel %vm1892, %v1895, %v1897
  %v1899 = vsel %vm1891, %v1878, %v1881
  %v1900 = vsel %vm1894, %v1887, 920167782
  %v1901 = vsel %vm1893, %v1884, %v1900
  %v1902 = vsel %vm1892, %v1899, %v1901
  %v1903 = vsel %vm1891, %v1881, %v1884
  %v1904 = vsel %vm1894, %v1890, 1326507024
  %v1905 = vsel %vm1893, %v1887, %v1904
  %v1906 = vsel %vm1892, %v1903, %v1905
  %v1907 = vshll.u32 %v1867, 8
  %v1908 = vmul.u32.u64.compose %v1907, %v1906
  %v1909 = vextract.low.u32 %v1908
  %v1910 = vextract.high.u32 %v1908
  %v1911 = vmul.u32.u64.compose %v1907, %v1902
  %v1912 = vextract.low.u32 %v1911
  %v1913 = vextract.high.u32 %v1911
  %v1914 = vmul.u32 %v1907, %v1898
  %v1915 = vadd.s32 %v1910, %v1912
  %vm1916 = vc.u32 %v1910, %v1912
  %v1917 = vadd.s32 %v1913, 1
  %v1918 = vsel %vm1916, %v1917, %v1913
  %v1919 = vadd.s32 %v1914, %v1918
  %v1920 = vadd.s32 %v1919, 536870912
  %v1921 = vshrl.u32 %v1920, 30
  %v1922 = vshll.u32 %v1921, 30
  %v1923 = vsub.s32 %v1919, %v1922
  %vm1924 = vcmp.lt.s32.totalorder %v1923, 0
  %v1925 = vsub.s32 0, %v1923
  %v1926 = vsel %vm1924, %v1925, %v1923
  %v1927 = vclz %v1926
  %v1928 = vsub.s32 %v1927, 2
  %vm1929 = vcmp.gt.s32.totalorder 0, %v1928
  %v1930 = vsel %vm1929, 0, %v1928
  %v1931 = vsub.s32 32, %v1930
  %v1932 = vshll.u32 %v1923, %v1930
  %v1933 = vshrl.u32 %v1915, %v1931
  %v1934 = vor.u32 %v1932, %v1933
  %v1935 = vsub.s32 4294967266, %v1930
  %v1936 = vadd.s32 %v1935, 127
  %v1937 = vshll.u32 %v1936, 23
  %v1938 = vor.u32 4788187, %v1937
  %v1939 = vand.u32 2147483647, %v1938
  %v1941 = vcvt.s32.f32 %v1934
  %v1942 = vmul.f32 %v1941, %v1939
  %v1943 = vxor.u32 %v1942, 2147483648
  %v1944 = vsel %vm1861, %v1943, %v1942
  %v1945 = vsub.s32 4, %v1921
  %v1946 = vsel %vm1861, %v1945, %v1921
  %v1947 = vsel %vm1860, %v514, %v1944
  %v1948 = vsel %vm1860, 0, %v1946
  %v1949 = vcosq.f32.pop %v1947
  %v1950 = vsinq.f32.pop %v1947
  %vm1951 = vweird.f32 %v514
  %v1952 = vand.u32 %v1948, 3
  %vm1953 = vcmp.lt.s32.totalorder %v1952, 2
  %vm1954 = vcmp.eq.s32.totalorder %v1952, 0
  %v1955 = vxor.u32 %v1950, 2147483648
  %v1956 = vsel %vm1954, %v1949, %v1955
  %vm1957 = vcmp.eq.s32.totalorder %v1952, 2
  %v1958 = vxor.u32 %v1949, 2147483648
  %v1959 = vsel %vm1957, %v1958, %v1950
  %v1960 = vsel %vm1953, %v1956, %v1959
  %v1961 = vsel %vm1951, nan, %v1960
  %v1962 = vand.u32 2147483647, %v515
  %vm1963 = vcmp.le.f32.partialorder %v1962, 0.7853982
  %vm1964 = vcmp.lt.s32.totalorder %v515, 0
  %v1965 = vand.u32 %v515, 2139095040
  %v1966 = vshrl.u32 %v1965, 23
  %v1967 = vsub.s32 %v1966, 127
  %v1968 = vand.u32 2147483647, %v515
  %v1969 = vand.u32 %v1968, 8388607
  %v1970 = vor.u32 %v1969, 8388608
  %v1971 = vsub.s32 0, %v1970
  %v1972 = vadd.s32 %v1967, 1
  %vm1973 = vcmp.gt.s32.totalorder %v1972, 0
  %v1974 = vsel %vm1973, %v1972, 0
  %v1975 = vshrl.u32 %v1974, 5
  %v1976 = vand.u32 %v1974, 31
  %v1977 = vsub.s32 32, %v1976
  %v1978 = vshrl.u32 683565275, %v1977
  %v1979 = vshll.u32 683565275, %v1976
  %v1980 = vshrl.u32 2475754826, %v1977
  %v1981 = vor.u32 %v1979, %v1980
  %v1982 = vshll.u32 2475754826, %v1976
  %v1983 = vshrl.u32 2131351028, %v1977
  %v1984 = vor.u32 %v1982, %v1983
  %v1985 = vshll.u32 2131351028, %v1976
  %v1986 = vshrl.u32 2102212464, %v1977
  %v1987 = vor.u32 %v1985, %v1986
  %v1988 = vshll.u32 2102212464, %v1976
  %v1989 = vshrl.u32 920167782, %v1977
  %v1990 = vor.u32 %v1988, %v1989
  %v1991 = vshll.u32 920167782, %v1976
  %v1992 = vshrl.u32 1326507024, %v1977
  %v1993 = vor.u32 %v1991, %v1992
  %vm1994 = vcmp.lt.s32.totalorder %v1975, 1
  %vm1995 = vcmp.lt.s32.totalorder %v1975, 2
  %vm1996 = vcmp.lt.s32.totalorder %v1975, 3
  %vm1997 = vcmp.lt.s32.totalorder %v1975, 4
  %v1998 = vsel %vm1994, %v1978, %v1981
  %v1999 = vsel %vm1997, %v1987, 2102212464
  %v2000 = vsel %vm1996, %v1984, %v1999
  %v2001 = vsel %vm1995, %v1998, %v2000
  %v2002 = vsel %vm1994, %v1981, %v1984
  %v2003 = vsel %vm1997, %v1990, 920167782
  %v2004 = vsel %vm1996, %v1987, %v2003
  %v2005 = vsel %vm1995, %v2002, %v2004
  %v2006 = vsel %vm1994, %v1984, %v1987
  %v2007 = vsel %vm1997, %v1993, 1326507024
  %v2008 = vsel %vm1996, %v1990, %v2007
  %v2009 = vsel %vm1995, %v2006, %v2008
  %v2010 = vshll.u32 %v1970, 8
  %v2011 = vmul.u32.u64.compose %v2010, %v2009
  %v2012 = vextract.low.u32 %v2011
  %v2013 = vextract.high.u32 %v2011
  %v2014 = vmul.u32.u64.compose %v2010, %v2005
  %v2015 = vextract.low.u32 %v2014
  %v2016 = vextract.high.u32 %v2014
  %v2017 = vmul.u32 %v2010, %v2001
  %v2018 = vadd.s32 %v2013, %v2015
  %vm2019 = vc.u32 %v2013, %v2015
  %v2020 = vadd.s32 %v2016, 1
  %v2021 = vsel %vm2019, %v2020, %v2016
  %v2022 = vadd.s32 %v2017, %v2021
  %v2023 = vadd.s32 %v2022, 536870912
  %v2024 = vshrl.u32 %v2023, 30
  %v2025 = vshll.u32 %v2024, 30
  %v2026 = vsub.s32 %v2022, %v2025
  %vm2027 = vcmp.lt.s32.totalorder %v2026, 0
  %v2028 = vsub.s32 0, %v2026
  %v2029 = vsel %vm2027, %v2028, %v2026
  %v2030 = vclz %v2029
  %v2031 = vsub.s32 %v2030, 2
  %vm2032 = vcmp.gt.s32.totalorder 0, %v2031
  %v2033 = vsel %vm2032, 0, %v2031
  %v2034 = vsub.s32 32, %v2033
  %v2035 = vshll.u32 %v2026, %v2033
  %v2036 = vshrl.u32 %v2018, %v2034
  %v2037 = vor.u32 %v2035, %v2036
  %v2038 = vsub.s32 4294967266, %v2033
  %v2039 = vadd.s32 %v2038, 127
  %v2040 = vshll.u32 %v2039, 23
  %v2041 = vor.u32 4788187, %v2040
  %v2042 = vand.u32 2147483647, %v2041
  %v2044 = vcvt.s32.f32 %v2037
  %v2045 = vmul.f32 %v2044, %v2042
  %v2046 = vxor.u32 %v2045, 2147483648
  %v2047 = vsel %vm1964, %v2046, %v2045
  %v2048 = vsub.s32 4, %v2024
  %v2049 = vsel %vm1964, %v2048, %v2024
  %v2050 = vsel %vm1963, %v515, %v2047
  %v2051 = vsel %vm1963, 0, %v2049
  %v2052 = vcosq.f32.pop %v2050
  %v2053 = vsinq.f32.pop %v2050
  %vm2054 = vweird.f32 %v515
  %v2055 = vand.u32 %v2051, 3
  %vm2056 = vcmp.lt.s32.totalorder %v2055, 2
  %vm2057 = vcmp.eq.s32.totalorder %v2055, 0
  %v2058 = vxor.u32 %v2053, 2147483648
  %v2059 = vsel %vm2057, %v2052, %v2058
  %vm2060 = vcmp.eq.s32.totalorder %v2055, 2
  %v2061 = vxor.u32 %v2052, 2147483648
  %v2062 = vsel %vm2060, %v2061, %v2053
  %v2063 = vsel %vm2056, %v2059, %v2062
  %v2064 = vsel %vm2054, nan, %v2063
  %v2065 = vand.u32 2147483647, %v516
  %vm2066 = vcmp.le.f32.partialorder %v2065, 0.7853982
  %vm2067 = vcmp.lt.s32.totalorder %v516, 0
  %v2068 = vand.u32 %v516, 2139095040
  %v2069 = vshrl.u32 %v2068, 23
  %v2070 = vsub.s32 %v2069, 127
  %v2071 = vand.u32 2147483647, %v516
  %v2072 = vand.u32 %v2071, 8388607
  %v2073 = vor.u32 %v2072, 8388608
  %v2074 = vsub.s32 0, %v2073
  %v2075 = vadd.s32 %v2070, 1
  %vm2076 = vcmp.gt.s32.totalorder %v2075, 0
  %v2077 = vsel %vm2076, %v2075, 0
  %v2078 = vshrl.u32 %v2077, 5
  %v2079 = vand.u32 %v2077, 31
  %v2080 = vsub.s32 32, %v2079
  %v2081 = vshrl.u32 683565275, %v2080
  %v2082 = vshll.u32 683565275, %v2079
  %v2083 = vshrl.u32 2475754826, %v2080
  %v2084 = vor.u32 %v2082, %v2083
  %v2085 = vshll.u32 2475754826, %v2079
  %v2086 = vshrl.u32 2131351028, %v2080
  %v2087 = vor.u32 %v2085, %v2086
  %v2088 = vshll.u32 2131351028, %v2079
  %v2089 = vshrl.u32 2102212464, %v2080
  %v2090 = vor.u32 %v2088, %v2089
  %v2091 = vshll.u32 2102212464, %v2079
  %v2092 = vshrl.u32 920167782, %v2080
  %v2093 = vor.u32 %v2091, %v2092
  %v2094 = vshll.u32 920167782, %v2079
  %v2095 = vshrl.u32 1326507024, %v2080
  %v2096 = vor.u32 %v2094, %v2095
  %vm2097 = vcmp.lt.s32.totalorder %v2078, 1
  %vm2098 = vcmp.lt.s32.totalorder %v2078, 2
  %vm2099 = vcmp.lt.s32.totalorder %v2078, 3
  %vm2100 = vcmp.lt.s32.totalorder %v2078, 4
  %v2101 = vsel %vm2097, %v2081, %v2084
  %v2102 = vsel %vm2100, %v2090, 2102212464
  %v2103 = vsel %vm2099, %v2087, %v2102
  %v2104 = vsel %vm2098, %v2101, %v2103
  %v2105 = vsel %vm2097, %v2084, %v2087
  %v2106 = vsel %vm2100, %v2093, 920167782
  %v2107 = vsel %vm2099, %v2090, %v2106
  %v2108 = vsel %vm2098, %v2105, %v2107
  %v2109 = vsel %vm2097, %v2087, %v2090
  %v2110 = vsel %vm2100, %v2096, 1326507024
  %v2111 = vsel %vm2099, %v2093, %v2110
  %v2112 = vsel %vm2098, %v2109, %v2111
  %v2113 = vshll.u32 %v2073, 8
  %v2114 = vmul.u32.u64.compose %v2113, %v2112
  %v2115 = vextract.low.u32 %v2114
  %v2116 = vextract.high.u32 %v2114
  %v2117 = vmul.u32.u64.compose %v2113, %v2108
  %v2118 = vextract.low.u32 %v2117
  %v2119 = vextract.high.u32 %v2117
  %v2120 = vmul.u32 %v2113, %v2104
  %v2121 = vadd.s32 %v2116, %v2118
  %vm2122 = vc.u32 %v2116, %v2118
  %v2123 = vadd.s32 %v2119, 1
  %v2124 = vsel %vm2122, %v2123, %v2119
  %v2125 = vadd.s32 %v2120, %v2124
  %v2126 = vadd.s32 %v2125, 536870912
  %v2127 = vshrl.u32 %v2126, 30
  %v2128 = vshll.u32 %v2127, 30
  %v2129 = vsub.s32 %v2125, %v2128
  %vm2130 = vcmp.lt.s32.totalorder %v2129, 0
  %v2131 = vsub.s32 0, %v2129
  %v2132 = vsel %vm2130, %v2131, %v2129
  %v2133 = vclz %v2132
  %v2134 = vsub.s32 %v2133, 2
  %vm2135 = vcmp.gt.s32.totalorder 0, %v2134
  %v2136 = vsel %vm2135, 0, %v2134
  %v2137 = vsub.s32 32, %v2136
  %v2138 = vshll.u32 %v2129, %v2136
  %v2139 = vshrl.u32 %v2121, %v2137
  %v2140 = vor.u32 %v2138, %v2139
  %v2141 = vsub.s32 4294967266, %v2136
  %v2142 = vadd.s32 %v2141, 127
  %v2143 = vshll.u32 %v2142, 23
  %v2144 = vor.u32 4788187, %v2143
  %v2145 = vand.u32 2147483647, %v2144
  %v2147 = vcvt.s32.f32 %v2140
  %v2148 = vmul.f32 %v2147, %v2145
  %v2149 = vxor.u32 %v2148, 2147483648
  %v2150 = vsel %vm2067, %v2149, %v2148
  %v2151 = vsub.s32 4, %v2127
  %v2152 = vsel %vm2067, %v2151, %v2127
  %v2153 = vsel %vm2066, %v516, %v2150
  %v2154 = vsel %vm2066, 0, %v2152
  %v2155 = vcosq.f32.pop %v2153
  %v2156 = vsinq.f32.pop %v2153
  %vm2157 = vweird.f32 %v516
  %v2158 = vand.u32 %v2154, 3
  %vm2159 = vcmp.lt.s32.totalorder %v2158, 2
  %vm2160 = vcmp.eq.s32.totalorder %v2158, 0
  %v2161 = vxor.u32 %v2156, 2147483648
  %v2162 = vsel %vm2160, %v2155, %v2161
  %vm2163 = vcmp.eq.s32.totalorder %v2158, 2
  %v2164 = vxor.u32 %v2155, 2147483648
  %v2165 = vsel %vm2163, %v2164, %v2156
  %v2166 = vsel %vm2159, %v2162, %v2165
  %v2167 = vsel %vm2157, nan, %v2166
  %v2168 = vand.u32 2147483647, %v517
  %vm2169 = vcmp.le.f32.partialorder %v2168, 0.7853982
  %vm2170 = vcmp.lt.s32.totalorder %v517, 0
  %v2171 = vand.u32 %v517, 2139095040
  %v2172 = vshrl.u32 %v2171, 23
  %v2173 = vsub.s32 %v2172, 127
  %v2174 = vand.u32 2147483647, %v517
  %v2175 = vand.u32 %v2174, 8388607
  %v2176 = vor.u32 %v2175, 8388608
  %v2177 = vsub.s32 0, %v2176
  %v2178 = vadd.s32 %v2173, 1
  %vm2179 = vcmp.gt.s32.totalorder %v2178, 0
  %v2180 = vsel %vm2179, %v2178, 0
  %v2181 = vshrl.u32 %v2180, 5
  %v2182 = vand.u32 %v2180, 31
  %v2183 = vsub.s32 32, %v2182
  %v2184 = vshrl.u32 683565275, %v2183
  %v2185 = vshll.u32 683565275, %v2182
  %v2186 = vshrl.u32 2475754826, %v2183
  %v2187 = vor.u32 %v2185, %v2186
  %v2188 = vshll.u32 2475754826, %v2182
  %v2189 = vshrl.u32 2131351028, %v2183
  %v2190 = vor.u32 %v2188, %v2189
  %v2191 = vshll.u32 2131351028, %v2182
  %v2192 = vshrl.u32 2102212464, %v2183
  %v2193 = vor.u32 %v2191, %v2192
  %v2194 = vshll.u32 2102212464, %v2182
  %v2195 = vshrl.u32 920167782, %v2183
  %v2196 = vor.u32 %v2194, %v2195
  %v2197 = vshll.u32 920167782, %v2182
  %v2198 = vshrl.u32 1326507024, %v2183
  %v2199 = vor.u32 %v2197, %v2198
  %vm2200 = vcmp.lt.s32.totalorder %v2181, 1
  %vm2201 = vcmp.lt.s32.totalorder %v2181, 2
  %vm2202 = vcmp.lt.s32.totalorder %v2181, 3
  %vm2203 = vcmp.lt.s32.totalorder %v2181, 4
  %v2204 = vsel %vm2200, %v2184, %v2187
  %v2205 = vsel %vm2203, %v2193, 2102212464
  %v2206 = vsel %vm2202, %v2190, %v2205
  %v2207 = vsel %vm2201, %v2204, %v2206
  %v2208 = vsel %vm2200, %v2187, %v2190
  %v2209 = vsel %vm2203, %v2196, 920167782
  %v2210 = vsel %vm2202, %v2193, %v2209
  %v2211 = vsel %vm2201, %v2208, %v2210
  %v2212 = vsel %vm2200, %v2190, %v2193
  %v2213 = vsel %vm2203, %v2199, 1326507024
  %v2214 = vsel %vm2202, %v2196, %v2213
  %v2215 = vsel %vm2201, %v2212, %v2214
  %v2216 = vshll.u32 %v2176, 8
  %v2217 = vmul.u32.u64.compose %v2216, %v2215
  %v2218 = vextract.low.u32 %v2217
  %v2219 = vextract.high.u32 %v2217
  %v2220 = vmul.u32.u64.compose %v2216, %v2211
  %v2221 = vextract.low.u32 %v2220
  %v2222 = vextract.high.u32 %v2220
  %v2223 = vmul.u32 %v2216, %v2207
  %v2224 = vadd.s32 %v2219, %v2221
  %vm2225 = vc.u32 %v2219, %v2221
  %v2226 = vadd.s32 %v2222, 1
  %v2227 = vsel %vm2225, %v2226, %v2222
  %v2228 = vadd.s32 %v2223, %v2227
  %v2229 = vadd.s32 %v2228, 536870912
  %v2230 = vshrl.u32 %v2229, 30
  %v2231 = vshll.u32 %v2230, 30
  %v2232 = vsub.s32 %v2228, %v2231
  %vm2233 = vcmp.lt.s32.totalorder %v2232, 0
  %v2234 = vsub.s32 0, %v2232
  %v2235 = vsel %vm2233, %v2234, %v2232
  %v2236 = vclz %v2235
  %v2237 = vsub.s32 %v2236, 2
  %vm2238 = vcmp.gt.s32.totalorder 0, %v2237
  %v2239 = vsel %vm2238, 0, %v2237
  %v2240 = vsub.s32 32, %v2239
  %v2241 = vshll.u32 %v2232, %v2239
  %v2242 = vshrl.u32 %v2224, %v2240
  %v2243 = vor.u32 %v2241, %v2242
  %v2244 = vsub.s32 4294967266, %v2239
  %v2245 = vadd.s32 %v2244, 127
  %v2246 = vshll.u32 %v2245, 23
  %v2247 = vor.u32 4788187, %v2246
  %v2248 = vand.u32 2147483647, %v2247
  %v2250 = vcvt.s32.f32 %v2243
  %v2251 = vmul.f32 %v2250, %v2248
  %v2252 = vxor.u32 %v2251, 2147483648
  %v2253 = vsel %vm2170, %v2252, %v2251
  %v2254 = vsub.s32 4, %v2230
  %v2255 = vsel %vm2170, %v2254, %v2230
  %v2256 = vsel %vm2169, %v517, %v2253
  %v2257 = vsel %vm2169, 0, %v2255
  %v2258 = vcosq.f32.pop %v2256
  %v2259 = vsinq.f32.pop %v2256
  %vm2260 = vweird.f32 %v517
  %v2261 = vand.u32 %v2257, 3
  %vm2262 = vcmp.lt.s32.totalorder %v2261, 2
  %vm2263 = vcmp.eq.s32.totalorder %v2261, 0
  %v2264 = vxor.u32 %v2259, 2147483648
  %v2265 = vsel %vm2263, %v2258, %v2264
  %vm2266 = vcmp.eq.s32.totalorder %v2261, 2
  %v2267 = vxor.u32 %v2258, 2147483648
  %v2268 = vsel %vm2266, %v2267, %v2259
  %v2269 = vsel %vm2262, %v2265, %v2268
  %v2270 = vsel %vm2260, nan, %v2269
  %v2271 = vand.u32 2147483647, %v518
  %vm2272 = vcmp.le.f32.partialorder %v2271, 0.7853982
  %vm2273 = vcmp.lt.s32.totalorder %v518, 0
  %v2274 = vand.u32 %v518, 2139095040
  %v2275 = vshrl.u32 %v2274, 23
  %v2276 = vsub.s32 %v2275, 127
  %v2277 = vand.u32 2147483647, %v518
  %v2278 = vand.u32 %v2277, 8388607
  %v2279 = vor.u32 %v2278, 8388608
  %v2280 = vsub.s32 0, %v2279
  %v2281 = vadd.s32 %v2276, 1
  %vm2282 = vcmp.gt.s32.totalorder %v2281, 0
  %v2283 = vsel %vm2282, %v2281, 0
  %v2284 = vshrl.u32 %v2283, 5
  %v2285 = vand.u32 %v2283, 31
  %v2286 = vsub.s32 32, %v2285
  %v2287 = vshrl.u32 683565275, %v2286
  %v2288 = vshll.u32 683565275, %v2285
  %v2289 = vshrl.u32 2475754826, %v2286
  %v2290 = vor.u32 %v2288, %v2289
  %v2291 = vshll.u32 2475754826, %v2285
  %v2292 = vshrl.u32 2131351028, %v2286
  %v2293 = vor.u32 %v2291, %v2292
  %v2294 = vshll.u32 2131351028, %v2285
  %v2295 = vshrl.u32 2102212464, %v2286
  %v2296 = vor.u32 %v2294, %v2295
  %v2297 = vshll.u32 2102212464, %v2285
  %v2298 = vshrl.u32 920167782, %v2286
  %v2299 = vor.u32 %v2297, %v2298
  %v2300 = vshll.u32 920167782, %v2285
  %v2301 = vshrl.u32 1326507024, %v2286
  %v2302 = vor.u32 %v2300, %v2301
  %vm2303 = vcmp.lt.s32.totalorder %v2284, 1
  %vm2304 = vcmp.lt.s32.totalorder %v2284, 2
  %vm2305 = vcmp.lt.s32.totalorder %v2284, 3
  %vm2306 = vcmp.lt.s32.totalorder %v2284, 4
  %v2307 = vsel %vm2303, %v2287, %v2290
  %v2308 = vsel %vm2306, %v2296, 2102212464
  %v2309 = vsel %vm2305, %v2293, %v2308
  %v2310 = vsel %vm2304, %v2307, %v2309
  %v2311 = vsel %vm2303, %v2290, %v2293
  %v2312 = vsel %vm2306, %v2299, 920167782
  %v2313 = vsel %vm2305, %v2296, %v2312
  %v2314 = vsel %vm2304, %v2311, %v2313
  %v2315 = vsel %vm2303, %v2293, %v2296
  %v2316 = vsel %vm2306, %v2302, 1326507024
  %v2317 = vsel %vm2305, %v2299, %v2316
  %v2318 = vsel %vm2304, %v2315, %v2317
  %v2319 = vshll.u32 %v2279, 8
  %v2320 = vmul.u32.u64.compose %v2319, %v2318
  %v2321 = vextract.low.u32 %v2320
  %v2322 = vextract.high.u32 %v2320
  %v2323 = vmul.u32.u64.compose %v2319, %v2314
  %v2324 = vextract.low.u32 %v2323
  %v2325 = vextract.high.u32 %v2323
  %v2326 = vmul.u32 %v2319, %v2310
  %v2327 = vadd.s32 %v2322, %v2324
  %vm2328 = vc.u32 %v2322, %v2324
  %v2329 = vadd.s32 %v2325, 1
  %v2330 = vsel %vm2328, %v2329, %v2325
  %v2331 = vadd.s32 %v2326, %v2330
  %v2332 = vadd.s32 %v2331, 536870912
  %v2333 = vshrl.u32 %v2332, 30
  %v2334 = vshll.u32 %v2333, 30
  %v2335 = vsub.s32 %v2331, %v2334
  %vm2336 = vcmp.lt.s32.totalorder %v2335, 0
  %v2337 = vsub.s32 0, %v2335
  %v2338 = vsel %vm2336, %v2337, %v2335
  %v2339 = vclz %v2338
  %v2340 = vsub.s32 %v2339, 2
  %vm2341 = vcmp.gt.s32.totalorder 0, %v2340
  %v2342 = vsel %vm2341, 0, %v2340
  %v2343 = vsub.s32 32, %v2342
  %v2344 = vshll.u32 %v2335, %v2342
  %v2345 = vshrl.u32 %v2327, %v2343
  %v2346 = vor.u32 %v2344, %v2345
  %v2347 = vsub.s32 4294967266, %v2342
  %v2348 = vadd.s32 %v2347, 127
  %v2349 = vshll.u32 %v2348, 23
  %v2350 = vor.u32 4788187, %v2349
  %v2351 = vand.u32 2147483647, %v2350
  %v2353 = vcvt.s32.f32 %v2346
  %v2354 = vmul.f32 %v2353, %v2351
  %v2355 = vxor.u32 %v2354, 2147483648
  %v2356 = vsel %vm2273, %v2355, %v2354
  %v2357 = vsub.s32 4, %v2333
  %v2358 = vsel %vm2273, %v2357, %v2333
  %v2359 = vsel %vm2272, %v518, %v2356
  %v2360 = vsel %vm2272, 0, %v2358
  %v2361 = vcosq.f32.pop %v2359
  %v2362 = vsinq.f32.pop %v2359
  %vm2363 = vweird.f32 %v518
  %v2364 = vand.u32 %v2360, 3
  %vm2365 = vcmp.lt.s32.totalorder %v2364, 2
  %vm2366 = vcmp.eq.s32.totalorder %v2364, 0
  %v2367 = vxor.u32 %v2362, 2147483648
  %v2368 = vsel %vm2366, %v2361, %v2367
  %vm2369 = vcmp.eq.s32.totalorder %v2364, 2
  %v2370 = vxor.u32 %v2361, 2147483648
  %v2371 = vsel %vm2369, %v2370, %v2362
  %v2372 = vsel %vm2365, %v2368, %v2371
  %v2373 = vsel %vm2363, nan, %v2372
  %v2374 = vand.u32 2147483647, %v519
  %vm2375 = vcmp.le.f32.partialorder %v2374, 0.7853982
  %vm2376 = vcmp.lt.s32.totalorder %v519, 0
  %v2377 = vand.u32 %v519, 2139095040
  %v2378 = vshrl.u32 %v2377, 23
  %v2379 = vsub.s32 %v2378, 127
  %v2380 = vand.u32 2147483647, %v519
  %v2381 = vand.u32 %v2380, 8388607
  %v2382 = vor.u32 %v2381, 8388608
  %v2383 = vsub.s32 0, %v2382
  %v2384 = vadd.s32 %v2379, 1
  %vm2385 = vcmp.gt.s32.totalorder %v2384, 0
  %v2386 = vsel %vm2385, %v2384, 0
  %v2387 = vshrl.u32 %v2386, 5
  %v2388 = vand.u32 %v2386, 31
  %v2389 = vsub.s32 32, %v2388
  %v2390 = vshrl.u32 683565275, %v2389
  %v2391 = vshll.u32 683565275, %v2388
  %v2392 = vshrl.u32 2475754826, %v2389
  %v2393 = vor.u32 %v2391, %v2392
  %v2394 = vshll.u32 2475754826, %v2388
  %v2395 = vshrl.u32 2131351028, %v2389
  %v2396 = vor.u32 %v2394, %v2395
  %v2397 = vshll.u32 2131351028, %v2388
  %v2398 = vshrl.u32 2102212464, %v2389
  %v2399 = vor.u32 %v2397, %v2398
  %v2400 = vshll.u32 2102212464, %v2388
  %v2401 = vshrl.u32 920167782, %v2389
  %v2402 = vor.u32 %v2400, %v2401
  %v2403 = vshll.u32 920167782, %v2388
  %v2404 = vshrl.u32 1326507024, %v2389
  %v2405 = vor.u32 %v2403, %v2404
  %vm2406 = vcmp.lt.s32.totalorder %v2387, 1
  %vm2407 = vcmp.lt.s32.totalorder %v2387, 2
  %vm2408 = vcmp.lt.s32.totalorder %v2387, 3
  %vm2409 = vcmp.lt.s32.totalorder %v2387, 4
  %v2410 = vsel %vm2406, %v2390, %v2393
  %v2411 = vsel %vm2409, %v2399, 2102212464
  %v2412 = vsel %vm2408, %v2396, %v2411
  %v2413 = vsel %vm2407, %v2410, %v2412
  %v2414 = vsel %vm2406, %v2393, %v2396
  %v2415 = vsel %vm2409, %v2402, 920167782
  %v2416 = vsel %vm2408, %v2399, %v2415
  %v2417 = vsel %vm2407, %v2414, %v2416
  %v2418 = vsel %vm2406, %v2396, %v2399
  %v2419 = vsel %vm2409, %v2405, 1326507024
  %v2420 = vsel %vm2408, %v2402, %v2419
  %v2421 = vsel %vm2407, %v2418, %v2420
  %v2422 = vshll.u32 %v2382, 8
  %v2423 = vmul.u32.u64.compose %v2422, %v2421
  %v2424 = vextract.low.u32 %v2423
  %v2425 = vextract.high.u32 %v2423
  %v2426 = vmul.u32.u64.compose %v2422, %v2417
  %v2427 = vextract.low.u32 %v2426
  %v2428 = vextract.high.u32 %v2426
  %v2429 = vmul.u32 %v2422, %v2413
  %v2430 = vadd.s32 %v2425, %v2427
  %vm2431 = vc.u32 %v2425, %v2427
  %v2432 = vadd.s32 %v2428, 1
  %v2433 = vsel %vm2431, %v2432, %v2428
  %v2434 = vadd.s32 %v2429, %v2433
  %v2435 = vadd.s32 %v2434, 536870912
  %v2436 = vshrl.u32 %v2435, 30
  %v2437 = vshll.u32 %v2436, 30
  %v2438 = vsub.s32 %v2434, %v2437
  %vm2439 = vcmp.lt.s32.totalorder %v2438, 0
  %v2440 = vsub.s32 0, %v2438
  %v2441 = vsel %vm2439, %v2440, %v2438
  %v2442 = vclz %v2441
  %v2443 = vsub.s32 %v2442, 2
  %vm2444 = vcmp.gt.s32.totalorder 0, %v2443
  %v2445 = vsel %vm2444, 0, %v2443
  %v2446 = vsub.s32 32, %v2445
  %v2447 = vshll.u32 %v2438, %v2445
  %v2448 = vshrl.u32 %v2430, %v2446
  %v2449 = vor.u32 %v2447, %v2448
  %v2450 = vsub.s32 4294967266, %v2445
  %v2451 = vadd.s32 %v2450, 127
  %v2452 = vshll.u32 %v2451, 23
  %v2453 = vor.u32 4788187, %v2452
  %v2454 = vand.u32 2147483647, %v2453
  %v2456 = vcvt.s32.f32 %v2449
  %v2457 = vmul.f32 %v2456, %v2454
  %v2458 = vxor.u32 %v2457, 2147483648
  %v2459 = vsel %vm2376, %v2458, %v2457
  %v2460 = vsub.s32 4, %v2436
  %v2461 = vsel %vm2376, %v2460, %v2436
  %v2462 = vsel %vm2375, %v519, %v2459
  %v2463 = vsel %vm2375, 0, %v2461
  %v2464 = vcosq.f32.pop %v2462
  %v2465 = vsinq.f32.pop %v2462
  %vm2466 = vweird.f32 %v519
  %v2467 = vand.u32 %v2463, 3
  %vm2468 = vcmp.lt.s32.totalorder %v2467, 2
  %vm2469 = vcmp.eq.s32.totalorder %v2467, 0
  %v2470 = vxor.u32 %v2465, 2147483648
  %v2471 = vsel %vm2469, %v2464, %v2470
  %vm2472 = vcmp.eq.s32.totalorder %v2467, 2
  %v2473 = vxor.u32 %v2464, 2147483648
  %v2474 = vsel %vm2472, %v2473, %v2465
  %v2475 = vsel %vm2468, %v2471, %v2474
  %v2476 = vsel %vm2466, nan, %v2475
  %2496 = vrot.lane.b32.xlu0 %v622, 64
  %v2497 = vpop.permute.xlu0 %2496
  %2498 = vrot.lane.b32.xlu0 %v725, 64
  %v2499 = vpop.permute.xlu0 %2498
  %2500 = vrot.lane.b32.xlu0 %v828, 64
  %v2501 = vpop.permute.xlu0 %2500
  %2502 = vrot.lane.b32.xlu0 %v931, 64
  %v2503 = vpop.permute.xlu0 %2502
  %2504 = vrot.lane.b32.xlu0 %v1034, 64
  %v2505 = vpop.permute.xlu0 %2504
  %2506 = vrot.lane.b32.xlu0 %v1137, 64
  %v2507 = vpop.permute.xlu0 %2506
  %2508 = vrot.lane.b32.xlu0 %v1240, 64
  %v2509 = vpop.permute.xlu0 %2508
  %2510 = vrot.lane.b32.xlu0 %v1343, 64
  %v2511 = vpop.permute.xlu0 %2510
  %2512 = vrot.lane.b32.xlu0 %v1446, 64
  %v2513 = vpop.permute.xlu0 %2512
  %2514 = vrot.lane.b32.xlu0 %v1549, 64
  %v2515 = vpop.permute.xlu0 %2514
  %2516 = vrot.lane.b32.xlu0 %v1652, 64
  %v2517 = vpop.permute.xlu0 %2516
  %2518 = vrot.lane.b32.xlu0 %v1755, 64
  %v2519 = vpop.permute.xlu0 %2518
  %2520 = vrot.lane.b32.xlu0 %v1858, 64
  %v2521 = vpop.permute.xlu0 %2520
  %2522 = vrot.lane.b32.xlu0 %v1961, 64
  %v2523 = vpop.permute.xlu0 %2522
  %2524 = vrot.lane.b32.xlu0 %v2064, 64
  %v2525 = vpop.permute.xlu0 %2524
  %2526 = vrot.lane.b32.xlu0 %v2167, 64
  %v2527 = vpop.permute.xlu0 %2526
  %2528 = vrot.lane.b32.xlu0 %v2270, 64
  %v2529 = vpop.permute.xlu0 %2528
  %2530 = vrot.lane.b32.xlu0 %v2373, 64
  %v2531 = vpop.permute.xlu0 %2530
  %2532 = vrot.lane.b32.xlu0 %v2476, 64
  %v2533 = vpop.permute.xlu0 %2532
  %v2553 = vmul.f32 %v464, %v2497
  %v2554 = vmul.f32 %v466, %v2499
  %v2555 = vmul.f32 %v468, %v2501
  %v2556 = vmul.f32 %v470, %v2503
  %v2557 = vmul.f32 %v472, %v2505
  %v2558 = vmul.f32 %v474, %v2507
  %v2559 = vmul.f32 %v476, %v2509
  %v2560 = vmul.f32 %v478, %v2511
  %v2561 = vmul.f32 %v480, %v2513
  %v2562 = vmul.f32 %v482, %v2515
  %v2563 = vmul.f32 %v484, %v2517
  %v2564 = vmul.f32 %v486, %v2519
  %v2565 = vmul.f32 %v488, %v2521
  %v2566 = vmul.f32 %v490, %v2523
  %v2567 = vmul.f32 %v492, %v2525
  %v2568 = vmul.f32 %v494, %v2527
  %v2569 = vmul.f32 %v496, %v2529
  %v2570 = vmul.f32 %v498, %v2531
  %v2571 = vmul.f32 %v500, %v2533
  %2591 = vrot.lane.b32.xlu0 %v2553, 64
  %v2592 = vpop.permute.xlu0 %2591
  %2593 = vrot.lane.b32.xlu0 %v2554, 64
  %v2594 = vpop.permute.xlu0 %2593
  %2595 = vrot.lane.b32.xlu0 %v2555, 64
  %v2596 = vpop.permute.xlu0 %2595
  %2597 = vrot.lane.b32.xlu0 %v2556, 64
  %v2598 = vpop.permute.xlu0 %2597
  %2599 = vrot.lane.b32.xlu0 %v2557, 64
  %v2600 = vpop.permute.xlu0 %2599
  %2601 = vrot.lane.b32.xlu0 %v2558, 64
  %v2602 = vpop.permute.xlu0 %2601
  %2603 = vrot.lane.b32.xlu0 %v2559, 64
  %v2604 = vpop.permute.xlu0 %2603
  %2605 = vrot.lane.b32.xlu0 %v2560, 64
  %v2606 = vpop.permute.xlu0 %2605
  %2607 = vrot.lane.b32.xlu0 %v2561, 64
  %v2608 = vpop.permute.xlu0 %2607
  %2609 = vrot.lane.b32.xlu0 %v2562, 64
  %v2610 = vpop.permute.xlu0 %2609
  %2611 = vrot.lane.b32.xlu0 %v2563, 64
  %v2612 = vpop.permute.xlu0 %2611
  %2613 = vrot.lane.b32.xlu0 %v2564, 64
  %v2614 = vpop.permute.xlu0 %2613
  %2615 = vrot.lane.b32.xlu0 %v2565, 64
  %v2616 = vpop.permute.xlu0 %2615
  %2617 = vrot.lane.b32.xlu0 %v2566, 64
  %v2618 = vpop.permute.xlu0 %2617
  %2619 = vrot.lane.b32.xlu0 %v2567, 64
  %v2620 = vpop.permute.xlu0 %2619
  %2621 = vrot.lane.b32.xlu0 %v2568, 64
  %v2622 = vpop.permute.xlu0 %2621
  %2623 = vrot.lane.b32.xlu0 %v2569, 64
  %v2624 = vpop.permute.xlu0 %2623
  %2625 = vrot.lane.b32.xlu0 %v2570, 64
  %v2626 = vpop.permute.xlu0 %2625
  %2627 = vrot.lane.b32.xlu0 %v2571, 64
  %v2628 = vpop.permute.xlu0 %2627
  %vm2648 = vcmask 523264
  %2649 = vst.msk [vmem:[%s3] sm:$0xff] %vm2648, %v2592
  %2650 = vst.msk [vmem:[%s3 + $0x8] sm:$0xff] %vm2648, %v2594
  %2651 = vst.msk [vmem:[%s3 + $0x10] sm:$0xff] %vm2648, %v2596
  %2652 = vst.msk [vmem:[%s3 + $0x18] sm:$0xff] %vm2648, %v2598
  %2653 = vst.msk [vmem:[%s3 + $0x20] sm:$0xff] %vm2648, %v2600
  %2654 = vst.msk [vmem:[%s3 + $0x28] sm:$0xff] %vm2648, %v2602
  %2655 = vst.msk [vmem:[%s3 + $0x30] sm:$0xff] %vm2648, %v2604
  %2656 = vst.msk [vmem:[%s3 + $0x38] sm:$0xff] %vm2648, %v2606
  %2657 = vst.msk [vmem:[%s3 + $0x40] sm:$0xff] %vm2648, %v2608
  %2658 = vst.msk [vmem:[%s3 + $0x48] sm:$0xff] %vm2648, %v2610
  %2659 = vst.msk [vmem:[%s3 + $0x50] sm:$0xff] %vm2648, %v2612
  %2660 = vst.msk [vmem:[%s3 + $0x58] sm:$0xff] %vm2648, %v2614
  %2661 = vst.msk [vmem:[%s3 + $0x60] sm:$0xff] %vm2648, %v2616
  %2662 = vst.msk [vmem:[%s3 + $0x68] sm:$0xff] %vm2648, %v2618
  %2663 = vst.msk [vmem:[%s3 + $0x70] sm:$0xff] %vm2648, %v2620
  %2664 = vst.msk [vmem:[%s3 + $0x78] sm:$0xff] %vm2648, %v2622
  %2665 = vst.msk [vmem:[%s3 + $0x80] sm:$0xff] %vm2648, %v2624
  %2666 = vst.msk [vmem:[%s3 + $0x88] sm:$0xff] %vm2648, %v2626
  %2667 = vst.msk [vmem:[%s3 + $0x90] sm:$0xff] %vm2648, %v2628
  %v2668 = vand.u32 2147483647, %v501
  %vm2669 = vcmp.le.f32.partialorder %v2668, 0.7853982
  %vm2670 = vcmp.lt.s32.totalorder %v501, 0
  %v2671 = vand.u32 %v501, 2139095040
  %v2672 = vshrl.u32 %v2671, 23
  %v2673 = vsub.s32 %v2672, 127
  %v2674 = vand.u32 2147483647, %v501
  %v2675 = vand.u32 %v2674, 8388607
  %v2676 = vor.u32 %v2675, 8388608
  %v2677 = vsub.s32 0, %v2676
  %v2678 = vadd.s32 %v2673, 1
  %vm2679 = vcmp.gt.s32.totalorder %v2678, 0
  %v2680 = vsel %vm2679, %v2678, 0
  %v2681 = vshrl.u32 %v2680, 5
  %v2682 = vand.u32 %v2680, 31
  %v2683 = vsub.s32 32, %v2682
  %v2684 = vshrl.u32 683565275, %v2683
  %v2685 = vshll.u32 683565275, %v2682
  %v2686 = vshrl.u32 2475754826, %v2683
  %v2687 = vor.u32 %v2685, %v2686
  %v2688 = vshll.u32 2475754826, %v2682
  %v2689 = vshrl.u32 2131351028, %v2683
  %v2690 = vor.u32 %v2688, %v2689
  %v2691 = vshll.u32 2131351028, %v2682
  %v2692 = vshrl.u32 2102212464, %v2683
  %v2693 = vor.u32 %v2691, %v2692
  %v2694 = vshll.u32 2102212464, %v2682
  %v2695 = vshrl.u32 920167782, %v2683
  %v2696 = vor.u32 %v2694, %v2695
  %v2697 = vshll.u32 920167782, %v2682
  %v2698 = vshrl.u32 1326507024, %v2683
  %v2699 = vor.u32 %v2697, %v2698
  %vm2700 = vcmp.lt.s32.totalorder %v2681, 1
  %vm2701 = vcmp.lt.s32.totalorder %v2681, 2
  %vm2702 = vcmp.lt.s32.totalorder %v2681, 3
  %vm2703 = vcmp.lt.s32.totalorder %v2681, 4
  %v2704 = vsel %vm2700, %v2684, %v2687
  %v2705 = vsel %vm2703, %v2693, 2102212464
  %v2706 = vsel %vm2702, %v2690, %v2705
  %v2707 = vsel %vm2701, %v2704, %v2706
  %v2708 = vsel %vm2700, %v2687, %v2690
  %v2709 = vsel %vm2703, %v2696, 920167782
  %v2710 = vsel %vm2702, %v2693, %v2709
  %v2711 = vsel %vm2701, %v2708, %v2710
  %v2712 = vsel %vm2700, %v2690, %v2693
  %v2713 = vsel %vm2703, %v2699, 1326507024
  %v2714 = vsel %vm2702, %v2696, %v2713
  %v2715 = vsel %vm2701, %v2712, %v2714
  %v2716 = vshll.u32 %v2676, 8
  %v2717 = vmul.u32.u64.compose %v2716, %v2715
  %v2718 = vextract.low.u32 %v2717
  %v2719 = vextract.high.u32 %v2717
  %v2720 = vmul.u32.u64.compose %v2716, %v2711
  %v2721 = vextract.low.u32 %v2720
  %v2722 = vextract.high.u32 %v2720
  %v2723 = vmul.u32 %v2716, %v2707
  %v2724 = vadd.s32 %v2719, %v2721
  %vm2725 = vc.u32 %v2719, %v2721
  %v2726 = vadd.s32 %v2722, 1
  %v2727 = vsel %vm2725, %v2726, %v2722
  %v2728 = vadd.s32 %v2723, %v2727
  %v2729 = vadd.s32 %v2728, 536870912
  %v2730 = vshrl.u32 %v2729, 30
  %v2731 = vshll.u32 %v2730, 30
  %v2732 = vsub.s32 %v2728, %v2731
  %vm2733 = vcmp.lt.s32.totalorder %v2732, 0
  %v2734 = vsub.s32 0, %v2732
  %v2735 = vsel %vm2733, %v2734, %v2732
  %v2736 = vclz %v2735
  %v2737 = vsub.s32 %v2736, 2
  %vm2738 = vcmp.gt.s32.totalorder 0, %v2737
  %v2739 = vsel %vm2738, 0, %v2737
  %v2740 = vsub.s32 32, %v2739
  %v2741 = vshll.u32 %v2732, %v2739
  %v2742 = vshrl.u32 %v2724, %v2740
  %v2743 = vor.u32 %v2741, %v2742
  %v2744 = vsub.s32 4294967266, %v2739
  %v2745 = vadd.s32 %v2744, 127
  %v2746 = vshll.u32 %v2745, 23
  %v2747 = vor.u32 4788187, %v2746
  %v2748 = vand.u32 2147483647, %v2747
  %v2750 = vcvt.s32.f32 %v2743
  %v2751 = vmul.f32 %v2750, %v2748
  %v2752 = vxor.u32 %v2751, 2147483648
  %v2753 = vsel %vm2670, %v2752, %v2751
  %v2754 = vsub.s32 4, %v2730
  %v2755 = vsel %vm2670, %v2754, %v2730
  %v2756 = vsel %vm2669, %v501, %v2753
  %v2757 = vsel %vm2669, 0, %v2755
  %v2758 = vcosq.f32.pop %v2756
  %v2759 = vsinq.f32.pop %v2756
  %vm2760 = vweird.f32 %v501
  %v2761 = vadd.s32 %v2757, 3
  %v2762 = vand.u32 %v2761, 3
  %vm2763 = vcmp.lt.s32.totalorder %v2762, 2
  %vm2764 = vcmp.eq.s32.totalorder %v2762, 0
  %v2765 = vxor.u32 %v2759, 2147483648
  %v2766 = vsel %vm2764, %v2758, %v2765
  %vm2767 = vcmp.eq.s32.totalorder %v2762, 2
  %v2768 = vxor.u32 %v2758, 2147483648
  %v2769 = vsel %vm2767, %v2768, %v2759
  %v2770 = vsel %vm2763, %v2766, %v2769
  %v2771 = vsel %vm2760, nan, %v2770
  %v2772 = vand.u32 2147483647, %v502
  %vm2773 = vcmp.le.f32.partialorder %v2772, 0.7853982
  %vm2774 = vcmp.lt.s32.totalorder %v502, 0
  %v2775 = vand.u32 %v502, 2139095040
  %v2776 = vshrl.u32 %v2775, 23
  %v2777 = vsub.s32 %v2776, 127
  %v2778 = vand.u32 2147483647, %v502
  %v2779 = vand.u32 %v2778, 8388607
  %v2780 = vor.u32 %v2779, 8388608
  %v2781 = vsub.s32 0, %v2780
  %v2782 = vadd.s32 %v2777, 1
  %vm2783 = vcmp.gt.s32.totalorder %v2782, 0
  %v2784 = vsel %vm2783, %v2782, 0
  %v2785 = vshrl.u32 %v2784, 5
  %v2786 = vand.u32 %v2784, 31
  %v2787 = vsub.s32 32, %v2786
  %v2788 = vshrl.u32 683565275, %v2787
  %v2789 = vshll.u32 683565275, %v2786
  %v2790 = vshrl.u32 2475754826, %v2787
  %v2791 = vor.u32 %v2789, %v2790
  %v2792 = vshll.u32 2475754826, %v2786
  %v2793 = vshrl.u32 2131351028, %v2787
  %v2794 = vor.u32 %v2792, %v2793
  %v2795 = vshll.u32 2131351028, %v2786
  %v2796 = vshrl.u32 2102212464, %v2787
  %v2797 = vor.u32 %v2795, %v2796
  %v2798 = vshll.u32 2102212464, %v2786
  %v2799 = vshrl.u32 920167782, %v2787
  %v2800 = vor.u32 %v2798, %v2799
  %v2801 = vshll.u32 920167782, %v2786
  %v2802 = vshrl.u32 1326507024, %v2787
  %v2803 = vor.u32 %v2801, %v2802
  %vm2804 = vcmp.lt.s32.totalorder %v2785, 1
  %vm2805 = vcmp.lt.s32.totalorder %v2785, 2
  %vm2806 = vcmp.lt.s32.totalorder %v2785, 3
  %vm2807 = vcmp.lt.s32.totalorder %v2785, 4
  %v2808 = vsel %vm2804, %v2788, %v2791
  %v2809 = vsel %vm2807, %v2797, 2102212464
  %v2810 = vsel %vm2806, %v2794, %v2809
  %v2811 = vsel %vm2805, %v2808, %v2810
  %v2812 = vsel %vm2804, %v2791, %v2794
  %v2813 = vsel %vm2807, %v2800, 920167782
  %v2814 = vsel %vm2806, %v2797, %v2813
  %v2815 = vsel %vm2805, %v2812, %v2814
  %v2816 = vsel %vm2804, %v2794, %v2797
  %v2817 = vsel %vm2807, %v2803, 1326507024
  %v2818 = vsel %vm2806, %v2800, %v2817
  %v2819 = vsel %vm2805, %v2816, %v2818
  %v2820 = vshll.u32 %v2780, 8
  %v2821 = vmul.u32.u64.compose %v2820, %v2819
  %v2822 = vextract.low.u32 %v2821
  %v2823 = vextract.high.u32 %v2821
  %v2824 = vmul.u32.u64.compose %v2820, %v2815
  %v2825 = vextract.low.u32 %v2824
  %v2826 = vextract.high.u32 %v2824
  %v2827 = vmul.u32 %v2820, %v2811
  %v2828 = vadd.s32 %v2823, %v2825
  %vm2829 = vc.u32 %v2823, %v2825
  %v2830 = vadd.s32 %v2826, 1
  %v2831 = vsel %vm2829, %v2830, %v2826
  %v2832 = vadd.s32 %v2827, %v2831
  %v2833 = vadd.s32 %v2832, 536870912
  %v2834 = vshrl.u32 %v2833, 30
  %v2835 = vshll.u32 %v2834, 30
  %v2836 = vsub.s32 %v2832, %v2835
  %vm2837 = vcmp.lt.s32.totalorder %v2836, 0
  %v2838 = vsub.s32 0, %v2836
  %v2839 = vsel %vm2837, %v2838, %v2836
  %v2840 = vclz %v2839
  %v2841 = vsub.s32 %v2840, 2
  %vm2842 = vcmp.gt.s32.totalorder 0, %v2841
  %v2843 = vsel %vm2842, 0, %v2841
  %v2844 = vsub.s32 32, %v2843
  %v2845 = vshll.u32 %v2836, %v2843
  %v2846 = vshrl.u32 %v2828, %v2844
  %v2847 = vor.u32 %v2845, %v2846
  %v2848 = vsub.s32 4294967266, %v2843
  %v2849 = vadd.s32 %v2848, 127
  %v2850 = vshll.u32 %v2849, 23
  %v2851 = vor.u32 4788187, %v2850
  %v2852 = vand.u32 2147483647, %v2851
  %v2854 = vcvt.s32.f32 %v2847
  %v2855 = vmul.f32 %v2854, %v2852
  %v2856 = vxor.u32 %v2855, 2147483648
  %v2857 = vsel %vm2774, %v2856, %v2855
  %v2858 = vsub.s32 4, %v2834
  %v2859 = vsel %vm2774, %v2858, %v2834
  %v2860 = vsel %vm2773, %v502, %v2857
  %v2861 = vsel %vm2773, 0, %v2859
  %v2862 = vcosq.f32.pop %v2860
  %v2863 = vsinq.f32.pop %v2860
  %vm2864 = vweird.f32 %v502
  %v2865 = vadd.s32 %v2861, 3
  %v2866 = vand.u32 %v2865, 3
  %vm2867 = vcmp.lt.s32.totalorder %v2866, 2
  %vm2868 = vcmp.eq.s32.totalorder %v2866, 0
  %v2869 = vxor.u32 %v2863, 2147483648
  %v2870 = vsel %vm2868, %v2862, %v2869
  %vm2871 = vcmp.eq.s32.totalorder %v2866, 2
  %v2872 = vxor.u32 %v2862, 2147483648
  %v2873 = vsel %vm2871, %v2872, %v2863
  %v2874 = vsel %vm2867, %v2870, %v2873
  %v2875 = vsel %vm2864, nan, %v2874
  %v2876 = vand.u32 2147483647, %v503
  %vm2877 = vcmp.le.f32.partialorder %v2876, 0.7853982
  %vm2878 = vcmp.lt.s32.totalorder %v503, 0
  %v2879 = vand.u32 %v503, 2139095040
  %v2880 = vshrl.u32 %v2879, 23
  %v2881 = vsub.s32 %v2880, 127
  %v2882 = vand.u32 2147483647, %v503
  %v2883 = vand.u32 %v2882, 8388607
  %v2884 = vor.u32 %v2883, 8388608
  %v2885 = vsub.s32 0, %v2884
  %v2886 = vadd.s32 %v2881, 1
  %vm2887 = vcmp.gt.s32.totalorder %v2886, 0
  %v2888 = vsel %vm2887, %v2886, 0
  %v2889 = vshrl.u32 %v2888, 5
  %v2890 = vand.u32 %v2888, 31
  %v2891 = vsub.s32 32, %v2890
  %v2892 = vshrl.u32 683565275, %v2891
  %v2893 = vshll.u32 683565275, %v2890
  %v2894 = vshrl.u32 2475754826, %v2891
  %v2895 = vor.u32 %v2893, %v2894
  %v2896 = vshll.u32 2475754826, %v2890
  %v2897 = vshrl.u32 2131351028, %v2891
  %v2898 = vor.u32 %v2896, %v2897
  %v2899 = vshll.u32 2131351028, %v2890
  %v2900 = vshrl.u32 2102212464, %v2891
  %v2901 = vor.u32 %v2899, %v2900
  %v2902 = vshll.u32 2102212464, %v2890
  %v2903 = vshrl.u32 920167782, %v2891
  %v2904 = vor.u32 %v2902, %v2903
  %v2905 = vshll.u32 920167782, %v2890
  %v2906 = vshrl.u32 1326507024, %v2891
  %v2907 = vor.u32 %v2905, %v2906
  %vm2908 = vcmp.lt.s32.totalorder %v2889, 1
  %vm2909 = vcmp.lt.s32.totalorder %v2889, 2
  %vm2910 = vcmp.lt.s32.totalorder %v2889, 3
  %vm2911 = vcmp.lt.s32.totalorder %v2889, 4
  %v2912 = vsel %vm2908, %v2892, %v2895
  %v2913 = vsel %vm2911, %v2901, 2102212464
  %v2914 = vsel %vm2910, %v2898, %v2913
  %v2915 = vsel %vm2909, %v2912, %v2914
  %v2916 = vsel %vm2908, %v2895, %v2898
  %v2917 = vsel %vm2911, %v2904, 920167782
  %v2918 = vsel %vm2910, %v2901, %v2917
  %v2919 = vsel %vm2909, %v2916, %v2918
  %v2920 = vsel %vm2908, %v2898, %v2901
  %v2921 = vsel %vm2911, %v2907, 1326507024
  %v2922 = vsel %vm2910, %v2904, %v2921
  %v2923 = vsel %vm2909, %v2920, %v2922
  %v2924 = vshll.u32 %v2884, 8
  %v2925 = vmul.u32.u64.compose %v2924, %v2923
  %v2926 = vextract.low.u32 %v2925
  %v2927 = vextract.high.u32 %v2925
  %v2928 = vmul.u32.u64.compose %v2924, %v2919
  %v2929 = vextract.low.u32 %v2928
  %v2930 = vextract.high.u32 %v2928
  %v2931 = vmul.u32 %v2924, %v2915
  %v2932 = vadd.s32 %v2927, %v2929
  %vm2933 = vc.u32 %v2927, %v2929
  %v2934 = vadd.s32 %v2930, 1
  %v2935 = vsel %vm2933, %v2934, %v2930
  %v2936 = vadd.s32 %v2931, %v2935
  %v2937 = vadd.s32 %v2936, 536870912
  %v2938 = vshrl.u32 %v2937, 30
  %v2939 = vshll.u32 %v2938, 30
  %v2940 = vsub.s32 %v2936, %v2939
  %vm2941 = vcmp.lt.s32.totalorder %v2940, 0
  %v2942 = vsub.s32 0, %v2940
  %v2943 = vsel %vm2941, %v2942, %v2940
  %v2944 = vclz %v2943
  %v2945 = vsub.s32 %v2944, 2
  %vm2946 = vcmp.gt.s32.totalorder 0, %v2945
  %v2947 = vsel %vm2946, 0, %v2945
  %v2948 = vsub.s32 32, %v2947
  %v2949 = vshll.u32 %v2940, %v2947
  %v2950 = vshrl.u32 %v2932, %v2948
  %v2951 = vor.u32 %v2949, %v2950
  %v2952 = vsub.s32 4294967266, %v2947
  %v2953 = vadd.s32 %v2952, 127
  %v2954 = vshll.u32 %v2953, 23
  %v2955 = vor.u32 4788187, %v2954
  %v2956 = vand.u32 2147483647, %v2955
  %v2958 = vcvt.s32.f32 %v2951
  %v2959 = vmul.f32 %v2958, %v2956
  %v2960 = vxor.u32 %v2959, 2147483648
  %v2961 = vsel %vm2878, %v2960, %v2959
  %v2962 = vsub.s32 4, %v2938
  %v2963 = vsel %vm2878, %v2962, %v2938
  %v2964 = vsel %vm2877, %v503, %v2961
  %v2965 = vsel %vm2877, 0, %v2963
  %v2966 = vcosq.f32.pop %v2964
  %v2967 = vsinq.f32.pop %v2964
  %vm2968 = vweird.f32 %v503
  %v2969 = vadd.s32 %v2965, 3
  %v2970 = vand.u32 %v2969, 3
  %vm2971 = vcmp.lt.s32.totalorder %v2970, 2
  %vm2972 = vcmp.eq.s32.totalorder %v2970, 0
  %v2973 = vxor.u32 %v2967, 2147483648
  %v2974 = vsel %vm2972, %v2966, %v2973
  %vm2975 = vcmp.eq.s32.totalorder %v2970, 2
  %v2976 = vxor.u32 %v2966, 2147483648
  %v2977 = vsel %vm2975, %v2976, %v2967
  %v2978 = vsel %vm2971, %v2974, %v2977
  %v2979 = vsel %vm2968, nan, %v2978
  %v2980 = vand.u32 2147483647, %v504
  %vm2981 = vcmp.le.f32.partialorder %v2980, 0.7853982
  %vm2982 = vcmp.lt.s32.totalorder %v504, 0
  %v2983 = vand.u32 %v504, 2139095040
  %v2984 = vshrl.u32 %v2983, 23
  %v2985 = vsub.s32 %v2984, 127
  %v2986 = vand.u32 2147483647, %v504
  %v2987 = vand.u32 %v2986, 8388607
  %v2988 = vor.u32 %v2987, 8388608
  %v2989 = vsub.s32 0, %v2988
  %v2990 = vadd.s32 %v2985, 1
  %vm2991 = vcmp.gt.s32.totalorder %v2990, 0
  %v2992 = vsel %vm2991, %v2990, 0
  %v2993 = vshrl.u32 %v2992, 5
  %v2994 = vand.u32 %v2992, 31
  %v2995 = vsub.s32 32, %v2994
  %v2996 = vshrl.u32 683565275, %v2995
  %v2997 = vshll.u32 683565275, %v2994
  %v2998 = vshrl.u32 2475754826, %v2995
  %v2999 = vor.u32 %v2997, %v2998
  %v3000 = vshll.u32 2475754826, %v2994
  %v3001 = vshrl.u32 2131351028, %v2995
  %v3002 = vor.u32 %v3000, %v3001
  %v3003 = vshll.u32 2131351028, %v2994
  %v3004 = vshrl.u32 2102212464, %v2995
  %v3005 = vor.u32 %v3003, %v3004
  %v3006 = vshll.u32 2102212464, %v2994
  %v3007 = vshrl.u32 920167782, %v2995
  %v3008 = vor.u32 %v3006, %v3007
  %v3009 = vshll.u32 920167782, %v2994
  %v3010 = vshrl.u32 1326507024, %v2995
  %v3011 = vor.u32 %v3009, %v3010
  %vm3012 = vcmp.lt.s32.totalorder %v2993, 1
  %vm3013 = vcmp.lt.s32.totalorder %v2993, 2
  %vm3014 = vcmp.lt.s32.totalorder %v2993, 3
  %vm3015 = vcmp.lt.s32.totalorder %v2993, 4
  %v3016 = vsel %vm3012, %v2996, %v2999
  %v3017 = vsel %vm3015, %v3005, 2102212464
  %v3018 = vsel %vm3014, %v3002, %v3017
  %v3019 = vsel %vm3013, %v3016, %v3018
  %v3020 = vsel %vm3012, %v2999, %v3002
  %v3021 = vsel %vm3015, %v3008, 920167782
  %v3022 = vsel %vm3014, %v3005, %v3021
  %v3023 = vsel %vm3013, %v3020, %v3022
  %v3024 = vsel %vm3012, %v3002, %v3005
  %v3025 = vsel %vm3015, %v3011, 1326507024
  %v3026 = vsel %vm3014, %v3008, %v3025
  %v3027 = vsel %vm3013, %v3024, %v3026
  %v3028 = vshll.u32 %v2988, 8
  %v3029 = vmul.u32.u64.compose %v3028, %v3027
  %v3030 = vextract.low.u32 %v3029
  %v3031 = vextract.high.u32 %v3029
  %v3032 = vmul.u32.u64.compose %v3028, %v3023
  %v3033 = vextract.low.u32 %v3032
  %v3034 = vextract.high.u32 %v3032
  %v3035 = vmul.u32 %v3028, %v3019
  %v3036 = vadd.s32 %v3031, %v3033
  %vm3037 = vc.u32 %v3031, %v3033
  %v3038 = vadd.s32 %v3034, 1
  %v3039 = vsel %vm3037, %v3038, %v3034
  %v3040 = vadd.s32 %v3035, %v3039
  %v3041 = vadd.s32 %v3040, 536870912
  %v3042 = vshrl.u32 %v3041, 30
  %v3043 = vshll.u32 %v3042, 30
  %v3044 = vsub.s32 %v3040, %v3043
  %vm3045 = vcmp.lt.s32.totalorder %v3044, 0
  %v3046 = vsub.s32 0, %v3044
  %v3047 = vsel %vm3045, %v3046, %v3044
  %v3048 = vclz %v3047
  %v3049 = vsub.s32 %v3048, 2
  %vm3050 = vcmp.gt.s32.totalorder 0, %v3049
  %v3051 = vsel %vm3050, 0, %v3049
  %v3052 = vsub.s32 32, %v3051
  %v3053 = vshll.u32 %v3044, %v3051
  %v3054 = vshrl.u32 %v3036, %v3052
  %v3055 = vor.u32 %v3053, %v3054
  %v3056 = vsub.s32 4294967266, %v3051
  %v3057 = vadd.s32 %v3056, 127
  %v3058 = vshll.u32 %v3057, 23
  %v3059 = vor.u32 4788187, %v3058
  %v3060 = vand.u32 2147483647, %v3059
  %v3062 = vcvt.s32.f32 %v3055
  %v3063 = vmul.f32 %v3062, %v3060
  %v3064 = vxor.u32 %v3063, 2147483648
  %v3065 = vsel %vm2982, %v3064, %v3063
  %v3066 = vsub.s32 4, %v3042
  %v3067 = vsel %vm2982, %v3066, %v3042
  %v3068 = vsel %vm2981, %v504, %v3065
  %v3069 = vsel %vm2981, 0, %v3067
  %v3070 = vcosq.f32.pop %v3068
  %v3071 = vsinq.f32.pop %v3068
  %vm3072 = vweird.f32 %v504
  %v3073 = vadd.s32 %v3069, 3
  %v3074 = vand.u32 %v3073, 3
  %vm3075 = vcmp.lt.s32.totalorder %v3074, 2
  %vm3076 = vcmp.eq.s32.totalorder %v3074, 0
  %v3077 = vxor.u32 %v3071, 2147483648
  %v3078 = vsel %vm3076, %v3070, %v3077
  %vm3079 = vcmp.eq.s32.totalorder %v3074, 2
  %v3080 = vxor.u32 %v3070, 2147483648
  %v3081 = vsel %vm3079, %v3080, %v3071
  %v3082 = vsel %vm3075, %v3078, %v3081
  %v3083 = vsel %vm3072, nan, %v3082
  %v3084 = vand.u32 2147483647, %v505
  %vm3085 = vcmp.le.f32.partialorder %v3084, 0.7853982
  %vm3086 = vcmp.lt.s32.totalorder %v505, 0
  %v3087 = vand.u32 %v505, 2139095040
  %v3088 = vshrl.u32 %v3087, 23
  %v3089 = vsub.s32 %v3088, 127
  %v3090 = vand.u32 2147483647, %v505
  %v3091 = vand.u32 %v3090, 8388607
  %v3092 = vor.u32 %v3091, 8388608
  %v3093 = vsub.s32 0, %v3092
  %v3094 = vadd.s32 %v3089, 1
  %vm3095 = vcmp.gt.s32.totalorder %v3094, 0
  %v3096 = vsel %vm3095, %v3094, 0
  %v3097 = vshrl.u32 %v3096, 5
  %v3098 = vand.u32 %v3096, 31
  %v3099 = vsub.s32 32, %v3098
  %v3100 = vshrl.u32 683565275, %v3099
  %v3101 = vshll.u32 683565275, %v3098
  %v3102 = vshrl.u32 2475754826, %v3099
  %v3103 = vor.u32 %v3101, %v3102
  %v3104 = vshll.u32 2475754826, %v3098
  %v3105 = vshrl.u32 2131351028, %v3099
  %v3106 = vor.u32 %v3104, %v3105
  %v3107 = vshll.u32 2131351028, %v3098
  %v3108 = vshrl.u32 2102212464, %v3099
  %v3109 = vor.u32 %v3107, %v3108
  %v3110 = vshll.u32 2102212464, %v3098
  %v3111 = vshrl.u32 920167782, %v3099
  %v3112 = vor.u32 %v3110, %v3111
  %v3113 = vshll.u32 920167782, %v3098
  %v3114 = vshrl.u32 1326507024, %v3099
  %v3115 = vor.u32 %v3113, %v3114
  %vm3116 = vcmp.lt.s32.totalorder %v3097, 1
  %vm3117 = vcmp.lt.s32.totalorder %v3097, 2
  %vm3118 = vcmp.lt.s32.totalorder %v3097, 3
  %vm3119 = vcmp.lt.s32.totalorder %v3097, 4
  %v3120 = vsel %vm3116, %v3100, %v3103
  %v3121 = vsel %vm3119, %v3109, 2102212464
  %v3122 = vsel %vm3118, %v3106, %v3121
  %v3123 = vsel %vm3117, %v3120, %v3122
  %v3124 = vsel %vm3116, %v3103, %v3106
  %v3125 = vsel %vm3119, %v3112, 920167782
  %v3126 = vsel %vm3118, %v3109, %v3125
  %v3127 = vsel %vm3117, %v3124, %v3126
  %v3128 = vsel %vm3116, %v3106, %v3109
  %v3129 = vsel %vm3119, %v3115, 1326507024
  %v3130 = vsel %vm3118, %v3112, %v3129
  %v3131 = vsel %vm3117, %v3128, %v3130
  %v3132 = vshll.u32 %v3092, 8
  %v3133 = vmul.u32.u64.compose %v3132, %v3131
  %v3134 = vextract.low.u32 %v3133
  %v3135 = vextract.high.u32 %v3133
  %v3136 = vmul.u32.u64.compose %v3132, %v3127
  %v3137 = vextract.low.u32 %v3136
  %v3138 = vextract.high.u32 %v3136
  %v3139 = vmul.u32 %v3132, %v3123
  %v3140 = vadd.s32 %v3135, %v3137
  %vm3141 = vc.u32 %v3135, %v3137
  %v3142 = vadd.s32 %v3138, 1
  %v3143 = vsel %vm3141, %v3142, %v3138
  %v3144 = vadd.s32 %v3139, %v3143
  %v3145 = vadd.s32 %v3144, 536870912
  %v3146 = vshrl.u32 %v3145, 30
  %v3147 = vshll.u32 %v3146, 30
  %v3148 = vsub.s32 %v3144, %v3147
  %vm3149 = vcmp.lt.s32.totalorder %v3148, 0
  %v3150 = vsub.s32 0, %v3148
  %v3151 = vsel %vm3149, %v3150, %v3148
  %v3152 = vclz %v3151
  %v3153 = vsub.s32 %v3152, 2
  %vm3154 = vcmp.gt.s32.totalorder 0, %v3153
  %v3155 = vsel %vm3154, 0, %v3153
  %v3156 = vsub.s32 32, %v3155
  %v3157 = vshll.u32 %v3148, %v3155
  %v3158 = vshrl.u32 %v3140, %v3156
  %v3159 = vor.u32 %v3157, %v3158
  %v3160 = vsub.s32 4294967266, %v3155
  %v3161 = vadd.s32 %v3160, 127
  %v3162 = vshll.u32 %v3161, 23
  %v3163 = vor.u32 4788187, %v3162
  %v3164 = vand.u32 2147483647, %v3163
  %v3166 = vcvt.s32.f32 %v3159
  %v3167 = vmul.f32 %v3166, %v3164
  %v3168 = vxor.u32 %v3167, 2147483648
  %v3169 = vsel %vm3086, %v3168, %v3167
  %v3170 = vsub.s32 4, %v3146
  %v3171 = vsel %vm3086, %v3170, %v3146
  %v3172 = vsel %vm3085, %v505, %v3169
  %v3173 = vsel %vm3085, 0, %v3171
  %v3174 = vcosq.f32.pop %v3172
  %v3175 = vsinq.f32.pop %v3172
  %vm3176 = vweird.f32 %v505
  %v3177 = vadd.s32 %v3173, 3
  %v3178 = vand.u32 %v3177, 3
  %vm3179 = vcmp.lt.s32.totalorder %v3178, 2
  %vm3180 = vcmp.eq.s32.totalorder %v3178, 0
  %v3181 = vxor.u32 %v3175, 2147483648
  %v3182 = vsel %vm3180, %v3174, %v3181
  %vm3183 = vcmp.eq.s32.totalorder %v3178, 2
  %v3184 = vxor.u32 %v3174, 2147483648
  %v3185 = vsel %vm3183, %v3184, %v3175
  %v3186 = vsel %vm3179, %v3182, %v3185
  %v3187 = vsel %vm3176, nan, %v3186
  %v3188 = vand.u32 2147483647, %v506
  %vm3189 = vcmp.le.f32.partialorder %v3188, 0.7853982
  %vm3190 = vcmp.lt.s32.totalorder %v506, 0
  %v3191 = vand.u32 %v506, 2139095040
  %v3192 = vshrl.u32 %v3191, 23
  %v3193 = vsub.s32 %v3192, 127
  %v3194 = vand.u32 2147483647, %v506
  %v3195 = vand.u32 %v3194, 8388607
  %v3196 = vor.u32 %v3195, 8388608
  %v3197 = vsub.s32 0, %v3196
  %v3198 = vadd.s32 %v3193, 1
  %vm3199 = vcmp.gt.s32.totalorder %v3198, 0
  %v3200 = vsel %vm3199, %v3198, 0
  %v3201 = vshrl.u32 %v3200, 5
  %v3202 = vand.u32 %v3200, 31
  %v3203 = vsub.s32 32, %v3202
  %v3204 = vshrl.u32 683565275, %v3203
  %v3205 = vshll.u32 683565275, %v3202
  %v3206 = vshrl.u32 2475754826, %v3203
  %v3207 = vor.u32 %v3205, %v3206
  %v3208 = vshll.u32 2475754826, %v3202
  %v3209 = vshrl.u32 2131351028, %v3203
  %v3210 = vor.u32 %v3208, %v3209
  %v3211 = vshll.u32 2131351028, %v3202
  %v3212 = vshrl.u32 2102212464, %v3203
  %v3213 = vor.u32 %v3211, %v3212
  %v3214 = vshll.u32 2102212464, %v3202
  %v3215 = vshrl.u32 920167782, %v3203
  %v3216 = vor.u32 %v3214, %v3215
  %v3217 = vshll.u32 920167782, %v3202
  %v3218 = vshrl.u32 1326507024, %v3203
  %v3219 = vor.u32 %v3217, %v3218
  %vm3220 = vcmp.lt.s32.totalorder %v3201, 1
  %vm3221 = vcmp.lt.s32.totalorder %v3201, 2
  %vm3222 = vcmp.lt.s32.totalorder %v3201, 3
  %vm3223 = vcmp.lt.s32.totalorder %v3201, 4
  %v3224 = vsel %vm3220, %v3204, %v3207
  %v3225 = vsel %vm3223, %v3213, 2102212464
  %v3226 = vsel %vm3222, %v3210, %v3225
  %v3227 = vsel %vm3221, %v3224, %v3226
  %v3228 = vsel %vm3220, %v3207, %v3210
  %v3229 = vsel %vm3223, %v3216, 920167782
  %v3230 = vsel %vm3222, %v3213, %v3229
  %v3231 = vsel %vm3221, %v3228, %v3230
  %v3232 = vsel %vm3220, %v3210, %v3213
  %v3233 = vsel %vm3223, %v3219, 1326507024
  %v3234 = vsel %vm3222, %v3216, %v3233
  %v3235 = vsel %vm3221, %v3232, %v3234
  %v3236 = vshll.u32 %v3196, 8
  %v3237 = vmul.u32.u64.compose %v3236, %v3235
  %v3238 = vextract.low.u32 %v3237
  %v3239 = vextract.high.u32 %v3237
  %v3240 = vmul.u32.u64.compose %v3236, %v3231
  %v3241 = vextract.low.u32 %v3240
  %v3242 = vextract.high.u32 %v3240
  %v3243 = vmul.u32 %v3236, %v3227
  %v3244 = vadd.s32 %v3239, %v3241
  %vm3245 = vc.u32 %v3239, %v3241
  %v3246 = vadd.s32 %v3242, 1
  %v3247 = vsel %vm3245, %v3246, %v3242
  %v3248 = vadd.s32 %v3243, %v3247
  %v3249 = vadd.s32 %v3248, 536870912
  %v3250 = vshrl.u32 %v3249, 30
  %v3251 = vshll.u32 %v3250, 30
  %v3252 = vsub.s32 %v3248, %v3251
  %vm3253 = vcmp.lt.s32.totalorder %v3252, 0
  %v3254 = vsub.s32 0, %v3252
  %v3255 = vsel %vm3253, %v3254, %v3252
  %v3256 = vclz %v3255
  %v3257 = vsub.s32 %v3256, 2
  %vm3258 = vcmp.gt.s32.totalorder 0, %v3257
  %v3259 = vsel %vm3258, 0, %v3257
  %v3260 = vsub.s32 32, %v3259
  %v3261 = vshll.u32 %v3252, %v3259
  %v3262 = vshrl.u32 %v3244, %v3260
  %v3263 = vor.u32 %v3261, %v3262
  %v3264 = vsub.s32 4294967266, %v3259
  %v3265 = vadd.s32 %v3264, 127
  %v3266 = vshll.u32 %v3265, 23
  %v3267 = vor.u32 4788187, %v3266
  %v3268 = vand.u32 2147483647, %v3267
  %v3270 = vcvt.s32.f32 %v3263
  %v3271 = vmul.f32 %v3270, %v3268
  %v3272 = vxor.u32 %v3271, 2147483648
  %v3273 = vsel %vm3190, %v3272, %v3271
  %v3274 = vsub.s32 4, %v3250
  %v3275 = vsel %vm3190, %v3274, %v3250
  %v3276 = vsel %vm3189, %v506, %v3273
  %v3277 = vsel %vm3189, 0, %v3275
  %v3278 = vcosq.f32.pop %v3276
  %v3279 = vsinq.f32.pop %v3276
  %vm3280 = vweird.f32 %v506
  %v3281 = vadd.s32 %v3277, 3
  %v3282 = vand.u32 %v3281, 3
  %vm3283 = vcmp.lt.s32.totalorder %v3282, 2
  %vm3284 = vcmp.eq.s32.totalorder %v3282, 0
  %v3285 = vxor.u32 %v3279, 2147483648
  %v3286 = vsel %vm3284, %v3278, %v3285
  %vm3287 = vcmp.eq.s32.totalorder %v3282, 2
  %v3288 = vxor.u32 %v3278, 2147483648
  %v3289 = vsel %vm3287, %v3288, %v3279
  %v3290 = vsel %vm3283, %v3286, %v3289
  %v3291 = vsel %vm3280, nan, %v3290
  %v3292 = vand.u32 2147483647, %v507
  %vm3293 = vcmp.le.f32.partialorder %v3292, 0.7853982
  %vm3294 = vcmp.lt.s32.totalorder %v507, 0
  %v3295 = vand.u32 %v507, 2139095040
  %v3296 = vshrl.u32 %v3295, 23
  %v3297 = vsub.s32 %v3296, 127
  %v3298 = vand.u32 2147483647, %v507
  %v3299 = vand.u32 %v3298, 8388607
  %v3300 = vor.u32 %v3299, 8388608
  %v3301 = vsub.s32 0, %v3300
  %v3302 = vadd.s32 %v3297, 1
  %vm3303 = vcmp.gt.s32.totalorder %v3302, 0
  %v3304 = vsel %vm3303, %v3302, 0
  %v3305 = vshrl.u32 %v3304, 5
  %v3306 = vand.u32 %v3304, 31
  %v3307 = vsub.s32 32, %v3306
  %v3308 = vshrl.u32 683565275, %v3307
  %v3309 = vshll.u32 683565275, %v3306
  %v3310 = vshrl.u32 2475754826, %v3307
  %v3311 = vor.u32 %v3309, %v3310
  %v3312 = vshll.u32 2475754826, %v3306
  %v3313 = vshrl.u32 2131351028, %v3307
  %v3314 = vor.u32 %v3312, %v3313
  %v3315 = vshll.u32 2131351028, %v3306
  %v3316 = vshrl.u32 2102212464, %v3307
  %v3317 = vor.u32 %v3315, %v3316
  %v3318 = vshll.u32 2102212464, %v3306
  %v3319 = vshrl.u32 920167782, %v3307
  %v3320 = vor.u32 %v3318, %v3319
  %v3321 = vshll.u32 920167782, %v3306
  %v3322 = vshrl.u32 1326507024, %v3307
  %v3323 = vor.u32 %v3321, %v3322
  %vm3324 = vcmp.lt.s32.totalorder %v3305, 1
  %vm3325 = vcmp.lt.s32.totalorder %v3305, 2
  %vm3326 = vcmp.lt.s32.totalorder %v3305, 3
  %vm3327 = vcmp.lt.s32.totalorder %v3305, 4
  %v3328 = vsel %vm3324, %v3308, %v3311
  %v3329 = vsel %vm3327, %v3317, 2102212464
  %v3330 = vsel %vm3326, %v3314, %v3329
  %v3331 = vsel %vm3325, %v3328, %v3330
  %v3332 = vsel %vm3324, %v3311, %v3314
  %v3333 = vsel %vm3327, %v3320, 920167782
  %v3334 = vsel %vm3326, %v3317, %v3333
  %v3335 = vsel %vm3325, %v3332, %v3334
  %v3336 = vsel %vm3324, %v3314, %v3317
  %v3337 = vsel %vm3327, %v3323, 1326507024
  %v3338 = vsel %vm3326, %v3320, %v3337
  %v3339 = vsel %vm3325, %v3336, %v3338
  %v3340 = vshll.u32 %v3300, 8
  %v3341 = vmul.u32.u64.compose %v3340, %v3339
  %v3342 = vextract.low.u32 %v3341
  %v3343 = vextract.high.u32 %v3341
  %v3344 = vmul.u32.u64.compose %v3340, %v3335
  %v3345 = vextract.low.u32 %v3344
  %v3346 = vextract.high.u32 %v3344
  %v3347 = vmul.u32 %v3340, %v3331
  %v3348 = vadd.s32 %v3343, %v3345
  %vm3349 = vc.u32 %v3343, %v3345
  %v3350 = vadd.s32 %v3346, 1
  %v3351 = vsel %vm3349, %v3350, %v3346
  %v3352 = vadd.s32 %v3347, %v3351
  %v3353 = vadd.s32 %v3352, 536870912
  %v3354 = vshrl.u32 %v3353, 30
  %v3355 = vshll.u32 %v3354, 30
  %v3356 = vsub.s32 %v3352, %v3355
  %vm3357 = vcmp.lt.s32.totalorder %v3356, 0
  %v3358 = vsub.s32 0, %v3356
  %v3359 = vsel %vm3357, %v3358, %v3356
  %v3360 = vclz %v3359
  %v3361 = vsub.s32 %v3360, 2
  %vm3362 = vcmp.gt.s32.totalorder 0, %v3361
  %v3363 = vsel %vm3362, 0, %v3361
  %v3364 = vsub.s32 32, %v3363
  %v3365 = vshll.u32 %v3356, %v3363
  %v3366 = vshrl.u32 %v3348, %v3364
  %v3367 = vor.u32 %v3365, %v3366
  %v3368 = vsub.s32 4294967266, %v3363
  %v3369 = vadd.s32 %v3368, 127
  %v3370 = vshll.u32 %v3369, 23
  %v3371 = vor.u32 4788187, %v3370
  %v3372 = vand.u32 2147483647, %v3371
  %v3374 = vcvt.s32.f32 %v3367
  %v3375 = vmul.f32 %v3374, %v3372
  %v3376 = vxor.u32 %v3375, 2147483648
  %v3377 = vsel %vm3294, %v3376, %v3375
  %v3378 = vsub.s32 4, %v3354
  %v3379 = vsel %vm3294, %v3378, %v3354
  %v3380 = vsel %vm3293, %v507, %v3377
  %v3381 = vsel %vm3293, 0, %v3379
  %v3382 = vcosq.f32.pop %v3380
  %v3383 = vsinq.f32.pop %v3380
  %vm3384 = vweird.f32 %v507
  %v3385 = vadd.s32 %v3381, 3
  %v3386 = vand.u32 %v3385, 3
  %vm3387 = vcmp.lt.s32.totalorder %v3386, 2
  %vm3388 = vcmp.eq.s32.totalorder %v3386, 0
  %v3389 = vxor.u32 %v3383, 2147483648
  %v3390 = vsel %vm3388, %v3382, %v3389
  %vm3391 = vcmp.eq.s32.totalorder %v3386, 2
  %v3392 = vxor.u32 %v3382, 2147483648
  %v3393 = vsel %vm3391, %v3392, %v3383
  %v3394 = vsel %vm3387, %v3390, %v3393
  %v3395 = vsel %vm3384, nan, %v3394
  %v3396 = vand.u32 2147483647, %v508
  %vm3397 = vcmp.le.f32.partialorder %v3396, 0.7853982
  %vm3398 = vcmp.lt.s32.totalorder %v508, 0
  %v3399 = vand.u32 %v508, 2139095040
  %v3400 = vshrl.u32 %v3399, 23
  %v3401 = vsub.s32 %v3400, 127
  %v3402 = vand.u32 2147483647, %v508
  %v3403 = vand.u32 %v3402, 8388607
  %v3404 = vor.u32 %v3403, 8388608
  %v3405 = vsub.s32 0, %v3404
  %v3406 = vadd.s32 %v3401, 1
  %vm3407 = vcmp.gt.s32.totalorder %v3406, 0
  %v3408 = vsel %vm3407, %v3406, 0
  %v3409 = vshrl.u32 %v3408, 5
  %v3410 = vand.u32 %v3408, 31
  %v3411 = vsub.s32 32, %v3410
  %v3412 = vshrl.u32 683565275, %v3411
  %v3413 = vshll.u32 683565275, %v3410
  %v3414 = vshrl.u32 2475754826, %v3411
  %v3415 = vor.u32 %v3413, %v3414
  %v3416 = vshll.u32 2475754826, %v3410
  %v3417 = vshrl.u32 2131351028, %v3411
  %v3418 = vor.u32 %v3416, %v3417
  %v3419 = vshll.u32 2131351028, %v3410
  %v3420 = vshrl.u32 2102212464, %v3411
  %v3421 = vor.u32 %v3419, %v3420
  %v3422 = vshll.u32 2102212464, %v3410
  %v3423 = vshrl.u32 920167782, %v3411
  %v3424 = vor.u32 %v3422, %v3423
  %v3425 = vshll.u32 920167782, %v3410
  %v3426 = vshrl.u32 1326507024, %v3411
  %v3427 = vor.u32 %v3425, %v3426
  %vm3428 = vcmp.lt.s32.totalorder %v3409, 1
  %vm3429 = vcmp.lt.s32.totalorder %v3409, 2
  %vm3430 = vcmp.lt.s32.totalorder %v3409, 3
  %vm3431 = vcmp.lt.s32.totalorder %v3409, 4
  %v3432 = vsel %vm3428, %v3412, %v3415
  %v3433 = vsel %vm3431, %v3421, 2102212464
  %v3434 = vsel %vm3430, %v3418, %v3433
  %v3435 = vsel %vm3429, %v3432, %v3434
  %v3436 = vsel %vm3428, %v3415, %v3418
  %v3437 = vsel %vm3431, %v3424, 920167782
  %v3438 = vsel %vm3430, %v3421, %v3437
  %v3439 = vsel %vm3429, %v3436, %v3438
  %v3440 = vsel %vm3428, %v3418, %v3421
  %v3441 = vsel %vm3431, %v3427, 1326507024
  %v3442 = vsel %vm3430, %v3424, %v3441
  %v3443 = vsel %vm3429, %v3440, %v3442
  %v3444 = vshll.u32 %v3404, 8
  %v3445 = vmul.u32.u64.compose %v3444, %v3443
  %v3446 = vextract.low.u32 %v3445
  %v3447 = vextract.high.u32 %v3445
  %v3448 = vmul.u32.u64.compose %v3444, %v3439
  %v3449 = vextract.low.u32 %v3448
  %v3450 = vextract.high.u32 %v3448
  %v3451 = vmul.u32 %v3444, %v3435
  %v3452 = vadd.s32 %v3447, %v3449
  %vm3453 = vc.u32 %v3447, %v3449
  %v3454 = vadd.s32 %v3450, 1
  %v3455 = vsel %vm3453, %v3454, %v3450
  %v3456 = vadd.s32 %v3451, %v3455
  %v3457 = vadd.s32 %v3456, 536870912
  %v3458 = vshrl.u32 %v3457, 30
  %v3459 = vshll.u32 %v3458, 30
  %v3460 = vsub.s32 %v3456, %v3459
  %vm3461 = vcmp.lt.s32.totalorder %v3460, 0
  %v3462 = vsub.s32 0, %v3460
  %v3463 = vsel %vm3461, %v3462, %v3460
  %v3464 = vclz %v3463
  %v3465 = vsub.s32 %v3464, 2
  %vm3466 = vcmp.gt.s32.totalorder 0, %v3465
  %v3467 = vsel %vm3466, 0, %v3465
  %v3468 = vsub.s32 32, %v3467
  %v3469 = vshll.u32 %v3460, %v3467
  %v3470 = vshrl.u32 %v3452, %v3468
  %v3471 = vor.u32 %v3469, %v3470
  %v3472 = vsub.s32 4294967266, %v3467
  %v3473 = vadd.s32 %v3472, 127
  %v3474 = vshll.u32 %v3473, 23
  %v3475 = vor.u32 4788187, %v3474
  %v3476 = vand.u32 2147483647, %v3475
  %v3478 = vcvt.s32.f32 %v3471
  %v3479 = vmul.f32 %v3478, %v3476
  %v3480 = vxor.u32 %v3479, 2147483648
  %v3481 = vsel %vm3398, %v3480, %v3479
  %v3482 = vsub.s32 4, %v3458
  %v3483 = vsel %vm3398, %v3482, %v3458
  %v3484 = vsel %vm3397, %v508, %v3481
  %v3485 = vsel %vm3397, 0, %v3483
  %v3486 = vcosq.f32.pop %v3484
  %v3487 = vsinq.f32.pop %v3484
  %vm3488 = vweird.f32 %v508
  %v3489 = vadd.s32 %v3485, 3
  %v3490 = vand.u32 %v3489, 3
  %vm3491 = vcmp.lt.s32.totalorder %v3490, 2
  %vm3492 = vcmp.eq.s32.totalorder %v3490, 0
  %v3493 = vxor.u32 %v3487, 2147483648
  %v3494 = vsel %vm3492, %v3486, %v3493
  %vm3495 = vcmp.eq.s32.totalorder %v3490, 2
  %v3496 = vxor.u32 %v3486, 2147483648
  %v3497 = vsel %vm3495, %v3496, %v3487
  %v3498 = vsel %vm3491, %v3494, %v3497
  %v3499 = vsel %vm3488, nan, %v3498
  %v3500 = vand.u32 2147483647, %v509
  %vm3501 = vcmp.le.f32.partialorder %v3500, 0.7853982
  %vm3502 = vcmp.lt.s32.totalorder %v509, 0
  %v3503 = vand.u32 %v509, 2139095040
  %v3504 = vshrl.u32 %v3503, 23
  %v3505 = vsub.s32 %v3504, 127
  %v3506 = vand.u32 2147483647, %v509
  %v3507 = vand.u32 %v3506, 8388607
  %v3508 = vor.u32 %v3507, 8388608
  %v3509 = vsub.s32 0, %v3508
  %v3510 = vadd.s32 %v3505, 1
  %vm3511 = vcmp.gt.s32.totalorder %v3510, 0
  %v3512 = vsel %vm3511, %v3510, 0
  %v3513 = vshrl.u32 %v3512, 5
  %v3514 = vand.u32 %v3512, 31
  %v3515 = vsub.s32 32, %v3514
  %v3516 = vshrl.u32 683565275, %v3515
  %v3517 = vshll.u32 683565275, %v3514
  %v3518 = vshrl.u32 2475754826, %v3515
  %v3519 = vor.u32 %v3517, %v3518
  %v3520 = vshll.u32 2475754826, %v3514
  %v3521 = vshrl.u32 2131351028, %v3515
  %v3522 = vor.u32 %v3520, %v3521
  %v3523 = vshll.u32 2131351028, %v3514
  %v3524 = vshrl.u32 2102212464, %v3515
  %v3525 = vor.u32 %v3523, %v3524
  %v3526 = vshll.u32 2102212464, %v3514
  %v3527 = vshrl.u32 920167782, %v3515
  %v3528 = vor.u32 %v3526, %v3527
  %v3529 = vshll.u32 920167782, %v3514
  %v3530 = vshrl.u32 1326507024, %v3515
  %v3531 = vor.u32 %v3529, %v3530
  %vm3532 = vcmp.lt.s32.totalorder %v3513, 1
  %vm3533 = vcmp.lt.s32.totalorder %v3513, 2
  %vm3534 = vcmp.lt.s32.totalorder %v3513, 3
  %vm3535 = vcmp.lt.s32.totalorder %v3513, 4
  %v3536 = vsel %vm3532, %v3516, %v3519
  %v3537 = vsel %vm3535, %v3525, 2102212464
  %v3538 = vsel %vm3534, %v3522, %v3537
  %v3539 = vsel %vm3533, %v3536, %v3538
  %v3540 = vsel %vm3532, %v3519, %v3522
  %v3541 = vsel %vm3535, %v3528, 920167782
  %v3542 = vsel %vm3534, %v3525, %v3541
  %v3543 = vsel %vm3533, %v3540, %v3542
  %v3544 = vsel %vm3532, %v3522, %v3525
  %v3545 = vsel %vm3535, %v3531, 1326507024
  %v3546 = vsel %vm3534, %v3528, %v3545
  %v3547 = vsel %vm3533, %v3544, %v3546
  %v3548 = vshll.u32 %v3508, 8
  %v3549 = vmul.u32.u64.compose %v3548, %v3547
  %v3550 = vextract.low.u32 %v3549
  %v3551 = vextract.high.u32 %v3549
  %v3552 = vmul.u32.u64.compose %v3548, %v3543
  %v3553 = vextract.low.u32 %v3552
  %v3554 = vextract.high.u32 %v3552
  %v3555 = vmul.u32 %v3548, %v3539
  %v3556 = vadd.s32 %v3551, %v3553
  %vm3557 = vc.u32 %v3551, %v3553
  %v3558 = vadd.s32 %v3554, 1
  %v3559 = vsel %vm3557, %v3558, %v3554
  %v3560 = vadd.s32 %v3555, %v3559
  %v3561 = vadd.s32 %v3560, 536870912
  %v3562 = vshrl.u32 %v3561, 30
  %v3563 = vshll.u32 %v3562, 30
  %v3564 = vsub.s32 %v3560, %v3563
  %vm3565 = vcmp.lt.s32.totalorder %v3564, 0
  %v3566 = vsub.s32 0, %v3564
  %v3567 = vsel %vm3565, %v3566, %v3564
  %v3568 = vclz %v3567
  %v3569 = vsub.s32 %v3568, 2
  %vm3570 = vcmp.gt.s32.totalorder 0, %v3569
  %v3571 = vsel %vm3570, 0, %v3569
  %v3572 = vsub.s32 32, %v3571
  %v3573 = vshll.u32 %v3564, %v3571
  %v3574 = vshrl.u32 %v3556, %v3572
  %v3575 = vor.u32 %v3573, %v3574
  %v3576 = vsub.s32 4294967266, %v3571
  %v3577 = vadd.s32 %v3576, 127
  %v3578 = vshll.u32 %v3577, 23
  %v3579 = vor.u32 4788187, %v3578
  %v3580 = vand.u32 2147483647, %v3579
  %v3582 = vcvt.s32.f32 %v3575
  %v3583 = vmul.f32 %v3582, %v3580
  %v3584 = vxor.u32 %v3583, 2147483648
  %v3585 = vsel %vm3502, %v3584, %v3583
  %v3586 = vsub.s32 4, %v3562
  %v3587 = vsel %vm3502, %v3586, %v3562
  %v3588 = vsel %vm3501, %v509, %v3585
  %v3589 = vsel %vm3501, 0, %v3587
  %v3590 = vcosq.f32.pop %v3588
  %v3591 = vsinq.f32.pop %v3588
  %vm3592 = vweird.f32 %v509
  %v3593 = vadd.s32 %v3589, 3
  %v3594 = vand.u32 %v3593, 3
  %vm3595 = vcmp.lt.s32.totalorder %v3594, 2
  %vm3596 = vcmp.eq.s32.totalorder %v3594, 0
  %v3597 = vxor.u32 %v3591, 2147483648
  %v3598 = vsel %vm3596, %v3590, %v3597
  %vm3599 = vcmp.eq.s32.totalorder %v3594, 2
  %v3600 = vxor.u32 %v3590, 2147483648
  %v3601 = vsel %vm3599, %v3600, %v3591
  %v3602 = vsel %vm3595, %v3598, %v3601
  %v3603 = vsel %vm3592, nan, %v3602
  %v3604 = vand.u32 2147483647, %v510
  %vm3605 = vcmp.le.f32.partialorder %v3604, 0.7853982
  %vm3606 = vcmp.lt.s32.totalorder %v510, 0
  %v3607 = vand.u32 %v510, 2139095040
  %v3608 = vshrl.u32 %v3607, 23
  %v3609 = vsub.s32 %v3608, 127
  %v3610 = vand.u32 2147483647, %v510
  %v3611 = vand.u32 %v3610, 8388607
  %v3612 = vor.u32 %v3611, 8388608
  %v3613 = vsub.s32 0, %v3612
  %v3614 = vadd.s32 %v3609, 1
  %vm3615 = vcmp.gt.s32.totalorder %v3614, 0
  %v3616 = vsel %vm3615, %v3614, 0
  %v3617 = vshrl.u32 %v3616, 5
  %v3618 = vand.u32 %v3616, 31
  %v3619 = vsub.s32 32, %v3618
  %v3620 = vshrl.u32 683565275, %v3619
  %v3621 = vshll.u32 683565275, %v3618
  %v3622 = vshrl.u32 2475754826, %v3619
  %v3623 = vor.u32 %v3621, %v3622
  %v3624 = vshll.u32 2475754826, %v3618
  %v3625 = vshrl.u32 2131351028, %v3619
  %v3626 = vor.u32 %v3624, %v3625
  %v3627 = vshll.u32 2131351028, %v3618
  %v3628 = vshrl.u32 2102212464, %v3619
  %v3629 = vor.u32 %v3627, %v3628
  %v3630 = vshll.u32 2102212464, %v3618
  %v3631 = vshrl.u32 920167782, %v3619
  %v3632 = vor.u32 %v3630, %v3631
  %v3633 = vshll.u32 920167782, %v3618
  %v3634 = vshrl.u32 1326507024, %v3619
  %v3635 = vor.u32 %v3633, %v3634
  %vm3636 = vcmp.lt.s32.totalorder %v3617, 1
  %vm3637 = vcmp.lt.s32.totalorder %v3617, 2
  %vm3638 = vcmp.lt.s32.totalorder %v3617, 3
  %vm3639 = vcmp.lt.s32.totalorder %v3617, 4
  %v3640 = vsel %vm3636, %v3620, %v3623
  %v3641 = vsel %vm3639, %v3629, 2102212464
  %v3642 = vsel %vm3638, %v3626, %v3641
  %v3643 = vsel %vm3637, %v3640, %v3642
  %v3644 = vsel %vm3636, %v3623, %v3626
  %v3645 = vsel %vm3639, %v3632, 920167782
  %v3646 = vsel %vm3638, %v3629, %v3645
  %v3647 = vsel %vm3637, %v3644, %v3646
  %v3648 = vsel %vm3636, %v3626, %v3629
  %v3649 = vsel %vm3639, %v3635, 1326507024
  %v3650 = vsel %vm3638, %v3632, %v3649
  %v3651 = vsel %vm3637, %v3648, %v3650
  %v3652 = vshll.u32 %v3612, 8
  %v3653 = vmul.u32.u64.compose %v3652, %v3651
  %v3654 = vextract.low.u32 %v3653
  %v3655 = vextract.high.u32 %v3653
  %v3656 = vmul.u32.u64.compose %v3652, %v3647
  %v3657 = vextract.low.u32 %v3656
  %v3658 = vextract.high.u32 %v3656
  %v3659 = vmul.u32 %v3652, %v3643
  %v3660 = vadd.s32 %v3655, %v3657
  %vm3661 = vc.u32 %v3655, %v3657
  %v3662 = vadd.s32 %v3658, 1
  %v3663 = vsel %vm3661, %v3662, %v3658
  %v3664 = vadd.s32 %v3659, %v3663
  %v3665 = vadd.s32 %v3664, 536870912
  %v3666 = vshrl.u32 %v3665, 30
  %v3667 = vshll.u32 %v3666, 30
  %v3668 = vsub.s32 %v3664, %v3667
  %vm3669 = vcmp.lt.s32.totalorder %v3668, 0
  %v3670 = vsub.s32 0, %v3668
  %v3671 = vsel %vm3669, %v3670, %v3668
  %v3672 = vclz %v3671
  %v3673 = vsub.s32 %v3672, 2
  %vm3674 = vcmp.gt.s32.totalorder 0, %v3673
  %v3675 = vsel %vm3674, 0, %v3673
  %v3676 = vsub.s32 32, %v3675
  %v3677 = vshll.u32 %v3668, %v3675
  %v3678 = vshrl.u32 %v3660, %v3676
  %v3679 = vor.u32 %v3677, %v3678
  %v3680 = vsub.s32 4294967266, %v3675
  %v3681 = vadd.s32 %v3680, 127
  %v3682 = vshll.u32 %v3681, 23
  %v3683 = vor.u32 4788187, %v3682
  %v3684 = vand.u32 2147483647, %v3683
  %v3686 = vcvt.s32.f32 %v3679
  %v3687 = vmul.f32 %v3686, %v3684
  %v3688 = vxor.u32 %v3687, 2147483648
  %v3689 = vsel %vm3606, %v3688, %v3687
  %v3690 = vsub.s32 4, %v3666
  %v3691 = vsel %vm3606, %v3690, %v3666
  %v3692 = vsel %vm3605, %v510, %v3689
  %v3693 = vsel %vm3605, 0, %v3691
  %v3694 = vcosq.f32.pop %v3692
  %v3695 = vsinq.f32.pop %v3692
  %vm3696 = vweird.f32 %v510
  %v3697 = vadd.s32 %v3693, 3
  %v3698 = vand.u32 %v3697, 3
  %vm3699 = vcmp.lt.s32.totalorder %v3698, 2
  %vm3700 = vcmp.eq.s32.totalorder %v3698, 0
  %v3701 = vxor.u32 %v3695, 2147483648
  %v3702 = vsel %vm3700, %v3694, %v3701
  %vm3703 = vcmp.eq.s32.totalorder %v3698, 2
  %v3704 = vxor.u32 %v3694, 2147483648
  %v3705 = vsel %vm3703, %v3704, %v3695
  %v3706 = vsel %vm3699, %v3702, %v3705
  %v3707 = vsel %vm3696, nan, %v3706
  %v3708 = vand.u32 2147483647, %v511
  %vm3709 = vcmp.le.f32.partialorder %v3708, 0.7853982
  %vm3710 = vcmp.lt.s32.totalorder %v511, 0
  %v3711 = vand.u32 %v511, 2139095040
  %v3712 = vshrl.u32 %v3711, 23
  %v3713 = vsub.s32 %v3712, 127
  %v3714 = vand.u32 2147483647, %v511
  %v3715 = vand.u32 %v3714, 8388607
  %v3716 = vor.u32 %v3715, 8388608
  %v3717 = vsub.s32 0, %v3716
  %v3718 = vadd.s32 %v3713, 1
  %vm3719 = vcmp.gt.s32.totalorder %v3718, 0
  %v3720 = vsel %vm3719, %v3718, 0
  %v3721 = vshrl.u32 %v3720, 5
  %v3722 = vand.u32 %v3720, 31
  %v3723 = vsub.s32 32, %v3722
  %v3724 = vshrl.u32 683565275, %v3723
  %v3725 = vshll.u32 683565275, %v3722
  %v3726 = vshrl.u32 2475754826, %v3723
  %v3727 = vor.u32 %v3725, %v3726
  %v3728 = vshll.u32 2475754826, %v3722
  %v3729 = vshrl.u32 2131351028, %v3723
  %v3730 = vor.u32 %v3728, %v3729
  %v3731 = vshll.u32 2131351028, %v3722
  %v3732 = vshrl.u32 2102212464, %v3723
  %v3733 = vor.u32 %v3731, %v3732
  %v3734 = vshll.u32 2102212464, %v3722
  %v3735 = vshrl.u32 920167782, %v3723
  %v3736 = vor.u32 %v3734, %v3735
  %v3737 = vshll.u32 920167782, %v3722
  %v3738 = vshrl.u32 1326507024, %v3723
  %v3739 = vor.u32 %v3737, %v3738
  %vm3740 = vcmp.lt.s32.totalorder %v3721, 1
  %vm3741 = vcmp.lt.s32.totalorder %v3721, 2
  %vm3742 = vcmp.lt.s32.totalorder %v3721, 3
  %vm3743 = vcmp.lt.s32.totalorder %v3721, 4
  %v3744 = vsel %vm3740, %v3724, %v3727
  %v3745 = vsel %vm3743, %v3733, 2102212464
  %v3746 = vsel %vm3742, %v3730, %v3745
  %v3747 = vsel %vm3741, %v3744, %v3746
  %v3748 = vsel %vm3740, %v3727, %v3730
  %v3749 = vsel %vm3743, %v3736, 920167782
  %v3750 = vsel %vm3742, %v3733, %v3749
  %v3751 = vsel %vm3741, %v3748, %v3750
  %v3752 = vsel %vm3740, %v3730, %v3733
  %v3753 = vsel %vm3743, %v3739, 1326507024
  %v3754 = vsel %vm3742, %v3736, %v3753
  %v3755 = vsel %vm3741, %v3752, %v3754
  %v3756 = vshll.u32 %v3716, 8
  %v3757 = vmul.u32.u64.compose %v3756, %v3755
  %v3758 = vextract.low.u32 %v3757
  %v3759 = vextract.high.u32 %v3757
  %v3760 = vmul.u32.u64.compose %v3756, %v3751
  %v3761 = vextract.low.u32 %v3760
  %v3762 = vextract.high.u32 %v3760
  %v3763 = vmul.u32 %v3756, %v3747
  %v3764 = vadd.s32 %v3759, %v3761
  %vm3765 = vc.u32 %v3759, %v3761
  %v3766 = vadd.s32 %v3762, 1
  %v3767 = vsel %vm3765, %v3766, %v3762
  %v3768 = vadd.s32 %v3763, %v3767
  %v3769 = vadd.s32 %v3768, 536870912
  %v3770 = vshrl.u32 %v3769, 30
  %v3771 = vshll.u32 %v3770, 30
  %v3772 = vsub.s32 %v3768, %v3771
  %vm3773 = vcmp.lt.s32.totalorder %v3772, 0
  %v3774 = vsub.s32 0, %v3772
  %v3775 = vsel %vm3773, %v3774, %v3772
  %v3776 = vclz %v3775
  %v3777 = vsub.s32 %v3776, 2
  %vm3778 = vcmp.gt.s32.totalorder 0, %v3777
  %v3779 = vsel %vm3778, 0, %v3777
  %v3780 = vsub.s32 32, %v3779
  %v3781 = vshll.u32 %v3772, %v3779
  %v3782 = vshrl.u32 %v3764, %v3780
  %v3783 = vor.u32 %v3781, %v3782
  %v3784 = vsub.s32 4294967266, %v3779
  %v3785 = vadd.s32 %v3784, 127
  %v3786 = vshll.u32 %v3785, 23
  %v3787 = vor.u32 4788187, %v3786
  %v3788 = vand.u32 2147483647, %v3787
  %v3790 = vcvt.s32.f32 %v3783
  %v3791 = vmul.f32 %v3790, %v3788
  %v3792 = vxor.u32 %v3791, 2147483648
  %v3793 = vsel %vm3710, %v3792, %v3791
  %v3794 = vsub.s32 4, %v3770
  %v3795 = vsel %vm3710, %v3794, %v3770
  %v3796 = vsel %vm3709, %v511, %v3793
  %v3797 = vsel %vm3709, 0, %v3795
  %v3798 = vcosq.f32.pop %v3796
  %v3799 = vsinq.f32.pop %v3796
  %vm3800 = vweird.f32 %v511
  %v3801 = vadd.s32 %v3797, 3
  %v3802 = vand.u32 %v3801, 3
  %vm3803 = vcmp.lt.s32.totalorder %v3802, 2
  %vm3804 = vcmp.eq.s32.totalorder %v3802, 0
  %v3805 = vxor.u32 %v3799, 2147483648
  %v3806 = vsel %vm3804, %v3798, %v3805
  %vm3807 = vcmp.eq.s32.totalorder %v3802, 2
  %v3808 = vxor.u32 %v3798, 2147483648
  %v3809 = vsel %vm3807, %v3808, %v3799
  %v3810 = vsel %vm3803, %v3806, %v3809
  %v3811 = vsel %vm3800, nan, %v3810
  %v3812 = vand.u32 2147483647, %v512
  %vm3813 = vcmp.le.f32.partialorder %v3812, 0.7853982
  %vm3814 = vcmp.lt.s32.totalorder %v512, 0
  %v3815 = vand.u32 %v512, 2139095040
  %v3816 = vshrl.u32 %v3815, 23
  %v3817 = vsub.s32 %v3816, 127
  %v3818 = vand.u32 2147483647, %v512
  %v3819 = vand.u32 %v3818, 8388607
  %v3820 = vor.u32 %v3819, 8388608
  %v3821 = vsub.s32 0, %v3820
  %v3822 = vadd.s32 %v3817, 1
  %vm3823 = vcmp.gt.s32.totalorder %v3822, 0
  %v3824 = vsel %vm3823, %v3822, 0
  %v3825 = vshrl.u32 %v3824, 5
  %v3826 = vand.u32 %v3824, 31
  %v3827 = vsub.s32 32, %v3826
  %v3828 = vshrl.u32 683565275, %v3827
  %v3829 = vshll.u32 683565275, %v3826
  %v3830 = vshrl.u32 2475754826, %v3827
  %v3831 = vor.u32 %v3829, %v3830
  %v3832 = vshll.u32 2475754826, %v3826
  %v3833 = vshrl.u32 2131351028, %v3827
  %v3834 = vor.u32 %v3832, %v3833
  %v3835 = vshll.u32 2131351028, %v3826
  %v3836 = vshrl.u32 2102212464, %v3827
  %v3837 = vor.u32 %v3835, %v3836
  %v3838 = vshll.u32 2102212464, %v3826
  %v3839 = vshrl.u32 920167782, %v3827
  %v3840 = vor.u32 %v3838, %v3839
  %v3841 = vshll.u32 920167782, %v3826
  %v3842 = vshrl.u32 1326507024, %v3827
  %v3843 = vor.u32 %v3841, %v3842
  %vm3844 = vcmp.lt.s32.totalorder %v3825, 1
  %vm3845 = vcmp.lt.s32.totalorder %v3825, 2
  %vm3846 = vcmp.lt.s32.totalorder %v3825, 3
  %vm3847 = vcmp.lt.s32.totalorder %v3825, 4
  %v3848 = vsel %vm3844, %v3828, %v3831
  %v3849 = vsel %vm3847, %v3837, 2102212464
  %v3850 = vsel %vm3846, %v3834, %v3849
  %v3851 = vsel %vm3845, %v3848, %v3850
  %v3852 = vsel %vm3844, %v3831, %v3834
  %v3853 = vsel %vm3847, %v3840, 920167782
  %v3854 = vsel %vm3846, %v3837, %v3853
  %v3855 = vsel %vm3845, %v3852, %v3854
  %v3856 = vsel %vm3844, %v3834, %v3837
  %v3857 = vsel %vm3847, %v3843, 1326507024
  %v3858 = vsel %vm3846, %v3840, %v3857
  %v3859 = vsel %vm3845, %v3856, %v3858
  %v3860 = vshll.u32 %v3820, 8
  %v3861 = vmul.u32.u64.compose %v3860, %v3859
  %v3862 = vextract.low.u32 %v3861
  %v3863 = vextract.high.u32 %v3861
  %v3864 = vmul.u32.u64.compose %v3860, %v3855
  %v3865 = vextract.low.u32 %v3864
  %v3866 = vextract.high.u32 %v3864
  %v3867 = vmul.u32 %v3860, %v3851
  %v3868 = vadd.s32 %v3863, %v3865
  %vm3869 = vc.u32 %v3863, %v3865
  %v3870 = vadd.s32 %v3866, 1
  %v3871 = vsel %vm3869, %v3870, %v3866
  %v3872 = vadd.s32 %v3867, %v3871
  %v3873 = vadd.s32 %v3872, 536870912
  %v3874 = vshrl.u32 %v3873, 30
  %v3875 = vshll.u32 %v3874, 30
  %v3876 = vsub.s32 %v3872, %v3875
  %vm3877 = vcmp.lt.s32.totalorder %v3876, 0
  %v3878 = vsub.s32 0, %v3876
  %v3879 = vsel %vm3877, %v3878, %v3876
  %v3880 = vclz %v3879
  %v3881 = vsub.s32 %v3880, 2
  %vm3882 = vcmp.gt.s32.totalorder 0, %v3881
  %v3883 = vsel %vm3882, 0, %v3881
  %v3884 = vsub.s32 32, %v3883
  %v3885 = vshll.u32 %v3876, %v3883
  %v3886 = vshrl.u32 %v3868, %v3884
  %v3887 = vor.u32 %v3885, %v3886
  %v3888 = vsub.s32 4294967266, %v3883
  %v3889 = vadd.s32 %v3888, 127
  %v3890 = vshll.u32 %v3889, 23
  %v3891 = vor.u32 4788187, %v3890
  %v3892 = vand.u32 2147483647, %v3891
  %v3894 = vcvt.s32.f32 %v3887
  %v3895 = vmul.f32 %v3894, %v3892
  %v3896 = vxor.u32 %v3895, 2147483648
  %v3897 = vsel %vm3814, %v3896, %v3895
  %v3898 = vsub.s32 4, %v3874
  %v3899 = vsel %vm3814, %v3898, %v3874
  %v3900 = vsel %vm3813, %v512, %v3897
  %v3901 = vsel %vm3813, 0, %v3899
  %v3902 = vcosq.f32.pop %v3900
  %v3903 = vsinq.f32.pop %v3900
  %vm3904 = vweird.f32 %v512
  %v3905 = vadd.s32 %v3901, 3
  %v3906 = vand.u32 %v3905, 3
  %vm3907 = vcmp.lt.s32.totalorder %v3906, 2
  %vm3908 = vcmp.eq.s32.totalorder %v3906, 0
  %v3909 = vxor.u32 %v3903, 2147483648
  %v3910 = vsel %vm3908, %v3902, %v3909
  %vm3911 = vcmp.eq.s32.totalorder %v3906, 2
  %v3912 = vxor.u32 %v3902, 2147483648
  %v3913 = vsel %vm3911, %v3912, %v3903
  %v3914 = vsel %vm3907, %v3910, %v3913
  %v3915 = vsel %vm3904, nan, %v3914
  %v3916 = vand.u32 2147483647, %v513
  %vm3917 = vcmp.le.f32.partialorder %v3916, 0.7853982
  %vm3918 = vcmp.lt.s32.totalorder %v513, 0
  %v3919 = vand.u32 %v513, 2139095040
  %v3920 = vshrl.u32 %v3919, 23
  %v3921 = vsub.s32 %v3920, 127
  %v3922 = vand.u32 2147483647, %v513
  %v3923 = vand.u32 %v3922, 8388607
  %v3924 = vor.u32 %v3923, 8388608
  %v3925 = vsub.s32 0, %v3924
  %v3926 = vadd.s32 %v3921, 1
  %vm3927 = vcmp.gt.s32.totalorder %v3926, 0
  %v3928 = vsel %vm3927, %v3926, 0
  %v3929 = vshrl.u32 %v3928, 5
  %v3930 = vand.u32 %v3928, 31
  %v3931 = vsub.s32 32, %v3930
  %v3932 = vshrl.u32 683565275, %v3931
  %v3933 = vshll.u32 683565275, %v3930
  %v3934 = vshrl.u32 2475754826, %v3931
  %v3935 = vor.u32 %v3933, %v3934
  %v3936 = vshll.u32 2475754826, %v3930
  %v3937 = vshrl.u32 2131351028, %v3931
  %v3938 = vor.u32 %v3936, %v3937
  %v3939 = vshll.u32 2131351028, %v3930
  %v3940 = vshrl.u32 2102212464, %v3931
  %v3941 = vor.u32 %v3939, %v3940
  %v3942 = vshll.u32 2102212464, %v3930
  %v3943 = vshrl.u32 920167782, %v3931
  %v3944 = vor.u32 %v3942, %v3943
  %v3945 = vshll.u32 920167782, %v3930
  %v3946 = vshrl.u32 1326507024, %v3931
  %v3947 = vor.u32 %v3945, %v3946
  %vm3948 = vcmp.lt.s32.totalorder %v3929, 1
  %vm3949 = vcmp.lt.s32.totalorder %v3929, 2
  %vm3950 = vcmp.lt.s32.totalorder %v3929, 3
  %vm3951 = vcmp.lt.s32.totalorder %v3929, 4
  %v3952 = vsel %vm3948, %v3932, %v3935
  %v3953 = vsel %vm3951, %v3941, 2102212464
  %v3954 = vsel %vm3950, %v3938, %v3953
  %v3955 = vsel %vm3949, %v3952, %v3954
  %v3956 = vsel %vm3948, %v3935, %v3938
  %v3957 = vsel %vm3951, %v3944, 920167782
  %v3958 = vsel %vm3950, %v3941, %v3957
  %v3959 = vsel %vm3949, %v3956, %v3958
  %v3960 = vsel %vm3948, %v3938, %v3941
  %v3961 = vsel %vm3951, %v3947, 1326507024
  %v3962 = vsel %vm3950, %v3944, %v3961
  %v3963 = vsel %vm3949, %v3960, %v3962
  %v3964 = vshll.u32 %v3924, 8
  %v3965 = vmul.u32.u64.compose %v3964, %v3963
  %v3966 = vextract.low.u32 %v3965
  %v3967 = vextract.high.u32 %v3965
  %v3968 = vmul.u32.u64.compose %v3964, %v3959
  %v3969 = vextract.low.u32 %v3968
  %v3970 = vextract.high.u32 %v3968
  %v3971 = vmul.u32 %v3964, %v3955
  %v3972 = vadd.s32 %v3967, %v3969
  %vm3973 = vc.u32 %v3967, %v3969
  %v3974 = vadd.s32 %v3970, 1
  %v3975 = vsel %vm3973, %v3974, %v3970
  %v3976 = vadd.s32 %v3971, %v3975
  %v3977 = vadd.s32 %v3976, 536870912
  %v3978 = vshrl.u32 %v3977, 30
  %v3979 = vshll.u32 %v3978, 30
  %v3980 = vsub.s32 %v3976, %v3979
  %vm3981 = vcmp.lt.s32.totalorder %v3980, 0
  %v3982 = vsub.s32 0, %v3980
  %v3983 = vsel %vm3981, %v3982, %v3980
  %v3984 = vclz %v3983
  %v3985 = vsub.s32 %v3984, 2
  %vm3986 = vcmp.gt.s32.totalorder 0, %v3985
  %v3987 = vsel %vm3986, 0, %v3985
  %v3988 = vsub.s32 32, %v3987
  %v3989 = vshll.u32 %v3980, %v3987
  %v3990 = vshrl.u32 %v3972, %v3988
  %v3991 = vor.u32 %v3989, %v3990
  %v3992 = vsub.s32 4294967266, %v3987
  %v3993 = vadd.s32 %v3992, 127
  %v3994 = vshll.u32 %v3993, 23
  %v3995 = vor.u32 4788187, %v3994
  %v3996 = vand.u32 2147483647, %v3995
  %v3998 = vcvt.s32.f32 %v3991
  %v3999 = vmul.f32 %v3998, %v3996
  %v4000 = vxor.u32 %v3999, 2147483648
  %v4001 = vsel %vm3918, %v4000, %v3999
  %v4002 = vsub.s32 4, %v3978
  %v4003 = vsel %vm3918, %v4002, %v3978
  %v4004 = vsel %vm3917, %v513, %v4001
  %v4005 = vsel %vm3917, 0, %v4003
  %v4006 = vcosq.f32.pop %v4004
  %v4007 = vsinq.f32.pop %v4004
  %vm4008 = vweird.f32 %v513
  %v4009 = vadd.s32 %v4005, 3
  %v4010 = vand.u32 %v4009, 3
  %vm4011 = vcmp.lt.s32.totalorder %v4010, 2
  %vm4012 = vcmp.eq.s32.totalorder %v4010, 0
  %v4013 = vxor.u32 %v4007, 2147483648
  %v4014 = vsel %vm4012, %v4006, %v4013
  %vm4015 = vcmp.eq.s32.totalorder %v4010, 2
  %v4016 = vxor.u32 %v4006, 2147483648
  %v4017 = vsel %vm4015, %v4016, %v4007
  %v4018 = vsel %vm4011, %v4014, %v4017
  %v4019 = vsel %vm4008, nan, %v4018
  %v4020 = vand.u32 2147483647, %v514
  %vm4021 = vcmp.le.f32.partialorder %v4020, 0.7853982
  %vm4022 = vcmp.lt.s32.totalorder %v514, 0
  %v4023 = vand.u32 %v514, 2139095040
  %v4024 = vshrl.u32 %v4023, 23
  %v4025 = vsub.s32 %v4024, 127
  %v4026 = vand.u32 2147483647, %v514
  %v4027 = vand.u32 %v4026, 8388607
  %v4028 = vor.u32 %v4027, 8388608
  %v4029 = vsub.s32 0, %v4028
  %v4030 = vadd.s32 %v4025, 1
  %vm4031 = vcmp.gt.s32.totalorder %v4030, 0
  %v4032 = vsel %vm4031, %v4030, 0
  %v4033 = vshrl.u32 %v4032, 5
  %v4034 = vand.u32 %v4032, 31
  %v4035 = vsub.s32 32, %v4034
  %v4036 = vshrl.u32 683565275, %v4035
  %v4037 = vshll.u32 683565275, %v4034
  %v4038 = vshrl.u32 2475754826, %v4035
  %v4039 = vor.u32 %v4037, %v4038
  %v4040 = vshll.u32 2475754826, %v4034
  %v4041 = vshrl.u32 2131351028, %v4035
  %v4042 = vor.u32 %v4040, %v4041
  %v4043 = vshll.u32 2131351028, %v4034
  %v4044 = vshrl.u32 2102212464, %v4035
  %v4045 = vor.u32 %v4043, %v4044
  %v4046 = vshll.u32 2102212464, %v4034
  %v4047 = vshrl.u32 920167782, %v4035
  %v4048 = vor.u32 %v4046, %v4047
  %v4049 = vshll.u32 920167782, %v4034
  %v4050 = vshrl.u32 1326507024, %v4035
  %v4051 = vor.u32 %v4049, %v4050
  %vm4052 = vcmp.lt.s32.totalorder %v4033, 1
  %vm4053 = vcmp.lt.s32.totalorder %v4033, 2
  %vm4054 = vcmp.lt.s32.totalorder %v4033, 3
  %vm4055 = vcmp.lt.s32.totalorder %v4033, 4
  %v4056 = vsel %vm4052, %v4036, %v4039
  %v4057 = vsel %vm4055, %v4045, 2102212464
  %v4058 = vsel %vm4054, %v4042, %v4057
  %v4059 = vsel %vm4053, %v4056, %v4058
  %v4060 = vsel %vm4052, %v4039, %v4042
  %v4061 = vsel %vm4055, %v4048, 920167782
  %v4062 = vsel %vm4054, %v4045, %v4061
  %v4063 = vsel %vm4053, %v4060, %v4062
  %v4064 = vsel %vm4052, %v4042, %v4045
  %v4065 = vsel %vm4055, %v4051, 1326507024
  %v4066 = vsel %vm4054, %v4048, %v4065
  %v4067 = vsel %vm4053, %v4064, %v4066
  %v4068 = vshll.u32 %v4028, 8
  %v4069 = vmul.u32.u64.compose %v4068, %v4067
  %v4070 = vextract.low.u32 %v4069
  %v4071 = vextract.high.u32 %v4069
  %v4072 = vmul.u32.u64.compose %v4068, %v4063
  %v4073 = vextract.low.u32 %v4072
  %v4074 = vextract.high.u32 %v4072
  %v4075 = vmul.u32 %v4068, %v4059
  %v4076 = vadd.s32 %v4071, %v4073
  %vm4077 = vc.u32 %v4071, %v4073
  %v4078 = vadd.s32 %v4074, 1
  %v4079 = vsel %vm4077, %v4078, %v4074
  %v4080 = vadd.s32 %v4075, %v4079
  %v4081 = vadd.s32 %v4080, 536870912
  %v4082 = vshrl.u32 %v4081, 30
  %v4083 = vshll.u32 %v4082, 30
  %v4084 = vsub.s32 %v4080, %v4083
  %vm4085 = vcmp.lt.s32.totalorder %v4084, 0
  %v4086 = vsub.s32 0, %v4084
  %v4087 = vsel %vm4085, %v4086, %v4084
  %v4088 = vclz %v4087
  %v4089 = vsub.s32 %v4088, 2
  %vm4090 = vcmp.gt.s32.totalorder 0, %v4089
  %v4091 = vsel %vm4090, 0, %v4089
  %v4092 = vsub.s32 32, %v4091
  %v4093 = vshll.u32 %v4084, %v4091
  %v4094 = vshrl.u32 %v4076, %v4092
  %v4095 = vor.u32 %v4093, %v4094
  %v4096 = vsub.s32 4294967266, %v4091
  %v4097 = vadd.s32 %v4096, 127
  %v4098 = vshll.u32 %v4097, 23
  %v4099 = vor.u32 4788187, %v4098
  %v4100 = vand.u32 2147483647, %v4099
  %v4102 = vcvt.s32.f32 %v4095
  %v4103 = vmul.f32 %v4102, %v4100
  %v4104 = vxor.u32 %v4103, 2147483648
  %v4105 = vsel %vm4022, %v4104, %v4103
  %v4106 = vsub.s32 4, %v4082
  %v4107 = vsel %vm4022, %v4106, %v4082
  %v4108 = vsel %vm4021, %v514, %v4105
  %v4109 = vsel %vm4021, 0, %v4107
  %v4110 = vcosq.f32.pop %v4108
  %v4111 = vsinq.f32.pop %v4108
  %vm4112 = vweird.f32 %v514
  %v4113 = vadd.s32 %v4109, 3
  %v4114 = vand.u32 %v4113, 3
  %vm4115 = vcmp.lt.s32.totalorder %v4114, 2
  %vm4116 = vcmp.eq.s32.totalorder %v4114, 0
  %v4117 = vxor.u32 %v4111, 2147483648
  %v4118 = vsel %vm4116, %v4110, %v4117
  %vm4119 = vcmp.eq.s32.totalorder %v4114, 2
  %v4120 = vxor.u32 %v4110, 2147483648
  %v4121 = vsel %vm4119, %v4120, %v4111
  %v4122 = vsel %vm4115, %v4118, %v4121
  %v4123 = vsel %vm4112, nan, %v4122
  %v4124 = vand.u32 2147483647, %v515
  %vm4125 = vcmp.le.f32.partialorder %v4124, 0.7853982
  %vm4126 = vcmp.lt.s32.totalorder %v515, 0
  %v4127 = vand.u32 %v515, 2139095040
  %v4128 = vshrl.u32 %v4127, 23
  %v4129 = vsub.s32 %v4128, 127
  %v4130 = vand.u32 2147483647, %v515
  %v4131 = vand.u32 %v4130, 8388607
  %v4132 = vor.u32 %v4131, 8388608
  %v4133 = vsub.s32 0, %v4132
  %v4134 = vadd.s32 %v4129, 1
  %vm4135 = vcmp.gt.s32.totalorder %v4134, 0
  %v4136 = vsel %vm4135, %v4134, 0
  %v4137 = vshrl.u32 %v4136, 5
  %v4138 = vand.u32 %v4136, 31
  %v4139 = vsub.s32 32, %v4138
  %v4140 = vshrl.u32 683565275, %v4139
  %v4141 = vshll.u32 683565275, %v4138
  %v4142 = vshrl.u32 2475754826, %v4139
  %v4143 = vor.u32 %v4141, %v4142
  %v4144 = vshll.u32 2475754826, %v4138
  %v4145 = vshrl.u32 2131351028, %v4139
  %v4146 = vor.u32 %v4144, %v4145
  %v4147 = vshll.u32 2131351028, %v4138
  %v4148 = vshrl.u32 2102212464, %v4139
  %v4149 = vor.u32 %v4147, %v4148
  %v4150 = vshll.u32 2102212464, %v4138
  %v4151 = vshrl.u32 920167782, %v4139
  %v4152 = vor.u32 %v4150, %v4151
  %v4153 = vshll.u32 920167782, %v4138
  %v4154 = vshrl.u32 1326507024, %v4139
  %v4155 = vor.u32 %v4153, %v4154
  %vm4156 = vcmp.lt.s32.totalorder %v4137, 1
  %vm4157 = vcmp.lt.s32.totalorder %v4137, 2
  %vm4158 = vcmp.lt.s32.totalorder %v4137, 3
  %vm4159 = vcmp.lt.s32.totalorder %v4137, 4
  %v4160 = vsel %vm4156, %v4140, %v4143
  %v4161 = vsel %vm4159, %v4149, 2102212464
  %v4162 = vsel %vm4158, %v4146, %v4161
  %v4163 = vsel %vm4157, %v4160, %v4162
  %v4164 = vsel %vm4156, %v4143, %v4146
  %v4165 = vsel %vm4159, %v4152, 920167782
  %v4166 = vsel %vm4158, %v4149, %v4165
  %v4167 = vsel %vm4157, %v4164, %v4166
  %v4168 = vsel %vm4156, %v4146, %v4149
  %v4169 = vsel %vm4159, %v4155, 1326507024
  %v4170 = vsel %vm4158, %v4152, %v4169
  %v4171 = vsel %vm4157, %v4168, %v4170
  %v4172 = vshll.u32 %v4132, 8
  %v4173 = vmul.u32.u64.compose %v4172, %v4171
  %v4174 = vextract.low.u32 %v4173
  %v4175 = vextract.high.u32 %v4173
  %v4176 = vmul.u32.u64.compose %v4172, %v4167
  %v4177 = vextract.low.u32 %v4176
  %v4178 = vextract.high.u32 %v4176
  %v4179 = vmul.u32 %v4172, %v4163
  %v4180 = vadd.s32 %v4175, %v4177
  %vm4181 = vc.u32 %v4175, %v4177
  %v4182 = vadd.s32 %v4178, 1
  %v4183 = vsel %vm4181, %v4182, %v4178
  %v4184 = vadd.s32 %v4179, %v4183
  %v4185 = vadd.s32 %v4184, 536870912
  %v4186 = vshrl.u32 %v4185, 30
  %v4187 = vshll.u32 %v4186, 30
  %v4188 = vsub.s32 %v4184, %v4187
  %vm4189 = vcmp.lt.s32.totalorder %v4188, 0
  %v4190 = vsub.s32 0, %v4188
  %v4191 = vsel %vm4189, %v4190, %v4188
  %v4192 = vclz %v4191
  %v4193 = vsub.s32 %v4192, 2
  %vm4194 = vcmp.gt.s32.totalorder 0, %v4193
  %v4195 = vsel %vm4194, 0, %v4193
  %v4196 = vsub.s32 32, %v4195
  %v4197 = vshll.u32 %v4188, %v4195
  %v4198 = vshrl.u32 %v4180, %v4196
  %v4199 = vor.u32 %v4197, %v4198
  %v4200 = vsub.s32 4294967266, %v4195
  %v4201 = vadd.s32 %v4200, 127
  %v4202 = vshll.u32 %v4201, 23
  %v4203 = vor.u32 4788187, %v4202
  %v4204 = vand.u32 2147483647, %v4203
  %v4206 = vcvt.s32.f32 %v4199
  %v4207 = vmul.f32 %v4206, %v4204
  %v4208 = vxor.u32 %v4207, 2147483648
  %v4209 = vsel %vm4126, %v4208, %v4207
  %v4210 = vsub.s32 4, %v4186
  %v4211 = vsel %vm4126, %v4210, %v4186
  %v4212 = vsel %vm4125, %v515, %v4209
  %v4213 = vsel %vm4125, 0, %v4211
  %v4214 = vcosq.f32.pop %v4212
  %v4215 = vsinq.f32.pop %v4212
  %vm4216 = vweird.f32 %v515
  %v4217 = vadd.s32 %v4213, 3
  %v4218 = vand.u32 %v4217, 3
  %vm4219 = vcmp.lt.s32.totalorder %v4218, 2
  %vm4220 = vcmp.eq.s32.totalorder %v4218, 0
  %v4221 = vxor.u32 %v4215, 2147483648
  %v4222 = vsel %vm4220, %v4214, %v4221
  %vm4223 = vcmp.eq.s32.totalorder %v4218, 2
  %v4224 = vxor.u32 %v4214, 2147483648
  %v4225 = vsel %vm4223, %v4224, %v4215
  %v4226 = vsel %vm4219, %v4222, %v4225
  %v4227 = vsel %vm4216, nan, %v4226
  %v4228 = vand.u32 2147483647, %v516
  %vm4229 = vcmp.le.f32.partialorder %v4228, 0.7853982
  %vm4230 = vcmp.lt.s32.totalorder %v516, 0
  %v4231 = vand.u32 %v516, 2139095040
  %v4232 = vshrl.u32 %v4231, 23
  %v4233 = vsub.s32 %v4232, 127
  %v4234 = vand.u32 2147483647, %v516
  %v4235 = vand.u32 %v4234, 8388607
  %v4236 = vor.u32 %v4235, 8388608
  %v4237 = vsub.s32 0, %v4236
  %v4238 = vadd.s32 %v4233, 1
  %vm4239 = vcmp.gt.s32.totalorder %v4238, 0
  %v4240 = vsel %vm4239, %v4238, 0
  %v4241 = vshrl.u32 %v4240, 5
  %v4242 = vand.u32 %v4240, 31
  %v4243 = vsub.s32 32, %v4242
  %v4244 = vshrl.u32 683565275, %v4243
  %v4245 = vshll.u32 683565275, %v4242
  %v4246 = vshrl.u32 2475754826, %v4243
  %v4247 = vor.u32 %v4245, %v4246
  %v4248 = vshll.u32 2475754826, %v4242
  %v4249 = vshrl.u32 2131351028, %v4243
  %v4250 = vor.u32 %v4248, %v4249
  %v4251 = vshll.u32 2131351028, %v4242
  %v4252 = vshrl.u32 2102212464, %v4243
  %v4253 = vor.u32 %v4251, %v4252
  %v4254 = vshll.u32 2102212464, %v4242
  %v4255 = vshrl.u32 920167782, %v4243
  %v4256 = vor.u32 %v4254, %v4255
  %v4257 = vshll.u32 920167782, %v4242
  %v4258 = vshrl.u32 1326507024, %v4243
  %v4259 = vor.u32 %v4257, %v4258
  %vm4260 = vcmp.lt.s32.totalorder %v4241, 1
  %vm4261 = vcmp.lt.s32.totalorder %v4241, 2
  %vm4262 = vcmp.lt.s32.totalorder %v4241, 3
  %vm4263 = vcmp.lt.s32.totalorder %v4241, 4
  %v4264 = vsel %vm4260, %v4244, %v4247
  %v4265 = vsel %vm4263, %v4253, 2102212464
  %v4266 = vsel %vm4262, %v4250, %v4265
  %v4267 = vsel %vm4261, %v4264, %v4266
  %v4268 = vsel %vm4260, %v4247, %v4250
  %v4269 = vsel %vm4263, %v4256, 920167782
  %v4270 = vsel %vm4262, %v4253, %v4269
  %v4271 = vsel %vm4261, %v4268, %v4270
  %v4272 = vsel %vm4260, %v4250, %v4253
  %v4273 = vsel %vm4263, %v4259, 1326507024
  %v4274 = vsel %vm4262, %v4256, %v4273
  %v4275 = vsel %vm4261, %v4272, %v4274
  %v4276 = vshll.u32 %v4236, 8
  %v4277 = vmul.u32.u64.compose %v4276, %v4275
  %v4278 = vextract.low.u32 %v4277
  %v4279 = vextract.high.u32 %v4277
  %v4280 = vmul.u32.u64.compose %v4276, %v4271
  %v4281 = vextract.low.u32 %v4280
  %v4282 = vextract.high.u32 %v4280
  %v4283 = vmul.u32 %v4276, %v4267
  %v4284 = vadd.s32 %v4279, %v4281
  %vm4285 = vc.u32 %v4279, %v4281
  %v4286 = vadd.s32 %v4282, 1
  %v4287 = vsel %vm4285, %v4286, %v4282
  %v4288 = vadd.s32 %v4283, %v4287
  %v4289 = vadd.s32 %v4288, 536870912
  %v4290 = vshrl.u32 %v4289, 30
  %v4291 = vshll.u32 %v4290, 30
  %v4292 = vsub.s32 %v4288, %v4291
  %vm4293 = vcmp.lt.s32.totalorder %v4292, 0
  %v4294 = vsub.s32 0, %v4292
  %v4295 = vsel %vm4293, %v4294, %v4292
  %v4296 = vclz %v4295
  %v4297 = vsub.s32 %v4296, 2
  %vm4298 = vcmp.gt.s32.totalorder 0, %v4297
  %v4299 = vsel %vm4298, 0, %v4297
  %v4300 = vsub.s32 32, %v4299
  %v4301 = vshll.u32 %v4292, %v4299
  %v4302 = vshrl.u32 %v4284, %v4300
  %v4303 = vor.u32 %v4301, %v4302
  %v4304 = vsub.s32 4294967266, %v4299
  %v4305 = vadd.s32 %v4304, 127
  %v4306 = vshll.u32 %v4305, 23
  %v4307 = vor.u32 4788187, %v4306
  %v4308 = vand.u32 2147483647, %v4307
  %v4310 = vcvt.s32.f32 %v4303
  %v4311 = vmul.f32 %v4310, %v4308
  %v4312 = vxor.u32 %v4311, 2147483648
  %v4313 = vsel %vm4230, %v4312, %v4311
  %v4314 = vsub.s32 4, %v4290
  %v4315 = vsel %vm4230, %v4314, %v4290
  %v4316 = vsel %vm4229, %v516, %v4313
  %v4317 = vsel %vm4229, 0, %v4315
  %v4318 = vcosq.f32.pop %v4316
  %v4319 = vsinq.f32.pop %v4316
  %vm4320 = vweird.f32 %v516
  %v4321 = vadd.s32 %v4317, 3
  %v4322 = vand.u32 %v4321, 3
  %vm4323 = vcmp.lt.s32.totalorder %v4322, 2
  %vm4324 = vcmp.eq.s32.totalorder %v4322, 0
  %v4325 = vxor.u32 %v4319, 2147483648
  %v4326 = vsel %vm4324, %v4318, %v4325
  %vm4327 = vcmp.eq.s32.totalorder %v4322, 2
  %v4328 = vxor.u32 %v4318, 2147483648
  %v4329 = vsel %vm4327, %v4328, %v4319
  %v4330 = vsel %vm4323, %v4326, %v4329
  %v4331 = vsel %vm4320, nan, %v4330
  %v4332 = vand.u32 2147483647, %v517
  %vm4333 = vcmp.le.f32.partialorder %v4332, 0.7853982
  %vm4334 = vcmp.lt.s32.totalorder %v517, 0
  %v4335 = vand.u32 %v517, 2139095040
  %v4336 = vshrl.u32 %v4335, 23
  %v4337 = vsub.s32 %v4336, 127
  %v4338 = vand.u32 2147483647, %v517
  %v4339 = vand.u32 %v4338, 8388607
  %v4340 = vor.u32 %v4339, 8388608
  %v4341 = vsub.s32 0, %v4340
  %v4342 = vadd.s32 %v4337, 1
  %vm4343 = vcmp.gt.s32.totalorder %v4342, 0
  %v4344 = vsel %vm4343, %v4342, 0
  %v4345 = vshrl.u32 %v4344, 5
  %v4346 = vand.u32 %v4344, 31
  %v4347 = vsub.s32 32, %v4346
  %v4348 = vshrl.u32 683565275, %v4347
  %v4349 = vshll.u32 683565275, %v4346
  %v4350 = vshrl.u32 2475754826, %v4347
  %v4351 = vor.u32 %v4349, %v4350
  %v4352 = vshll.u32 2475754826, %v4346
  %v4353 = vshrl.u32 2131351028, %v4347
  %v4354 = vor.u32 %v4352, %v4353
  %v4355 = vshll.u32 2131351028, %v4346
  %v4356 = vshrl.u32 2102212464, %v4347
  %v4357 = vor.u32 %v4355, %v4356
  %v4358 = vshll.u32 2102212464, %v4346
  %v4359 = vshrl.u32 920167782, %v4347
  %v4360 = vor.u32 %v4358, %v4359
  %v4361 = vshll.u32 920167782, %v4346
  %v4362 = vshrl.u32 1326507024, %v4347
  %v4363 = vor.u32 %v4361, %v4362
  %vm4364 = vcmp.lt.s32.totalorder %v4345, 1
  %vm4365 = vcmp.lt.s32.totalorder %v4345, 2
  %vm4366 = vcmp.lt.s32.totalorder %v4345, 3
  %vm4367 = vcmp.lt.s32.totalorder %v4345, 4
  %v4368 = vsel %vm4364, %v4348, %v4351
  %v4369 = vsel %vm4367, %v4357, 2102212464
  %v4370 = vsel %vm4366, %v4354, %v4369
  %v4371 = vsel %vm4365, %v4368, %v4370
  %v4372 = vsel %vm4364, %v4351, %v4354
  %v4373 = vsel %vm4367, %v4360, 920167782
  %v4374 = vsel %vm4366, %v4357, %v4373
  %v4375 = vsel %vm4365, %v4372, %v4374
  %v4376 = vsel %vm4364, %v4354, %v4357
  %v4377 = vsel %vm4367, %v4363, 1326507024
  %v4378 = vsel %vm4366, %v4360, %v4377
  %v4379 = vsel %vm4365, %v4376, %v4378
  %v4380 = vshll.u32 %v4340, 8
  %v4381 = vmul.u32.u64.compose %v4380, %v4379
  %v4382 = vextract.low.u32 %v4381
  %v4383 = vextract.high.u32 %v4381
  %v4384 = vmul.u32.u64.compose %v4380, %v4375
  %v4385 = vextract.low.u32 %v4384
  %v4386 = vextract.high.u32 %v4384
  %v4387 = vmul.u32 %v4380, %v4371
  %v4388 = vadd.s32 %v4383, %v4385
  %vm4389 = vc.u32 %v4383, %v4385
  %v4390 = vadd.s32 %v4386, 1
  %v4391 = vsel %vm4389, %v4390, %v4386
  %v4392 = vadd.s32 %v4387, %v4391
  %v4393 = vadd.s32 %v4392, 536870912
  %v4394 = vshrl.u32 %v4393, 30
  %v4395 = vshll.u32 %v4394, 30
  %v4396 = vsub.s32 %v4392, %v4395
  %vm4397 = vcmp.lt.s32.totalorder %v4396, 0
  %v4398 = vsub.s32 0, %v4396
  %v4399 = vsel %vm4397, %v4398, %v4396
  %v4400 = vclz %v4399
  %v4401 = vsub.s32 %v4400, 2
  %vm4402 = vcmp.gt.s32.totalorder 0, %v4401
  %v4403 = vsel %vm4402, 0, %v4401
  %v4404 = vsub.s32 32, %v4403
  %v4405 = vshll.u32 %v4396, %v4403
  %v4406 = vshrl.u32 %v4388, %v4404
  %v4407 = vor.u32 %v4405, %v4406
  %v4408 = vsub.s32 4294967266, %v4403
  %v4409 = vadd.s32 %v4408, 127
  %v4410 = vshll.u32 %v4409, 23
  %v4411 = vor.u32 4788187, %v4410
  %v4412 = vand.u32 2147483647, %v4411
  %v4414 = vcvt.s32.f32 %v4407
  %v4415 = vmul.f32 %v4414, %v4412
  %v4416 = vxor.u32 %v4415, 2147483648
  %v4417 = vsel %vm4334, %v4416, %v4415
  %v4418 = vsub.s32 4, %v4394
  %v4419 = vsel %vm4334, %v4418, %v4394
  %v4420 = vsel %vm4333, %v517, %v4417
  %v4421 = vsel %vm4333, 0, %v4419
  %v4422 = vcosq.f32.pop %v4420
  %v4423 = vsinq.f32.pop %v4420
  %vm4424 = vweird.f32 %v517
  %v4425 = vadd.s32 %v4421, 3
  %v4426 = vand.u32 %v4425, 3
  %vm4427 = vcmp.lt.s32.totalorder %v4426, 2
  %vm4428 = vcmp.eq.s32.totalorder %v4426, 0
  %v4429 = vxor.u32 %v4423, 2147483648
  %v4430 = vsel %vm4428, %v4422, %v4429
  %vm4431 = vcmp.eq.s32.totalorder %v4426, 2
  %v4432 = vxor.u32 %v4422, 2147483648
  %v4433 = vsel %vm4431, %v4432, %v4423
  %v4434 = vsel %vm4427, %v4430, %v4433
  %v4435 = vsel %vm4424, nan, %v4434
  %v4436 = vand.u32 2147483647, %v518
  %vm4437 = vcmp.le.f32.partialorder %v4436, 0.7853982
  %vm4438 = vcmp.lt.s32.totalorder %v518, 0
  %v4439 = vand.u32 %v518, 2139095040
  %v4440 = vshrl.u32 %v4439, 23
  %v4441 = vsub.s32 %v4440, 127
  %v4442 = vand.u32 2147483647, %v518
  %v4443 = vand.u32 %v4442, 8388607
  %v4444 = vor.u32 %v4443, 8388608
  %v4445 = vsub.s32 0, %v4444
  %v4446 = vadd.s32 %v4441, 1
  %vm4447 = vcmp.gt.s32.totalorder %v4446, 0
  %v4448 = vsel %vm4447, %v4446, 0
  %v4449 = vshrl.u32 %v4448, 5
  %v4450 = vand.u32 %v4448, 31
  %v4451 = vsub.s32 32, %v4450
  %v4452 = vshrl.u32 683565275, %v4451
  %v4453 = vshll.u32 683565275, %v4450
  %v4454 = vshrl.u32 2475754826, %v4451
  %v4455 = vor.u32 %v4453, %v4454
  %v4456 = vshll.u32 2475754826, %v4450
  %v4457 = vshrl.u32 2131351028, %v4451
  %v4458 = vor.u32 %v4456, %v4457
  %v4459 = vshll.u32 2131351028, %v4450
  %v4460 = vshrl.u32 2102212464, %v4451
  %v4461 = vor.u32 %v4459, %v4460
  %v4462 = vshll.u32 2102212464, %v4450
  %v4463 = vshrl.u32 920167782, %v4451
  %v4464 = vor.u32 %v4462, %v4463
  %v4465 = vshll.u32 920167782, %v4450
  %v4466 = vshrl.u32 1326507024, %v4451
  %v4467 = vor.u32 %v4465, %v4466
  %vm4468 = vcmp.lt.s32.totalorder %v4449, 1
  %vm4469 = vcmp.lt.s32.totalorder %v4449, 2
  %vm4470 = vcmp.lt.s32.totalorder %v4449, 3
  %vm4471 = vcmp.lt.s32.totalorder %v4449, 4
  %v4472 = vsel %vm4468, %v4452, %v4455
  %v4473 = vsel %vm4471, %v4461, 2102212464
  %v4474 = vsel %vm4470, %v4458, %v4473
  %v4475 = vsel %vm4469, %v4472, %v4474
  %v4476 = vsel %vm4468, %v4455, %v4458
  %v4477 = vsel %vm4471, %v4464, 920167782
  %v4478 = vsel %vm4470, %v4461, %v4477
  %v4479 = vsel %vm4469, %v4476, %v4478
  %v4480 = vsel %vm4468, %v4458, %v4461
  %v4481 = vsel %vm4471, %v4467, 1326507024
  %v4482 = vsel %vm4470, %v4464, %v4481
  %v4483 = vsel %vm4469, %v4480, %v4482
  %v4484 = vshll.u32 %v4444, 8
  %v4485 = vmul.u32.u64.compose %v4484, %v4483
  %v4486 = vextract.low.u32 %v4485
  %v4487 = vextract.high.u32 %v4485
  %v4488 = vmul.u32.u64.compose %v4484, %v4479
  %v4489 = vextract.low.u32 %v4488
  %v4490 = vextract.high.u32 %v4488
  %v4491 = vmul.u32 %v4484, %v4475
  %v4492 = vadd.s32 %v4487, %v4489
  %vm4493 = vc.u32 %v4487, %v4489
  %v4494 = vadd.s32 %v4490, 1
  %v4495 = vsel %vm4493, %v4494, %v4490
  %v4496 = vadd.s32 %v4491, %v4495
  %v4497 = vadd.s32 %v4496, 536870912
  %v4498 = vshrl.u32 %v4497, 30
  %v4499 = vshll.u32 %v4498, 30
  %v4500 = vsub.s32 %v4496, %v4499
  %vm4501 = vcmp.lt.s32.totalorder %v4500, 0
  %v4502 = vsub.s32 0, %v4500
  %v4503 = vsel %vm4501, %v4502, %v4500
  %v4504 = vclz %v4503
  %v4505 = vsub.s32 %v4504, 2
  %vm4506 = vcmp.gt.s32.totalorder 0, %v4505
  %v4507 = vsel %vm4506, 0, %v4505
  %v4508 = vsub.s32 32, %v4507
  %v4509 = vshll.u32 %v4500, %v4507
  %v4510 = vshrl.u32 %v4492, %v4508
  %v4511 = vor.u32 %v4509, %v4510
  %v4512 = vsub.s32 4294967266, %v4507
  %v4513 = vadd.s32 %v4512, 127
  %v4514 = vshll.u32 %v4513, 23
  %v4515 = vor.u32 4788187, %v4514
  %v4516 = vand.u32 2147483647, %v4515
  %v4518 = vcvt.s32.f32 %v4511
  %v4519 = vmul.f32 %v4518, %v4516
  %v4520 = vxor.u32 %v4519, 2147483648
  %v4521 = vsel %vm4438, %v4520, %v4519
  %v4522 = vsub.s32 4, %v4498
  %v4523 = vsel %vm4438, %v4522, %v4498
  %v4524 = vsel %vm4437, %v518, %v4521
  %v4525 = vsel %vm4437, 0, %v4523
  %v4526 = vcosq.f32.pop %v4524
  %v4527 = vsinq.f32.pop %v4524
  %vm4528 = vweird.f32 %v518
  %v4529 = vadd.s32 %v4525, 3
  %v4530 = vand.u32 %v4529, 3
  %vm4531 = vcmp.lt.s32.totalorder %v4530, 2
  %vm4532 = vcmp.eq.s32.totalorder %v4530, 0
  %v4533 = vxor.u32 %v4527, 2147483648
  %v4534 = vsel %vm4532, %v4526, %v4533
  %vm4535 = vcmp.eq.s32.totalorder %v4530, 2
  %v4536 = vxor.u32 %v4526, 2147483648
  %v4537 = vsel %vm4535, %v4536, %v4527
  %v4538 = vsel %vm4531, %v4534, %v4537
  %v4539 = vsel %vm4528, nan, %v4538
  %v4540 = vand.u32 2147483647, %v519
  %vm4541 = vcmp.le.f32.partialorder %v4540, 0.7853982
  %vm4542 = vcmp.lt.s32.totalorder %v519, 0
  %v4543 = vand.u32 %v519, 2139095040
  %v4544 = vshrl.u32 %v4543, 23
  %v4545 = vsub.s32 %v4544, 127
  %v4546 = vand.u32 2147483647, %v519
  %v4547 = vand.u32 %v4546, 8388607
  %v4548 = vor.u32 %v4547, 8388608
  %v4549 = vsub.s32 0, %v4548
  %v4550 = vadd.s32 %v4545, 1
  %vm4551 = vcmp.gt.s32.totalorder %v4550, 0
  %v4552 = vsel %vm4551, %v4550, 0
  %v4553 = vshrl.u32 %v4552, 5
  %v4554 = vand.u32 %v4552, 31
  %v4555 = vsub.s32 32, %v4554
  %v4556 = vshrl.u32 683565275, %v4555
  %v4557 = vshll.u32 683565275, %v4554
  %v4558 = vshrl.u32 2475754826, %v4555
  %v4559 = vor.u32 %v4557, %v4558
  %v4560 = vshll.u32 2475754826, %v4554
  %v4561 = vshrl.u32 2131351028, %v4555
  %v4562 = vor.u32 %v4560, %v4561
  %v4563 = vshll.u32 2131351028, %v4554
  %v4564 = vshrl.u32 2102212464, %v4555
  %v4565 = vor.u32 %v4563, %v4564
  %v4566 = vshll.u32 2102212464, %v4554
  %v4567 = vshrl.u32 920167782, %v4555
  %v4568 = vor.u32 %v4566, %v4567
  %v4569 = vshll.u32 920167782, %v4554
  %v4570 = vshrl.u32 1326507024, %v4555
  %v4571 = vor.u32 %v4569, %v4570
  %vm4572 = vcmp.lt.s32.totalorder %v4553, 1
  %vm4573 = vcmp.lt.s32.totalorder %v4553, 2
  %vm4574 = vcmp.lt.s32.totalorder %v4553, 3
  %vm4575 = vcmp.lt.s32.totalorder %v4553, 4
  %v4576 = vsel %vm4572, %v4556, %v4559
  %v4577 = vsel %vm4575, %v4565, 2102212464
  %v4578 = vsel %vm4574, %v4562, %v4577
  %v4579 = vsel %vm4573, %v4576, %v4578
  %v4580 = vsel %vm4572, %v4559, %v4562
  %v4581 = vsel %vm4575, %v4568, 920167782
  %v4582 = vsel %vm4574, %v4565, %v4581
  %v4583 = vsel %vm4573, %v4580, %v4582
  %v4584 = vsel %vm4572, %v4562, %v4565
  %v4585 = vsel %vm4575, %v4571, 1326507024
  %v4586 = vsel %vm4574, %v4568, %v4585
  %v4587 = vsel %vm4573, %v4584, %v4586
  %v4588 = vshll.u32 %v4548, 8
  %v4589 = vmul.u32.u64.compose %v4588, %v4587
  %v4590 = vextract.low.u32 %v4589
  %v4591 = vextract.high.u32 %v4589
  %v4592 = vmul.u32.u64.compose %v4588, %v4583
  %v4593 = vextract.low.u32 %v4592
  %v4594 = vextract.high.u32 %v4592
  %v4595 = vmul.u32 %v4588, %v4579
  %v4596 = vadd.s32 %v4591, %v4593
  %vm4597 = vc.u32 %v4591, %v4593
  %v4598 = vadd.s32 %v4594, 1
  %v4599 = vsel %vm4597, %v4598, %v4594
  %v4600 = vadd.s32 %v4595, %v4599
  %v4601 = vadd.s32 %v4600, 536870912
  %v4602 = vshrl.u32 %v4601, 30
  %v4603 = vshll.u32 %v4602, 30
  %v4604 = vsub.s32 %v4600, %v4603
  %vm4605 = vcmp.lt.s32.totalorder %v4604, 0
  %v4606 = vsub.s32 0, %v4604
  %v4607 = vsel %vm4605, %v4606, %v4604
  %v4608 = vclz %v4607
  %v4609 = vsub.s32 %v4608, 2
  %vm4610 = vcmp.gt.s32.totalorder 0, %v4609
  %v4611 = vsel %vm4610, 0, %v4609
  %v4612 = vsub.s32 32, %v4611
  %v4613 = vshll.u32 %v4604, %v4611
  %v4614 = vshrl.u32 %v4596, %v4612
  %v4615 = vor.u32 %v4613, %v4614
  %v4616 = vsub.s32 4294967266, %v4611
  %v4617 = vadd.s32 %v4616, 127
  %v4618 = vshll.u32 %v4617, 23
  %v4619 = vor.u32 4788187, %v4618
  %v4620 = vand.u32 2147483647, %v4619
  %v4622 = vcvt.s32.f32 %v4615
  %v4623 = vmul.f32 %v4622, %v4620
  %v4624 = vxor.u32 %v4623, 2147483648
  %v4625 = vsel %vm4542, %v4624, %v4623
  %v4626 = vsub.s32 4, %v4602
  %v4627 = vsel %vm4542, %v4626, %v4602
  %v4628 = vsel %vm4541, %v519, %v4625
  %v4629 = vsel %vm4541, 0, %v4627
  %v4630 = vcosq.f32.pop %v4628
  %v4631 = vsinq.f32.pop %v4628
  %vm4632 = vweird.f32 %v519
  %v4633 = vadd.s32 %v4629, 3
  %v4634 = vand.u32 %v4633, 3
  %vm4635 = vcmp.lt.s32.totalorder %v4634, 2
  %vm4636 = vcmp.eq.s32.totalorder %v4634, 0
  %v4637 = vxor.u32 %v4631, 2147483648
  %v4638 = vsel %vm4636, %v4630, %v4637
  %vm4639 = vcmp.eq.s32.totalorder %v4634, 2
  %v4640 = vxor.u32 %v4630, 2147483648
  %v4641 = vsel %vm4639, %v4640, %v4631
  %v4642 = vsel %vm4635, %v4638, %v4641
  %v4643 = vsel %vm4632, nan, %v4642
  %4663 = vrot.lane.b32.xlu0 %v2771, 64
  %v4664 = vpop.permute.xlu0 %4663
  %4665 = vrot.lane.b32.xlu0 %v2875, 64
  %v4666 = vpop.permute.xlu0 %4665
  %4667 = vrot.lane.b32.xlu0 %v2979, 64
  %v4668 = vpop.permute.xlu0 %4667
  %4669 = vrot.lane.b32.xlu0 %v3083, 64
  %v4670 = vpop.permute.xlu0 %4669
  %4671 = vrot.lane.b32.xlu0 %v3187, 64
  %v4672 = vpop.permute.xlu0 %4671
  %4673 = vrot.lane.b32.xlu0 %v3291, 64
  %v4674 = vpop.permute.xlu0 %4673
  %4675 = vrot.lane.b32.xlu0 %v3395, 64
  %v4676 = vpop.permute.xlu0 %4675
  %4677 = vrot.lane.b32.xlu0 %v3499, 64
  %v4678 = vpop.permute.xlu0 %4677
  %4679 = vrot.lane.b32.xlu0 %v3603, 64
  %v4680 = vpop.permute.xlu0 %4679
  %4681 = vrot.lane.b32.xlu0 %v3707, 64
  %v4682 = vpop.permute.xlu0 %4681
  %4683 = vrot.lane.b32.xlu0 %v3811, 64
  %v4684 = vpop.permute.xlu0 %4683
  %4685 = vrot.lane.b32.xlu0 %v3915, 64
  %v4686 = vpop.permute.xlu0 %4685
  %4687 = vrot.lane.b32.xlu0 %v4019, 64
  %v4688 = vpop.permute.xlu0 %4687
  %4689 = vrot.lane.b32.xlu0 %v4123, 64
  %v4690 = vpop.permute.xlu0 %4689
  %4691 = vrot.lane.b32.xlu0 %v4227, 64
  %v4692 = vpop.permute.xlu0 %4691
  %4693 = vrot.lane.b32.xlu0 %v4331, 64
  %v4694 = vpop.permute.xlu0 %4693
  %4695 = vrot.lane.b32.xlu0 %v4435, 64
  %v4696 = vpop.permute.xlu0 %4695
  %4697 = vrot.lane.b32.xlu0 %v4539, 64
  %v4698 = vpop.permute.xlu0 %4697
  %4699 = vrot.lane.b32.xlu0 %v4643, 64
  %v4700 = vpop.permute.xlu0 %4699
  %v4720 = vmul.f32 %v464, %v4664
  %v4721 = vmul.f32 %v466, %v4666
  %v4722 = vmul.f32 %v468, %v4668
  %v4723 = vmul.f32 %v470, %v4670
  %v4724 = vmul.f32 %v472, %v4672
  %v4725 = vmul.f32 %v474, %v4674
  %v4726 = vmul.f32 %v476, %v4676
  %v4727 = vmul.f32 %v478, %v4678
  %v4728 = vmul.f32 %v480, %v4680
  %v4729 = vmul.f32 %v482, %v4682
  %v4730 = vmul.f32 %v484, %v4684
  %v4731 = vmul.f32 %v486, %v4686
  %v4732 = vmul.f32 %v488, %v4688
  %v4733 = vmul.f32 %v490, %v4690
  %v4734 = vmul.f32 %v492, %v4692
  %v4735 = vmul.f32 %v494, %v4694
  %v4736 = vmul.f32 %v496, %v4696
  %v4737 = vmul.f32 %v498, %v4698
  %v4738 = vmul.f32 %v500, %v4700
  %vm4739 = vcmask 1048064
  %4740 = vst.msk [vmem:[%s3] sm:$0xff] %vm4739, %v4720
  %4741 = vst.msk [vmem:[%s3 + $0x8] sm:$0xff] %vm4739, %v4721
  %4742 = vst.msk [vmem:[%s3 + $0x10] sm:$0xff] %vm4739, %v4722
  %4743 = vst.msk [vmem:[%s3 + $0x18] sm:$0xff] %vm4739, %v4723
  %4744 = vst.msk [vmem:[%s3 + $0x20] sm:$0xff] %vm4739, %v4724
  %4745 = vst.msk [vmem:[%s3 + $0x28] sm:$0xff] %vm4739, %v4725
  %4746 = vst.msk [vmem:[%s3 + $0x30] sm:$0xff] %vm4739, %v4726
  %4747 = vst.msk [vmem:[%s3 + $0x38] sm:$0xff] %vm4739, %v4727
  %4748 = vst.msk [vmem:[%s3 + $0x40] sm:$0xff] %vm4739, %v4728
  %4749 = vst.msk [vmem:[%s3 + $0x48] sm:$0xff] %vm4739, %v4729
  %4750 = vst.msk [vmem:[%s3 + $0x50] sm:$0xff] %vm4739, %v4730
  %4751 = vst.msk [vmem:[%s3 + $0x58] sm:$0xff] %vm4739, %v4731
  %4752 = vst.msk [vmem:[%s3 + $0x60] sm:$0xff] %vm4739, %v4732
  %4753 = vst.msk [vmem:[%s3 + $0x68] sm:$0xff] %vm4739, %v4733
  %4754 = vst.msk [vmem:[%s3 + $0x70] sm:$0xff] %vm4739, %v4734
  %4755 = vst.msk [vmem:[%s3 + $0x78] sm:$0xff] %vm4739, %v4735
  %4756 = vst.msk [vmem:[%s3 + $0x80] sm:$0xff] %vm4739, %v4736
  %4757 = vst.msk [vmem:[%s3 + $0x88] sm:$0xff] %vm4739, %v4737
  %4758 = vst.msk [vmem:[%s3 + $0x90] sm:$0xff] %vm4739, %v4738
  // Predicated region
  $region14: #{complex_gabor_layer.1} parent=0 // pred_check
    _
  $region15: #{complex_gabor_layer.1} parent=0 // pred_check_branch
    %4760 = sbr.rel (0) target = $region17
  $region16: #{complex_gabor_layer.1} parent=0 // pred_region
    _
  $region17: #{complex_gabor_layer.1} parent=0 // pred_fallthru
    _
  // Predicated region
  $region18: #{complex_gabor_layer.1} parent=0 // pred_check
    _
  $region19: #{complex_gabor_layer.1} parent=0 // pred_check_branch
    %4762 = sbr.rel (0) target = $region21
  $region20: #{complex_gabor_layer.1} parent=0 // pred_region
    _
  $region21: #{complex_gabor_layer.1} parent=0 // pred_fallthru
    _

</llo_original>
